<compile_context>
chip_gen: v7x
topology: tpu7x:2x2x1
jax: 0.10.0
libtpu: 0.0.40
codegen_flags: <defaults>
</compile_context>

<pallas_src>
import jax
import jax.numpy as jnp
from jax import lax
from jax.experimental import pallas as pl
from jax.experimental.pallas import tpu as pltpu

# ----------------------------- model constants ------------------------------
DIM = 32                      # channels per direction (DirectionalConvResBlock dim)
NDIR = 4                      # number of directions
C4 = NDIR * DIM               # 128: dir-stacked channel width (lane-dense)
B, H, W = 2, 16, 16           # batch / board size
assert W & (W - 1) == 0, "W must be a power of two (cheap column index)"

# offsets per direction: out[i,j] = sum_k W_k @ x[i+dh_k, j+dw_k]  (zero padded)
DIR_OFFSETS = (
    ((0, -1), (0, 0), (0, 1)),      # dir 0: horizontal
    ((-1, 0), (0, 0), (1, 0)),      # dir 1: vertical
    ((-1, -1), (0, 0), (1, 1)),     # dir 2: main diagonal
    ((1, -1), (0, 0), (-1, 1)),     # dir 3: anti diagonal
)
# 9 distinct offsets feeding the fused dconv matmul: center first, then the
# two non-center taps of each direction (this order matches the weight slab).
ALL_OFFSETS = ((0, 0),) + tuple(DIR_OFFSETS[d][k] for d in range(NDIR) for k in (0, 2))

# packed parameter slab layout (rows of a [N_WROWS, C4] f32 buffer)
K_DCONV = len(ALL_OFFSETS) * C4   # 1152: fused directional-conv weight rows
ROW_W1 = K_DCONV                  # 1152..1279: block-diagonal 1x1 conv weight
ROW_BD = ROW_W1 + C4              # 1280: dconv bias (tiled over 4 dirs)
ROW_B1 = ROW_BD + 8               # 1288: 1x1 bias (8-row aligned slot)
N_WROWS = ROW_B1 + 8              # 1296 rows total (multiple of 8)


def _silu(t):
    return t * jax.nn.sigmoid(t)


# --------------------------------- kernel -----------------------------------
def _dirconv_resblock_kernel(x_ref, w_ref, o_ref):
    # x_ref: [1, H, W, C4] (one batch element), w_ref: [N_WROWS, C4] packed params
    x = x_ref[...].reshape(H * W, C4)                 # lane-dense [256, 128]

    # hoisted edge-validity indices (flattened spatial position / board column)
    pos = lax.broadcasted_iota(jnp.int32, (H * W, 1), 0)
    col = jnp.bitwise_and(pos, W - 1)

    def shifted(dh, dw):
        """y[i*W+j, :] = x[(i+dh)*W + (j+dw), :], zero outside the board."""
        y = pltpu.roll(x, (-(dh * W + dw)) % (H * W), axis=0)   # XLU rotate
        valid = None

        def _and(a, b):
            return b if a is None else jnp.logical_and(a, b)

        if dh > 0:
            valid = _and(valid, pos < (H - dh) * W)
        elif dh < 0:
            valid = _and(valid, pos >= (-dh) * W)
        if dw > 0:
            valid = _and(valid, col < (W - dw))
        elif dw < 0:
            valid = _and(valid, col >= (-dw))
        return jnp.where(valid, y, 0.0)               # single edge mask

    # fused directional conv: one [256, 1152] x [1152, 128] MXU matmul
    z = jnp.concatenate([x] + [shifted(dh, dw) for dh, dw in ALL_OFFSETS[1:]],
                        axis=-1)

    w_dc = w_ref[0:K_DCONV, :]
    w_11 = w_ref[ROW_W1:ROW_W1 + C4, :]
    b_dc = w_ref[ROW_BD:ROW_BD + 1, :]
    b_11 = w_ref[ROW_B1:ROW_B1 + 1, :]

    t = jnp.dot(z, w_dc, preferred_element_type=jnp.float32) + b_dc
    t = _silu(t)
    # shared 1x1 conv as a block-diagonal, lane-dense [128, 128] matmul
    t = jnp.dot(t, w_11, preferred_element_type=jnp.float32) + b_11
    t = _silu(t)
    o_ref[...] = (t + x).reshape(1, H, W, C4)         # residual add, dense store


# ----------------------------- host-side packing ----------------------------
def _pack_params(dconv_w, dconv_b, conv1x1_w, conv1x1_b):
    """Fold the 3 taps x 4 directions into one block-sparse [N_WROWS, C4] slab."""
    a = jnp.transpose(dconv_w, (0, 2, 1)).astype(jnp.float32)   # (3, in, out)
    eye = jnp.eye(NDIR, dtype=jnp.float32)
    blocks = [jnp.kron(eye, a[1])]                              # center tap, all dirs
    for d in range(NDIR):                                       # order == ALL_OFFSETS[1:]
        sel = jnp.zeros((NDIR, NDIR), jnp.float32).at[d, d].set(1.0)
        for k in (0, 2):
            blocks.append(jnp.kron(sel, a[k]))
    w_dconv = jnp.concatenate(blocks, axis=0)                   # (9*C4, C4)
    w_11 = jnp.kron(eye, conv1x1_w.T.astype(jnp.float32))       # (C4, C4) block-diag
    pad = jnp.zeros((7, C4), jnp.float32)
    b_dc = jnp.tile(dconv_b.astype(jnp.float32), NDIR)[None, :]
    b_11 = jnp.tile(conv1x1_b.astype(jnp.float32), NDIR)[None, :]
    return jnp.concatenate([w_dconv, w_11, b_dc, pad, b_11, pad], axis=0)


# --------------------------------- wrapper ----------------------------------
@jax.jit
def directional_conv_res_block(x_dirs, dconv_w, dconv_b, conv1x1_w, conv1x1_b):
    """x_dirs: [4, B, DIM, H, W] -- the PyTorch tuple of 4 NCHW direction features."""
    nd, bsz, c, h, w = x_dirs.shape
    # dir-stacked channels-last activation: [B, H, W, 4*DIM] (128 lanes)
    x = jnp.transpose(x_dirs, (1, 3, 4, 0, 2)).reshape(bsz, h, w, nd * c)
    w_all = _pack_params(dconv_w, dconv_b, conv1x1_w, conv1x1_b)

    out = pl.pallas_call(
        _dirconv_resblock_kernel,
        out_shape=jax.ShapeDtypeStruct((bsz, h, w, nd * c), jnp.float32),
        grid=(bsz,),
        in_specs=[
            pl.BlockSpec((1, h, w, nd * c), lambda i: (i, 0, 0, 0)),
            pl.BlockSpec((N_WROWS, nd * c), lambda i: (0, 0)),   # weights resident
        ],
        out_specs=pl.BlockSpec((1, h, w, nd * c), lambda i: (i, 0, 0, 0)),
        compiler_params=pltpu.CompilerParams(
            dimension_semantics=("parallel",)),   # one batch element per TC on v7x
    )(x.astype(jnp.float32), w_all)

    # back to the PyTorch convention: tuple of 4 NCHW tensors
    out = jnp.transpose(out.reshape(bsz, h, w, nd, c), (3, 0, 4, 1, 2))
    return tuple(out[d] for d in range(nd))


# --------------------------- pure-JAX reference -----------------------------
def reference_forward(x_dirs, dconv_w, dconv_b, conv1x1_w, conv1x1_b):
    """Mirror of the PyTorch DirectionalConvResBlock (f32, HIGHEST precision)."""
    hi = jax.lax.Precision.HIGHEST
    nd, _, c, _, _ = x_dirs.shape
    zero = jnp.zeros((c, c), dconv_w.dtype)
    wmap = [
        lambda w: (zero, zero, zero, w[0], w[1], w[2], zero, zero, zero),
        lambda w: (zero, w[0], zero, zero, w[1], zero, zero, w[2], zero),
        lambda w: (w[0], zero, zero, zero, w[1], zero, zero, zero, w[2]),
        lambda w: (zero, zero, w[2], zero, w[1], zero, w[0], zero, zero),
    ]
    outs = []
    for d in range(nd):
        xd = x_dirs[d]
        wk = jnp.stack(wmap[d](dconv_w), axis=2).reshape(c, c, 3, 3)
        t = lax.conv_general_dilated(
            xd, wk, window_strides=(1, 1), padding="SAME",
            dimension_numbers=("NCHW", "OIHW", "NCHW"), precision=hi)
        t = _silu(t + dconv_b.reshape(1, c, 1, 1))
        t = jnp.einsum("oi,bihw->bohw", conv1x1_w, t, precision=hi)
        t = _silu(t + conv1x1_b.reshape(1, c, 1, 1))
        outs.append(t + xd)
    return tuple(outs)


if __name__ == "__main__":
    key = jax.random.PRNGKey(0)
    kx, kw, kb, k1, k2 = jax.random.split(key, 5)
    x_dirs = jax.random.normal(kx, (NDIR, B, DIM, H, W), jnp.float32)
    dconv_w = jax.random.normal(kw, (3, DIM, DIM), jnp.float32) * (2.0 / (3 * DIM)) ** 0.5
    dconv_b = 0.1 * jax.random.normal(kb, (DIM,), jnp.float32)
    conv1x1_w = jax.random.normal(k1, (DIM, DIM), jnp.float32) * (1.0 / DIM) ** 0.5
    conv1x1_b = 0.1 * jax.random.normal(k2, (DIM,), jnp.float32)

    outs = directional_conv_res_block(x_dirs, dconv_w, dconv_b, conv1x1_w, conv1x1_b)
    outs = jax.block_until_ready(outs)

    refs = reference_forward(x_dirs, dconv_w, dconv_b, conv1x1_w, conv1x1_b)
    for o, r in zip(outs, refs):
        assert o.shape == (B, DIM, H, W), o.shape
        assert bool(jnp.all(jnp.isfinite(o)))
        assert bool(jnp.allclose(o, r, rtol=5e-2, atol=5e-2)), \
            float(jnp.max(jnp.abs(o - r)))
    print("KERNEL_OK")
</pallas_src>

<mosaic_0001>
module attributes {stable_mosaic.version = 11 : i64} {
  func.func @_dirconv_resblock_kernel(%arg0: i32, %arg1: memref<1x16x16x128xf32, #tpu.memory_space<vmem>>, %arg2: memref<1296x128xf32, #tpu.memory_space<vmem>>, %arg3: memref<1x16x16x128xf32, #tpu.memory_space<vmem>>) attributes {dimension_semantics = [#tpu.dimension_semantics<parallel>], iteration_bounds = array<i64: 2>, scalar_prefetch = 0 : i64, scratch_operands = 0 : i64, tpu.core_type = #tpu.core_type<tc>, window_params = [{transform_indices = @transform_0, window_bounds = array<i64: 1, 16, 16, 128>}, {pipeline_mode = #tpu.pipeline_mode<synchronous>, transform_indices = @transform_1, window_bounds = array<i64: 1296, 128>}, {transform_indices = @transform_2, window_bounds = array<i64: 1, 16, 16, 128>}]} {
    %c0 = arith.constant 0 : index
    %c0_0 = arith.constant 0 : index
    %c0_1 = arith.constant 0 : index
    %c0_2 = arith.constant 0 : index
    %0 = vector.load %arg1[%c0, %c0_0, %c0_1, %c0_2] : memref<1x16x16x128xf32, #tpu.memory_space<vmem>>, vector<1x16x16x128xf32>
    %1 = vector.shape_cast %0 : vector<1x16x16x128xf32> to vector<256x128xf32>
    %2 = tpu.iota {dimensions = array<i32: 0>} : vector<256x1xi32>
    %c15_i32 = arith.constant 15 : i32
    %3 = vector.broadcast %c15_i32 : i32 to vector<256x1xi32>
    %4 = arith.andi %2, %3 : vector<256x1xi32>
    %c1_i32 = arith.constant 1 : i32
    %5 = tpu.dynamic_rotate %1 by %c1_i32 dim 0 : vector<256x128xf32>, i32 -> vector<256x128xf32>
    %c1_i32_3 = arith.constant 1 : i32
    %6 = vector.broadcast %c1_i32_3 : i32 to vector<256x1xi32>
    %7 = arith.cmpi sge, %4, %6 : vector<256x1xi32>
    %cst = arith.constant 0.000000e+00 : f32
    %8 = vector.shape_cast %7 : vector<256x1xi1> to vector<256x1xi1>
    %9 = vector.broadcast %8 : vector<256x1xi1> to vector<256x128xi1>
    %10 = vector.broadcast %cst : f32 to vector<256x128xf32>
    %11 = arith.select %9, %5, %10 : vector<256x128xi1>, vector<256x128xf32>
    %c255_i32 = arith.constant 255 : i32
    %12 = tpu.dynamic_rotate %1 by %c255_i32 dim 0 : vector<256x128xf32>, i32 -> vector<256x128xf32>
    %c15_i32_4 = arith.constant 15 : i32
    %13 = vector.broadcast %c15_i32_4 : i32 to vector<256x1xi32>
    %14 = arith.cmpi slt, %4, %13 : vector<256x1xi32>
    %cst_5 = arith.constant 0.000000e+00 : f32
    %15 = vector.shape_cast %14 : vector<256x1xi1> to vector<256x1xi1>
    %16 = vector.broadcast %15 : vector<256x1xi1> to vector<256x128xi1>
    %17 = vector.broadcast %cst_5 : f32 to vector<256x128xf32>
    %18 = arith.select %16, %12, %17 : vector<256x128xi1>, vector<256x128xf32>
    %c16_i32 = arith.constant 16 : i32
    %19 = tpu.dynamic_rotate %1 by %c16_i32 dim 0 : vector<256x128xf32>, i32 -> vector<256x128xf32>
    %c16_i32_6 = arith.constant 16 : i32
    %20 = vector.broadcast %c16_i32_6 : i32 to vector<256x1xi32>
    %21 = arith.cmpi sge, %2, %20 : vector<256x1xi32>
    %cst_7 = arith.constant 0.000000e+00 : f32
    %22 = vector.shape_cast %21 : vector<256x1xi1> to vector<256x1xi1>
    %23 = vector.broadcast %22 : vector<256x1xi1> to vector<256x128xi1>
    %24 = vector.broadcast %cst_7 : f32 to vector<256x128xf32>
    %25 = arith.select %23, %19, %24 : vector<256x128xi1>, vector<256x128xf32>
    %c240_i32 = arith.constant 240 : i32
    %26 = tpu.dynamic_rotate %1 by %c240_i32 dim 0 : vector<256x128xf32>, i32 -> vector<256x128xf32>
    %c240_i32_8 = arith.constant 240 : i32
    %27 = vector.broadcast %c240_i32_8 : i32 to vector<256x1xi32>
    %28 = arith.cmpi slt, %2, %27 : vector<256x1xi32>
    %cst_9 = arith.constant 0.000000e+00 : f32
    %29 = vector.shape_cast %28 : vector<256x1xi1> to vector<256x1xi1>
    %30 = vector.broadcast %29 : vector<256x1xi1> to vector<256x128xi1>
    %31 = vector.broadcast %cst_9 : f32 to vector<256x128xf32>
    %32 = arith.select %30, %26, %31 : vector<256x128xi1>, vector<256x128xf32>
    %c17_i32 = arith.constant 17 : i32
    %33 = tpu.dynamic_rotate %1 by %c17_i32 dim 0 : vector<256x128xf32>, i32 -> vector<256x128xf32>
    %c16_i32_10 = arith.constant 16 : i32
    %34 = vector.broadcast %c16_i32_10 : i32 to vector<256x1xi32>
    %35 = arith.cmpi sge, %2, %34 : vector<256x1xi32>
    %c1_i32_11 = arith.constant 1 : i32
    %36 = vector.broadcast %c1_i32_11 : i32 to vector<256x1xi32>
    %37 = arith.cmpi sge, %4, %36 : vector<256x1xi32>
    %38 = arith.andi %35, %37 : vector<256x1xi1>
    %cst_12 = arith.constant 0.000000e+00 : f32
    %39 = vector.shape_cast %38 : vector<256x1xi1> to vector<256x1xi1>
    %40 = vector.broadcast %39 : vector<256x1xi1> to vector<256x128xi1>
    %41 = vector.broadcast %cst_12 : f32 to vector<256x128xf32>
    %42 = arith.select %40, %33, %41 : vector<256x128xi1>, vector<256x128xf32>
    %c239_i32 = arith.constant 239 : i32
    %43 = tpu.dynamic_rotate %1 by %c239_i32 dim 0 : vector<256x128xf32>, i32 -> vector<256x128xf32>
    %c240_i32_13 = arith.constant 240 : i32
    %44 = vector.broadcast %c240_i32_13 : i32 to vector<256x1xi32>
    %45 = arith.cmpi slt, %2, %44 : vector<256x1xi32>
    %c15_i32_14 = arith.constant 15 : i32
    %46 = vector.broadcast %c15_i32_14 : i32 to vector<256x1xi32>
    %47 = arith.cmpi slt, %4, %46 : vector<256x1xi32>
    %48 = arith.andi %45, %47 : vector<256x1xi1>
    %cst_15 = arith.constant 0.000000e+00 : f32
    %49 = vector.shape_cast %48 : vector<256x1xi1> to vector<256x1xi1>
    %50 = vector.broadcast %49 : vector<256x1xi1> to vector<256x128xi1>
    %51 = vector.broadcast %cst_15 : f32 to vector<256x128xf32>
    %52 = arith.select %50, %43, %51 : vector<256x128xi1>, vector<256x128xf32>
    %c241_i32 = arith.constant 241 : i32
    %53 = tpu.dynamic_rotate %1 by %c241_i32 dim 0 : vector<256x128xf32>, i32 -> vector<256x128xf32>
    %c240_i32_16 = arith.constant 240 : i32
    %54 = vector.broadcast %c240_i32_16 : i32 to vector<256x1xi32>
    %55 = arith.cmpi slt, %2, %54 : vector<256x1xi32>
    %c1_i32_17 = arith.constant 1 : i32
    %56 = vector.broadcast %c1_i32_17 : i32 to vector<256x1xi32>
    %57 = arith.cmpi sge, %4, %56 : vector<256x1xi32>
    %58 = arith.andi %55, %57 : vector<256x1xi1>
    %cst_18 = arith.constant 0.000000e+00 : f32
    %59 = vector.shape_cast %58 : vector<256x1xi1> to vector<256x1xi1>
    %60 = vector.broadcast %59 : vector<256x1xi1> to vector<256x128xi1>
    %61 = vector.broadcast %cst_18 : f32 to vector<256x128xf32>
    %62 = arith.select %60, %53, %61 : vector<256x128xi1>, vector<256x128xf32>
    %c15_i32_19 = arith.constant 15 : i32
    %63 = tpu.dynamic_rotate %1 by %c15_i32_19 dim 0 : vector<256x128xf32>, i32 -> vector<256x128xf32>
    %c16_i32_20 = arith.constant 16 : i32
    %64 = vector.broadcast %c16_i32_20 : i32 to vector<256x1xi32>
    %65 = arith.cmpi sge, %2, %64 : vector<256x1xi32>
    %c15_i32_21 = arith.constant 15 : i32
    %66 = vector.broadcast %c15_i32_21 : i32 to vector<256x1xi32>
    %67 = arith.cmpi slt, %4, %66 : vector<256x1xi32>
    %68 = arith.andi %65, %67 : vector<256x1xi1>
    %cst_22 = arith.constant 0.000000e+00 : f32
    %69 = vector.shape_cast %68 : vector<256x1xi1> to vector<256x1xi1>
    %70 = vector.broadcast %69 : vector<256x1xi1> to vector<256x128xi1>
    %71 = vector.broadcast %cst_22 : f32 to vector<256x128xf32>
    %72 = arith.select %70, %63, %71 : vector<256x128xi1>, vector<256x128xf32>
    %73 = tpu.concatenate %1, %11, %18, %25, %32, %42, %52, %62, %72 in 1 : vector<256x128xf32>, vector<256x128xf32>, vector<256x128xf32>, vector<256x128xf32>, vector<256x128xf32>, vector<256x128xf32>, vector<256x128xf32>, vector<256x128xf32>, vector<256x128xf32> -> vector<256x1152xf32>
    %c0_23 = arith.constant 0 : index
    %c0_24 = arith.constant 0 : index
    %74 = vector.load %arg2[%c0_23, %c0_24] : memref<1296x128xf32, #tpu.memory_space<vmem>>, vector<1152x128xf32>
    %c1152 = arith.constant 1152 : index
    %c0_25 = arith.constant 0 : index
    %75 = vector.load %arg2[%c1152, %c0_25] : memref<1296x128xf32, #tpu.memory_space<vmem>>, vector<128x128xf32>
    %c1280 = arith.constant 1280 : index
    %c0_26 = arith.constant 0 : index
    %76 = vector.load %arg2[%c1280, %c0_26] : memref<1296x128xf32, #tpu.memory_space<vmem>>, vector<1x128xf32>
    %c1288 = arith.constant 1288 : index
    %c0_27 = arith.constant 0 : index
    %77 = vector.load %arg2[%c1288, %c0_27] : memref<1296x128xf32, #tpu.memory_space<vmem>>, vector<1x128xf32>
    %cst_28 = arith.constant dense<0.000000e+00> : vector<256x128xf32>
    %78 = tpu.matmul %73, %74, %cst_28 {dimension_numbers = #tpu.dot_dimension_numbers<[1], [0], [0], [1], [0, 0, 1, 1], [], []>} : vector<256x1152xf32>, vector<1152x128xf32>, vector<256x128xf32> -> vector<256x128xf32>
    %79 = vector.broadcast %76 : vector<1x128xf32> to vector<256x128xf32>
    %80 = arith.addf %78, %79 : vector<256x128xf32>
    %81 = arith.negf %80 : vector<256x128xf32>
    %82 = math.exp %81 : vector<256x128xf32>
    %cst_29 = arith.constant 1.000000e+00 : f32
    %83 = vector.broadcast %cst_29 : f32 to vector<256x128xf32>
    %84 = arith.addf %83, %82 : vector<256x128xf32>
    %85 = arith.divf %83, %84 : vector<256x128xf32>
    %86 = arith.mulf %80, %85 : vector<256x128xf32>
    %cst_30 = arith.constant dense<0.000000e+00> : vector<256x128xf32>
    %87 = tpu.matmul %86, %75, %cst_30 {dimension_numbers = #tpu.dot_dimension_numbers<[1], [0], [0], [1], [0, 0, 1, 1], [], []>} : vector<256x128xf32>, vector<128x128xf32>, vector<256x128xf32> -> vector<256x128xf32>
    %88 = vector.broadcast %77 : vector<1x128xf32> to vector<256x128xf32>
    %89 = arith.addf %87, %88 : vector<256x128xf32>
    %90 = arith.negf %89 : vector<256x128xf32>
    %91 = math.exp %90 : vector<256x128xf32>
    %cst_31 = arith.constant 1.000000e+00 : f32
    %92 = vector.broadcast %cst_31 : f32 to vector<256x128xf32>
    %93 = arith.addf %92, %91 : vector<256x128xf32>
    %94 = arith.divf %92, %93 : vector<256x128xf32>
    %95 = arith.mulf %89, %94 : vector<256x128xf32>
    %96 = arith.addf %95, %1 : vector<256x128xf32>
    %97 = vector.shape_cast %96 : vector<256x128xf32> to vector<1x16x16x128xf32>
    %c0_32 = arith.constant 0 : index
    %c0_33 = arith.constant 0 : index
    %c0_34 = arith.constant 0 : index
    %c0_35 = arith.constant 0 : index
    %98 = vector.load %arg3[%c0_32, %c0_33, %c0_34, %c0_35] : memref<1x16x16x128xf32, #tpu.memory_space<vmem>>, vector<1x16x16x128xf32>
    tpu.vector_store %arg3[%c0_32, %c0_33, %c0_34, %c0_35], %97 {strides = array<i32>} : memref<1x16x16x128xf32, #tpu.memory_space<vmem>>, vector<1x16x16x128xf32>,
    return
  }
  func.func @transform_0(%arg0: i32) -> (i32, i32, i32, i32) {
    %c0_i32 = arith.constant 0 : i32
    %c0_i32_0 = arith.constant 0 : i32
    %c0_i32_1 = arith.constant 0 : i32
    %c0_i32_2 = arith.constant 0 : i32
    return %arg0, %c0_i32, %c0_i32_0, %c0_i32_1 : i32, i32, i32, i32
  }
  func.func @transform_1(%arg0: i32) -> (i32, i32) {
    %c0_i32 = arith.constant 0 : i32
    %c0_i32_0 = arith.constant 0 : i32
    %c0_i32_1 = arith.constant 0 : i32
    return %c0_i32, %c0_i32_0 : i32, i32
  }
  func.func @transform_2(%arg0: i32) -> (i32, i32, i32, i32) {
    %c0_i32 = arith.constant 0 : i32
    %c0_i32_0 = arith.constant 0 : i32
    %c0_i32_1 = arith.constant 0 : i32
    %c0_i32_2 = arith.constant 0 : i32
    return %arg0, %c0_i32, %c0_i32_0, %c0_i32_1 : i32, i32, i32, i32
  }
}

</mosaic_0001>

<llo_original>
// kernel: tile.13
$region0: #{tile.13}
  #allocation0 [shape = 's32[1]{0}', space=sflag, size = 0x4, scoped, tag = 'scoped memory for tile.13']
  %s0 = inlined_call_operand.vmem [shape: f32[32], index: 0, kind: input, shape index: {}]
  %s1 = inlined_call_operand.vmem [shape: f32[4,32], index: 1, kind: output, shape index: {}]
  // Predicated region
  $region2: #{tile.13} parent=0 // pred_check
    _
  $region3: #{tile.13} parent=0 // pred_check_branch
    %3 = sbr.rel (0) target = $region5
  $region4: #{tile.13} parent=0 // pred_region
    _
  $region5: #{tile.13} parent=0 // pred_fallthru
    _
  %v4 = vld [vmem:[%s0] ss:$0 sm:$0xff]
  %5 = vst [vmem:[%s1] sm:$0xf] %v4

// kernel: tile.14
$region0: #{tile.14}
  %s0 = inlined_call_operand.vmem [shape: f32[4,32], index: 0, kind: input, shape index: {}]
  %s1 = inlined_call_operand.vmem [shape: f32[1,128], index: 1, kind: output, shape index: {}]
  $region1: #{tile.14} parent=0
    #allocation0 [shape = 'u8[4096]{0}', space=vmem, size = 0x1000, scoped, tag = 'scoped mem for output reshape']
    #allocation1 [shape = 'u8[4096]{0}', space=vmem, size = 0x1000, scoped, tag = 'scoped mem for input reshape']
    %s3 = sshllo.u32 0, 4
    %v4 = vld [vmem:[%s0] sm:%s3]
    %5 = vst [vmem:[#allocation1] sm:%s3] %v4
    %v6 = vld [vmem:[#allocation1] sm:$0x1]
    %vm7 = vcmask 261120
    %8 = vst.msk [vmem:[#allocation0] sm:$0x1] %vm7, %v6
    %s9 = scalar_lea.vmem [#allocation1], 3
    %v10 = vld [vmem:[%s9] sm:$0x1]
    %11 = vrot.lane.b32.xlu0 %v10, 96
    %v12 = vpop.permute.xlu0 %11
    %vm13 = vcmask 1048320
    %14 = vst.msk [vmem:[#allocation0] sm:$0x1] %vm13, %v12
    %s15 = scalar_lea.vmem [#allocation1], 2
    %v16 = vld [vmem:[%s15] sm:$0x1]
    %17 = vrot.lane.b32.xlu0 %v16, 64
    %v18 = vpop.permute.xlu0 %17
    %vm19 = vcmask 785920
    %20 = vst.msk [vmem:[#allocation0] sm:$0x1] %vm19, %v18
    %s21 = scalar_lea.vmem [#allocation1], 1
    %v22 = vld [vmem:[%s21] sm:$0x1]
    %23 = vrot.lane.b32.xlu0 %v22, 32
    %v24 = vpop.permute.xlu0 %23
    %vm25 = vcmask 523520
    %26 = vst.msk [vmem:[#allocation0] sm:$0x1] %vm25, %v24
    %s28 = sshllo.u32 0, 1
    %v30 = vld [vmem:[#allocation0] sm:%s28]
    %s31 = sshllo.u32 0, 1
    %32 = vst [vmem:[%s1] sm:%s31] %v30

// kernel: directional_conv_res_block.1
$region0: #{directional_conv_res_block.1}
  #allocation0 [shape = 'u32[]', space=smem, size = 0x4, offset = 0x4, fixed_abs, tag = 'smem constant byte address 0x4 - core index']
  #allocation1 [shape = 'u32[144,128]{1,0:T(1,128)}', space=vmem, size = 0x12000, scoped, tag = 'internal scratch']
  %s0 = inlined_call_operand.vmem [shape: f32[2,16,16,128], index: 0, kind: input, shape index: {}]
  %s1 = inlined_call_operand.vmem [shape: f32[1296,128], index: 1, kind: input, shape index: {}]
  %s2 = inlined_call_operand.vmem [shape: f32[2,16,16,128], index: 2, kind: output, shape index: {}]
  %s3 = sld [smem:[#allocation0]]
  $region41: #{directional_conv_res_block.1} parent=0
    _
  %s5 = ssub.s32 1, %s3
  %s6 = scalar_select 0, %s5, %s3
  loop: start=0, step=1, limit=4
  $region2: #{directional_conv_res_block.1} parent=0 // loop_pre_header
    _
  $region3: #{directional_conv_res_block.1} parent=0 // loop_header
    %s8 = sphi 0, %s12
    %p9 = scmp.ge.s32.totalorder %s8, 4
    %s18 = sphi 0, %s20
    %s21 = sphi 0, %s18
    %s22 = sphi 0, %s21
    %s38 = sphi 0, %s22
    %s42 = sphi 0, %s42
    %s44 = sphi 0, %s42
    %s45 = sphi 0, %s44
    %s59 = sphi 0, %s45
    %s65 = sphi 0, %s67
    %s68 = sphi 0, %s65
    %s69 = sphi 0, %s68
    %s85 = sphi 0, %s69
  $region4: #{directional_conv_res_block.1} parent=0 // loop_header_branch
    %11 = sbr.rel (%p9) target = $region8
  $region5: #{directional_conv_res_block.1} parent=0 // loop_body
    %s13 = ssub.s32 %s8, 1
    %s14 = ssub.s32 %s8, 2
    %s15 = sadd.s32 %s8, 1
    %s16 = ssub.s32 %s8, %s15
    %p17 = scmp.eq.s32.totalorder %s16, 0
    %s19 = sadd.s32 %s18, 1
    %s20 = scalar_select %p17, %s18, %s19
    %p23 = pneg %p17
    %p24 = scmp.eq.s32.totalorder %s8, 1
    %p25 = por %p23, %p24
    %p26 = scmp.ne.s32.totalorder %s18, %s21
    %p27 = scmp.eq.s32.totalorder %s8, 0
    %p28 = por %p26, %p27
    %p29 = scmp.ne.s32.totalorder %s18, %s21
    %p30 = scmp.eq.s32.totalorder %s13, 1
    %p31 = por %p29, %p30
    %p32 = scmp.ne.s32.totalorder %s21, %s22
    %p33 = scmp.eq.s32.totalorder %s13, 0
    %p34 = por %p32, %p33
    %p35 = scmp.ne.s32.totalorder %s21, %s22
    %p36 = scmp.eq.s32.totalorder %s14, 1
    %p37 = por %p35, %p36
    %p39 = scmp.ne.s32.totalorder %s22, %s38
    %p40 = scmp.eq.s32.totalorder %s14, 0
    %p41 = por %p39, %p40
    %s43 = sadd.s32 %s42, 1
    %p46 = scmp.eq.s32.totalorder %s8, 1
    %p47 = scmp.ne.s32.totalorder %s42, %s44
    %p48 = scmp.eq.s32.totalorder %s8, 0
    %p49 = por %p47, %p48
    %p50 = scmp.ne.s32.totalorder %s42, %s44
    %p51 = scmp.eq.s32.totalorder %s13, 1
    %p52 = por %p50, %p51
    %p53 = scmp.ne.s32.totalorder %s44, %s45
    %p54 = scmp.eq.s32.totalorder %s13, 0
    %p55 = por %p53, %p54
    %p56 = scmp.ne.s32.totalorder %s44, %s45
    %p57 = scmp.eq.s32.totalorder %s14, 1
    %p58 = por %p56, %p57
    %p60 = scmp.ne.s32.totalorder %s45, %s59
    %p61 = scmp.eq.s32.totalorder %s14, 0
    %p62 = por %p60, %p61
    %s63 = ssub.s32 %s8, %s15
    %p64 = scmp.eq.s32.totalorder %s63, 0
    %s66 = sadd.s32 %s65, 1
    %s67 = scalar_select %p64, %s65, %s66
    %p70 = pneg %p64
    %p71 = scmp.eq.s32.totalorder %s8, 1
    %p72 = por %p70, %p71
    %p73 = scmp.ne.s32.totalorder %s65, %s68
    %p74 = scmp.eq.s32.totalorder %s8, 0
    %p75 = por %p73, %p74
    %p76 = scmp.ne.s32.totalorder %s65, %s68
    %p77 = scmp.eq.s32.totalorder %s13, 1
    %p78 = por %p76, %p77
    %p79 = scmp.ne.s32.totalorder %s68, %s69
    %p80 = scmp.eq.s32.totalorder %s13, 0
    %p81 = por %p79, %p80
    %p82 = scmp.ne.s32.totalorder %s68, %s69
    %p83 = scmp.eq.s32.totalorder %s14, 1
    %p84 = por %p82, %p83
    %p86 = scmp.ne.s32.totalorder %s69, %s85
    %p87 = scmp.eq.s32.totalorder %s14, 0
    %p88 = por %p86, %p87
    %p89 = scmp.le.s32.totalorder 1, %s8
    %p90 = scmp.lt.s32.totalorder %s8, 3
    %p91 = pnand %p89, %p90
    %p92 = pneg %p91
    // Predicated region
    $region9: #{directional_conv_res_block.1} parent=5 // pred_check
      _
    $region10: #{directional_conv_res_block.1} parent=5 // pred_check_branch
      %94 = sbr.rel (%p91) target = $region12
    $region11: #{directional_conv_res_block.1} parent=5 // pred_region
      %s95 = ssub.s32 %s8, 1
      // Predicated region
      $region13: #{directional_conv_res_block.1} parent=11 // pred_check
        %p96 = pneg %p55
      $region14: #{directional_conv_res_block.1} parent=11 // pred_check_branch
        %98 = sbr.rel (%p96) target = $region16
      $region15: #{directional_conv_res_block.1} parent=11 // pred_region
        _
      $region16: #{directional_conv_res_block.1} parent=11 // pred_fallthru
        _
    $region12: #{directional_conv_res_block.1} parent=5 // pred_fallthru
      _
    %p99 = scmp.lt.s32.totalorder %s8, 2
    // Predicated region
    $region17: #{directional_conv_res_block.1} parent=5 // pred_check
      %p100 = pneg %p99
    $region18: #{directional_conv_res_block.1} parent=5 // pred_check_branch
      %102 = sbr.rel (%p100) target = $region20
    $region19: #{directional_conv_res_block.1} parent=5 // pred_region
      // Predicated region
      $region21: #{directional_conv_res_block.1} parent=19 // pred_check
        %p103 = pneg %p28
      $region22: #{directional_conv_res_block.1} parent=19 // pred_check_branch
        %105 = sbr.rel (%p103) target = $region24
      $region23: #{directional_conv_res_block.1} parent=19 // pred_region
        %p106 = scmp.lt.s32.totalorder %s8, 1
        %s107 = scalar_select %p106, %s8, 1
        %s108 = smul.addr %s107, 32
        %s109 = smul.addr %s108, 8
        %s110 = scalar_lea.vmem %s0, %s109
      $region24: #{directional_conv_res_block.1} parent=19 // pred_fallthru
        _
    $region20: #{directional_conv_res_block.1} parent=5 // pred_fallthru
      _
    %p111 = scmp.le.s32.totalorder 1, %s8
    %p112 = scmp.lt.s32.totalorder %s8, 3
    %p113 = pnand %p111, %p112
    %p114 = pneg %p113
    // Predicated region
    $region25: #{directional_conv_res_block.1} parent=5 // pred_check
      _
    $region26: #{directional_conv_res_block.1} parent=5 // pred_check_branch
      %116 = sbr.rel (%p113) target = $region28
    $region27: #{directional_conv_res_block.1} parent=5 // pred_region
      %s117 = ssub.s32 %s8, 1
      %p118 = scmp.lt.s32.totalorder %s13, 1
      %s119 = scalar_select %p118, %s13, 1
      %s120 = smul.addr %s119, 32
      %s121 = smul.addr %s120, 8
      %s122 = scalar_lea.vmem %s0, %s121
      %p123 = pneg %p34
      %p124 = pneg %p31
      %p125 = pneg %p55
      %p126 = pneg %p52
      %p127 = pneg %p81
      %p128 = pneg %p78
      %p129 = scmp.lt.s32.totalorder %s13, 1
      %s130 = scalar_select %p129, %s13, 1
      %s131 = smul.addr %s130, 32
      %s132 = smul.addr %s131, 8
      %s133 = scalar_lea.vmem %s2, %s132
      %p134 = scmp.lt.s32.totalorder %s13, 1
      %s135 = scalar_select %p134, %s13, 1
      %s136 = smul.addr %s135, 32
      %s137 = smul.addr %s136, 8
      %s138 = scalar_lea.vmem %s0, %s137
      %p139 = scmp.lt.s32.totalorder %s13, 1
      %s140 = scalar_select %p139, %s13, 1
      %s141 = smul.addr %s140, 32
      %s142 = smul.addr %s141, 8
      %s143 = scalar_lea.vmem %s2, %s142
      %v144 = vld [vmem:[%s138] sm:$0xff]
      %v145 = vld [vmem:[%s138 + $0x8] sm:$0xff]
      %v146 = vld [vmem:[%s138 + $0x10] sm:$0xff]
      %v147 = vld [vmem:[%s138 + $0x18] sm:$0xff]
      %v148 = vld [vmem:[%s138 + $0x20] sm:$0xff]
      %v149 = vld [vmem:[%s138 + $0x28] sm:$0xff]
      %v150 = vld [vmem:[%s138 + $0x30] sm:$0xff]
      %v151 = vld [vmem:[%s138 + $0x38] sm:$0xff]
      %v152 = vld [vmem:[%s138 + $0x40] sm:$0xff]
      %v153 = vld [vmem:[%s138 + $0x48] sm:$0xff]
      %v154 = vld [vmem:[%s138 + $0x50] sm:$0xff]
      %v155 = vld [vmem:[%s138 + $0x58] sm:$0xff]
      %v156 = vld [vmem:[%s138 + $0x60] sm:$0xff]
      %v157 = vld [vmem:[%s138 + $0x68] sm:$0xff]
      %v158 = vld [vmem:[%s138 + $0x70] sm:$0xff]
      %v159 = vld [vmem:[%s138 + $0x78] sm:$0xff]
      %v160 = vld [vmem:[%s138 + $0x80] sm:$0xff]
      %v161 = vld [vmem:[%s138 + $0x88] sm:$0xff]
      %v162 = vld [vmem:[%s138 + $0x90] sm:$0xff]
      %v163 = vld [vmem:[%s138 + $0x98] sm:$0xff]
      %v164 = vld [vmem:[%s138 + $0xa0] sm:$0xff]
      %v165 = vld [vmem:[%s138 + $0xa8] sm:$0xff]
      %v166 = vld [vmem:[%s138 + $0xb0] sm:$0xff]
      %v167 = vld [vmem:[%s138 + $0xb8] sm:$0xff]
      %v168 = vld [vmem:[%s138 + $0xc0] sm:$0xff]
      %v169 = vld [vmem:[%s138 + $0xc8] sm:$0xff]
      %v170 = vld [vmem:[%s138 + $0xd0] sm:$0xff]
      %v171 = vld [vmem:[%s138 + $0xd8] sm:$0xff]
      %v172 = vld [vmem:[%s138 + $0xe0] sm:$0xff]
      %v173 = vld [vmem:[%s138 + $0xe8] sm:$0xff]
      %v174 = vld [vmem:[%s138 + $0xf0] sm:$0xff]
      %v175 = vld [vmem:[%s138 + $0xf8] sm:$0xff]
      %v176 = vlaneseq
      %v177 = vshrl.u32 %v176, 7
      %v178 = vadd.s32 %v177, 8
      %v179 = vadd.s32 %v177, 16
      %v180 = vadd.s32 %v177, 24
      %v181 = vadd.s32 %v177, 32
      %v182 = vadd.s32 %v177, 40
      %v183 = vadd.s32 %v177, 48
      %v184 = vadd.s32 %v177, 56
      %v185 = vadd.s32 %v177, 64
      %v186 = vadd.s32 %v177, 72
      %v187 = vadd.s32 %v177, 80
      %v188 = vadd.s32 %v177, 88
      %v189 = vadd.s32 %v177, 96
      %v190 = vadd.s32 %v177, 104
      %v191 = vadd.s32 %v177, 112
      %v192 = vadd.s32 %v177, 120
      %v193 = vadd.s32 %v177, 128
      %v194 = vadd.s32 %v177, 136
      %v195 = vadd.s32 %v177, 144
      %v196 = vadd.s32 %v177, 152
      %v197 = vadd.s32 %v177, 160
      %v198 = vadd.s32 %v177, 168
      %v199 = vadd.s32 %v177, 176
      %v200 = vadd.s32 %v177, 184
      %v201 = vadd.s32 %v177, 192
      %v202 = vadd.s32 %v177, 200
      %v203 = vadd.s32 %v177, 208
      %v204 = vadd.s32 %v177, 216
      %v205 = vadd.s32 %v177, 224
      %v206 = vadd.s32 %v177, 232
      %v207 = vadd.s32 %v177, 240
      %v208 = vadd.s32 %v177, 248
      %v209 = vand.u32 %v177, 15
      %v210 = vand.u32 %v178, 15
      %v211 = vand.u32 %v179, 15
      %v212 = vand.u32 %v180, 15
      %v213 = vand.u32 %v181, 15
      %v214 = vand.u32 %v182, 15
      %v215 = vand.u32 %v183, 15
      %v216 = vand.u32 %v184, 15
      %v217 = vand.u32 %v185, 15
      %v218 = vand.u32 %v186, 15
      %v219 = vand.u32 %v187, 15
      %v220 = vand.u32 %v188, 15
      %v221 = vand.u32 %v189, 15
      %v222 = vand.u32 %v190, 15
      %v223 = vand.u32 %v191, 15
      %v224 = vand.u32 %v192, 15
      %v225 = vand.u32 %v193, 15
      %v226 = vand.u32 %v194, 15
      %v227 = vand.u32 %v195, 15
      %v228 = vand.u32 %v196, 15
      %v229 = vand.u32 %v197, 15
      %v230 = vand.u32 %v198, 15
      %v231 = vand.u32 %v199, 15
      %v232 = vand.u32 %v200, 15
      %v233 = vand.u32 %v201, 15
      %v234 = vand.u32 %v202, 15
      %v235 = vand.u32 %v203, 15
      %v236 = vand.u32 %v204, 15
      %v237 = vand.u32 %v205, 15
      %v238 = vand.u32 %v206, 15
      %v239 = vand.u32 %v207, 15
      %v240 = vand.u32 %v208, 15
      %v241 = vrot.slane %v144, 7
      %v242 = vrot.slane %v145, 7
      %v243 = vrot.slane %v146, 7
      %v244 = vrot.slane %v147, 7
      %v245 = vrot.slane %v148, 7
      %v246 = vrot.slane %v149, 7
      %v247 = vrot.slane %v150, 7
      %v248 = vrot.slane %v151, 7
      %v249 = vrot.slane %v152, 7
      %v250 = vrot.slane %v153, 7
      %v251 = vrot.slane %v154, 7
      %v252 = vrot.slane %v155, 7
      %v253 = vrot.slane %v156, 7
      %v254 = vrot.slane %v157, 7
      %v255 = vrot.slane %v158, 7
      %v256 = vrot.slane %v159, 7
      %v257 = vrot.slane %v160, 7
      %v258 = vrot.slane %v161, 7
      %v259 = vrot.slane %v162, 7
      %v260 = vrot.slane %v163, 7
      %v261 = vrot.slane %v164, 7
      %v262 = vrot.slane %v165, 7
      %v263 = vrot.slane %v166, 7
      %v264 = vrot.slane %v167, 7
      %v265 = vrot.slane %v168, 7
      %v266 = vrot.slane %v169, 7
      %v267 = vrot.slane %v170, 7
      %v268 = vrot.slane %v171, 7
      %v269 = vrot.slane %v172, 7
      %v270 = vrot.slane %v173, 7
      %v271 = vrot.slane %v174, 7
      %v272 = vrot.slane %v175, 7
      %vm273 = vcmp.lt.s32.totalorder %v177, 1
      %v274 = vsel %vm273, %v271, %v272
      %v275 = vsel %vm273, %v270, %v271
      %v276 = vsel %vm273, %v269, %v270
      %v277 = vsel %vm273, %v268, %v269
      %v278 = vsel %vm273, %v267, %v268
      %v279 = vsel %vm273, %v266, %v267
      %v280 = vsel %vm273, %v265, %v266
      %v281 = vsel %vm273, %v264, %v265
      %v282 = vsel %vm273, %v263, %v264
      %v283 = vsel %vm273, %v262, %v263
      %v284 = vsel %vm273, %v261, %v262
      %v285 = vsel %vm273, %v260, %v261
      %v286 = vsel %vm273, %v259, %v260
      %v287 = vsel %vm273, %v258, %v259
      %v288 = vsel %vm273, %v257, %v258
      %v289 = vsel %vm273, %v256, %v257
      %v290 = vsel %vm273, %v255, %v256
      %v291 = vsel %vm273, %v254, %v255
      %v292 = vsel %vm273, %v253, %v254
      %v293 = vsel %vm273, %v252, %v253
      %v294 = vsel %vm273, %v251, %v252
      %v295 = vsel %vm273, %v250, %v251
      %v296 = vsel %vm273, %v249, %v250
      %v297 = vsel %vm273, %v248, %v249
      %v298 = vsel %vm273, %v247, %v248
      %v299 = vsel %vm273, %v246, %v247
      %v300 = vsel %vm273, %v245, %v246
      %v301 = vsel %vm273, %v244, %v245
      %v302 = vsel %vm273, %v243, %v244
      %v303 = vsel %vm273, %v242, %v243
      %v304 = vsel %vm273, %v241, %v242
      %v305 = vsel %vm273, %v272, %v241
      %vm306 = vcmp.ge.s32.totalorder %v209, 1
      %vm307 = vcmp.ge.s32.totalorder %v210, 1
      %vm308 = vcmp.ge.s32.totalorder %v211, 1
      %vm309 = vcmp.ge.s32.totalorder %v212, 1
      %vm310 = vcmp.ge.s32.totalorder %v213, 1
      %vm311 = vcmp.ge.s32.totalorder %v214, 1
      %vm312 = vcmp.ge.s32.totalorder %v215, 1
      %vm313 = vcmp.ge.s32.totalorder %v216, 1
      %vm314 = vcmp.ge.s32.totalorder %v217, 1
      %vm315 = vcmp.ge.s32.totalorder %v218, 1
      %vm316 = vcmp.ge.s32.totalorder %v219, 1
      %vm317 = vcmp.ge.s32.totalorder %v220, 1
      %vm318 = vcmp.ge.s32.totalorder %v221, 1
      %vm319 = vcmp.ge.s32.totalorder %v222, 1
      %vm320 = vcmp.ge.s32.totalorder %v223, 1
      %vm321 = vcmp.ge.s32.totalorder %v224, 1
      %vm322 = vcmp.ge.s32.totalorder %v225, 1
      %vm323 = vcmp.ge.s32.totalorder %v226, 1
      %vm324 = vcmp.ge.s32.totalorder %v227, 1
      %vm325 = vcmp.ge.s32.totalorder %v228, 1
      %vm326 = vcmp.ge.s32.totalorder %v229, 1
      %vm327 = vcmp.ge.s32.totalorder %v230, 1
      %vm328 = vcmp.ge.s32.totalorder %v231, 1
      %vm329 = vcmp.ge.s32.totalorder %v232, 1
      %vm330 = vcmp.ge.s32.totalorder %v233, 1
      %vm331 = vcmp.ge.s32.totalorder %v234, 1
      %vm332 = vcmp.ge.s32.totalorder %v235, 1
      %vm333 = vcmp.ge.s32.totalorder %v236, 1
      %vm334 = vcmp.ge.s32.totalorder %v237, 1
      %vm335 = vcmp.ge.s32.totalorder %v238, 1
      %vm336 = vcmp.ge.s32.totalorder %v239, 1
      %vm337 = vcmp.ge.s32.totalorder %v240, 1
      %v338 = vsel %vm306, 1, 0
      %v339 = vsel %vm307, 1, 0
      %v340 = vsel %vm308, 1, 0
      %v341 = vsel %vm309, 1, 0
      %v342 = vsel %vm310, 1, 0
      %v343 = vsel %vm311, 1, 0
      %v344 = vsel %vm312, 1, 0
      %v345 = vsel %vm313, 1, 0
      %v346 = vsel %vm314, 1, 0
      %v347 = vsel %vm315, 1, 0
      %v348 = vsel %vm316, 1, 0
      %v349 = vsel %vm317, 1, 0
      %v350 = vsel %vm318, 1, 0
      %v351 = vsel %vm319, 1, 0
      %v352 = vsel %vm320, 1, 0
      %v353 = vsel %vm321, 1, 0
      %v354 = vsel %vm322, 1, 0
      %v355 = vsel %vm323, 1, 0
      %v356 = vsel %vm324, 1, 0
      %v357 = vsel %vm325, 1, 0
      %v358 = vsel %vm326, 1, 0
      %v359 = vsel %vm327, 1, 0
      %v360 = vsel %vm328, 1, 0
      %v361 = vsel %vm329, 1, 0
      %v362 = vsel %vm330, 1, 0
      %v363 = vsel %vm331, 1, 0
      %v364 = vsel %vm332, 1, 0
      %v365 = vsel %vm333, 1, 0
      %v366 = vsel %vm334, 1, 0
      %v367 = vsel %vm335, 1, 0
      %v368 = vsel %vm336, 1, 0
      %v369 = vsel %vm337, 1, 0
      %vm370 = vcmp.eq.s32.totalorder %v338, 1
      %vm371 = vcmp.eq.s32.totalorder %v339, 1
      %vm372 = vcmp.eq.s32.totalorder %v340, 1
      %vm373 = vcmp.eq.s32.totalorder %v341, 1
      %vm374 = vcmp.eq.s32.totalorder %v342, 1
      %vm375 = vcmp.eq.s32.totalorder %v343, 1
      %vm376 = vcmp.eq.s32.totalorder %v344, 1
      %vm377 = vcmp.eq.s32.totalorder %v345, 1
      %vm378 = vcmp.eq.s32.totalorder %v346, 1
      %vm379 = vcmp.eq.s32.totalorder %v347, 1
      %vm380 = vcmp.eq.s32.totalorder %v348, 1
      %vm381 = vcmp.eq.s32.totalorder %v349, 1
      %vm382 = vcmp.eq.s32.totalorder %v350, 1
      %vm383 = vcmp.eq.s32.totalorder %v351, 1
      %vm384 = vcmp.eq.s32.totalorder %v352, 1
      %vm385 = vcmp.eq.s32.totalorder %v353, 1
      %vm386 = vcmp.eq.s32.totalorder %v354, 1
      %vm387 = vcmp.eq.s32.totalorder %v355, 1
      %vm388 = vcmp.eq.s32.totalorder %v356, 1
      %vm389 = vcmp.eq.s32.totalorder %v357, 1
      %vm390 = vcmp.eq.s32.totalorder %v358, 1
      %vm391 = vcmp.eq.s32.totalorder %v359, 1
      %vm392 = vcmp.eq.s32.totalorder %v360, 1
      %vm393 = vcmp.eq.s32.totalorder %v361, 1
      %vm394 = vcmp.eq.s32.totalorder %v362, 1
      %vm395 = vcmp.eq.s32.totalorder %v363, 1
      %vm396 = vcmp.eq.s32.totalorder %v364, 1
      %vm397 = vcmp.eq.s32.totalorder %v365, 1
      %vm398 = vcmp.eq.s32.totalorder %v366, 1
      %vm399 = vcmp.eq.s32.totalorder %v367, 1
      %vm400 = vcmp.eq.s32.totalorder %v368, 1
      %vm401 = vcmp.eq.s32.totalorder %v369, 1
      %v402 = vsel %vm370, %v305, 0.0
      %v403 = vsel %vm371, %v304, 0.0
      %v404 = vsel %vm372, %v303, 0.0
      %v405 = vsel %vm373, %v302, 0.0
      %v406 = vsel %vm374, %v301, 0.0
      %v407 = vsel %vm375, %v300, 0.0
      %v408 = vsel %vm376, %v299, 0.0
      %v409 = vsel %vm377, %v298, 0.0
      %v410 = vsel %vm378, %v297, 0.0
      %v411 = vsel %vm379, %v296, 0.0
      %v412 = vsel %vm380, %v295, 0.0
      %v413 = vsel %vm381, %v294, 0.0
      %v414 = vsel %vm382, %v293, 0.0
      %v415 = vsel %vm383, %v292, 0.0
      %v416 = vsel %vm384, %v291, 0.0
      %v417 = vsel %vm385, %v290, 0.0
      %v418 = vsel %vm386, %v289, 0.0
      %v419 = vsel %vm387, %v288, 0.0
      %v420 = vsel %vm388, %v287, 0.0
      %v421 = vsel %vm389, %v286, 0.0
      %v422 = vsel %vm390, %v285, 0.0
      %v423 = vsel %vm391, %v284, 0.0
      %v424 = vsel %vm392, %v283, 0.0
      %v425 = vsel %vm393, %v282, 0.0
      %v426 = vsel %vm394, %v281, 0.0
      %v427 = vsel %vm395, %v280, 0.0
      %v428 = vsel %vm396, %v279, 0.0
      %v429 = vsel %vm397, %v278, 0.0
      %v430 = vsel %vm398, %v277, 0.0
      %v431 = vsel %vm399, %v276, 0.0
      %v432 = vsel %vm400, %v275, 0.0
      %v433 = vsel %vm401, %v274, 0.0
      %v434 = vrot.slane %v144, 1
      %v435 = vrot.slane %v145, 1
      %v436 = vrot.slane %v146, 1
      %v437 = vrot.slane %v147, 1
      %v438 = vrot.slane %v148, 1
      %v439 = vrot.slane %v149, 1
      %v440 = vrot.slane %v150, 1
      %v441 = vrot.slane %v151, 1
      %v442 = vrot.slane %v152, 1
      %v443 = vrot.slane %v153, 1
      %v444 = vrot.slane %v154, 1
      %v445 = vrot.slane %v155, 1
      %v446 = vrot.slane %v156, 1
      %v447 = vrot.slane %v157, 1
      %v448 = vrot.slane %v158, 1
      %v449 = vrot.slane %v159, 1
      %v450 = vrot.slane %v160, 1
      %v451 = vrot.slane %v161, 1
      %v452 = vrot.slane %v162, 1
      %v453 = vrot.slane %v163, 1
      %v454 = vrot.slane %v164, 1
      %v455 = vrot.slane %v165, 1
      %v456 = vrot.slane %v166, 1
      %v457 = vrot.slane %v167, 1
      %v458 = vrot.slane %v168, 1
      %v459 = vrot.slane %v169, 1
      %v460 = vrot.slane %v170, 1
      %v461 = vrot.slane %v171, 1
      %v462 = vrot.slane %v172, 1
      %v463 = vrot.slane %v173, 1
      %v464 = vrot.slane %v174, 1
      %v465 = vrot.slane %v175, 1
      %vm466 = vcmp.lt.s32.totalorder %v177, 7
      %v467 = vsel %vm466, %v464, %v465
      %v468 = vsel %vm466, %v463, %v464
      %v469 = vsel %vm466, %v462, %v463
      %v470 = vsel %vm466, %v461, %v462
      %v471 = vsel %vm466, %v460, %v461
      %v472 = vsel %vm466, %v459, %v460
      %v473 = vsel %vm466, %v458, %v459
      %v474 = vsel %vm466, %v457, %v458
      %v475 = vsel %vm466, %v456, %v457
      %v476 = vsel %vm466, %v455, %v456
      %v477 = vsel %vm466, %v454, %v455
      %v478 = vsel %vm466, %v453, %v454
      %v479 = vsel %vm466, %v452, %v453
      %v480 = vsel %vm466, %v451, %v452
      %v481 = vsel %vm466, %v450, %v451
      %v482 = vsel %vm466, %v449, %v450
      %v483 = vsel %vm466, %v448, %v449
      %v484 = vsel %vm466, %v447, %v448
      %v485 = vsel %vm466, %v446, %v447
      %v486 = vsel %vm466, %v445, %v446
      %v487 = vsel %vm466, %v444, %v445
      %v488 = vsel %vm466, %v443, %v444
      %v489 = vsel %vm466, %v442, %v443
      %v490 = vsel %vm466, %v441, %v442
      %v491 = vsel %vm466, %v440, %v441
      %v492 = vsel %vm466, %v439, %v440
      %v493 = vsel %vm466, %v438, %v439
      %v494 = vsel %vm466, %v437, %v438
      %v495 = vsel %vm466, %v436, %v437
      %v496 = vsel %vm466, %v435, %v436
      %v497 = vsel %vm466, %v434, %v435
      %v498 = vsel %vm466, %v465, %v434
      %vm499 = vcmp.lt.s32.totalorder %v209, 15
      %vm500 = vcmp.lt.s32.totalorder %v210, 15
      %vm501 = vcmp.lt.s32.totalorder %v211, 15
      %vm502 = vcmp.lt.s32.totalorder %v212, 15
      %vm503 = vcmp.lt.s32.totalorder %v213, 15
      %vm504 = vcmp.lt.s32.totalorder %v214, 15
      %vm505 = vcmp.lt.s32.totalorder %v215, 15
      %vm506 = vcmp.lt.s32.totalorder %v216, 15
      %vm507 = vcmp.lt.s32.totalorder %v217, 15
      %vm508 = vcmp.lt.s32.totalorder %v218, 15
      %vm509 = vcmp.lt.s32.totalorder %v219, 15
      %vm510 = vcmp.lt.s32.totalorder %v220, 15
      %vm511 = vcmp.lt.s32.totalorder %v221, 15
      %vm512 = vcmp.lt.s32.totalorder %v222, 15
      %vm513 = vcmp.lt.s32.totalorder %v223, 15
      %vm514 = vcmp.lt.s32.totalorder %v224, 15
      %vm515 = vcmp.lt.s32.totalorder %v225, 15
      %vm516 = vcmp.lt.s32.totalorder %v226, 15
      %vm517 = vcmp.lt.s32.totalorder %v227, 15
      %vm518 = vcmp.lt.s32.totalorder %v228, 15
      %vm519 = vcmp.lt.s32.totalorder %v229, 15
      %vm520 = vcmp.lt.s32.totalorder %v230, 15
      %vm521 = vcmp.lt.s32.totalorder %v231, 15
      %vm522 = vcmp.lt.s32.totalorder %v232, 15
      %vm523 = vcmp.lt.s32.totalorder %v233, 15
      %vm524 = vcmp.lt.s32.totalorder %v234, 15
      %vm525 = vcmp.lt.s32.totalorder %v235, 15
      %vm526 = vcmp.lt.s32.totalorder %v236, 15
      %vm527 = vcmp.lt.s32.totalorder %v237, 15
      %vm528 = vcmp.lt.s32.totalorder %v238, 15
      %vm529 = vcmp.lt.s32.totalorder %v239, 15
      %vm530 = vcmp.lt.s32.totalorder %v240, 15
      %v531 = vsel %vm499, 1, 0
      %v532 = vsel %vm500, 1, 0
      %v533 = vsel %vm501, 1, 0
      %v534 = vsel %vm502, 1, 0
      %v535 = vsel %vm503, 1, 0
      %v536 = vsel %vm504, 1, 0
      %v537 = vsel %vm505, 1, 0
      %v538 = vsel %vm506, 1, 0
      %v539 = vsel %vm507, 1, 0
      %v540 = vsel %vm508, 1, 0
      %v541 = vsel %vm509, 1, 0
      %v542 = vsel %vm510, 1, 0
      %v543 = vsel %vm511, 1, 0
      %v544 = vsel %vm512, 1, 0
      %v545 = vsel %vm513, 1, 0
      %v546 = vsel %vm514, 1, 0
      %v547 = vsel %vm515, 1, 0
      %v548 = vsel %vm516, 1, 0
      %v549 = vsel %vm517, 1, 0
      %v550 = vsel %vm518, 1, 0
      %v551 = vsel %vm519, 1, 0
      %v552 = vsel %vm520, 1, 0
      %v553 = vsel %vm521, 1, 0
      %v554 = vsel %vm522, 1, 0
      %v555 = vsel %vm523, 1, 0
      %v556 = vsel %vm524, 1, 0
      %v557 = vsel %vm525, 1, 0
      %v558 = vsel %vm526, 1, 0
      %v559 = vsel %vm527, 1, 0
      %v560 = vsel %vm528, 1, 0
      %v561 = vsel %vm529, 1, 0
      %v562 = vsel %vm530, 1, 0
      %vm563 = vcmp.eq.s32.totalorder %v531, 1
      %vm564 = vcmp.eq.s32.totalorder %v532, 1
      %vm565 = vcmp.eq.s32.totalorder %v533, 1
      %vm566 = vcmp.eq.s32.totalorder %v534, 1
      %vm567 = vcmp.eq.s32.totalorder %v535, 1
      %vm568 = vcmp.eq.s32.totalorder %v536, 1
      %vm569 = vcmp.eq.s32.totalorder %v537, 1
      %vm570 = vcmp.eq.s32.totalorder %v538, 1
      %vm571 = vcmp.eq.s32.totalorder %v539, 1
      %vm572 = vcmp.eq.s32.totalorder %v540, 1
      %vm573 = vcmp.eq.s32.totalorder %v541, 1
      %vm574 = vcmp.eq.s32.totalorder %v542, 1
      %vm575 = vcmp.eq.s32.totalorder %v543, 1
      %vm576 = vcmp.eq.s32.totalorder %v544, 1
      %vm577 = vcmp.eq.s32.totalorder %v545, 1
      %vm578 = vcmp.eq.s32.totalorder %v546, 1
      %vm579 = vcmp.eq.s32.totalorder %v547, 1
      %vm580 = vcmp.eq.s32.totalorder %v548, 1
      %vm581 = vcmp.eq.s32.totalorder %v549, 1
      %vm582 = vcmp.eq.s32.totalorder %v550, 1
      %vm583 = vcmp.eq.s32.totalorder %v551, 1
      %vm584 = vcmp.eq.s32.totalorder %v552, 1
      %vm585 = vcmp.eq.s32.totalorder %v553, 1
      %vm586 = vcmp.eq.s32.totalorder %v554, 1
      %vm587 = vcmp.eq.s32.totalorder %v555, 1
      %vm588 = vcmp.eq.s32.totalorder %v556, 1
      %vm589 = vcmp.eq.s32.totalorder %v557, 1
      %vm590 = vcmp.eq.s32.totalorder %v558, 1
      %vm591 = vcmp.eq.s32.totalorder %v559, 1
      %vm592 = vcmp.eq.s32.totalorder %v560, 1
      %vm593 = vcmp.eq.s32.totalorder %v561, 1
      %vm594 = vcmp.eq.s32.totalorder %v562, 1
      %v595 = vsel %vm563, %v497, 0.0
      %v596 = vsel %vm564, %v496, 0.0
      %v597 = vsel %vm565, %v495, 0.0
      %v598 = vsel %vm566, %v494, 0.0
      %v599 = vsel %vm567, %v493, 0.0
      %v600 = vsel %vm568, %v492, 0.0
      %v601 = vsel %vm569, %v491, 0.0
      %v602 = vsel %vm570, %v490, 0.0
      %v603 = vsel %vm571, %v489, 0.0
      %v604 = vsel %vm572, %v488, 0.0
      %v605 = vsel %vm573, %v487, 0.0
      %v606 = vsel %vm574, %v486, 0.0
      %v607 = vsel %vm575, %v485, 0.0
      %v608 = vsel %vm576, %v484, 0.0
      %v609 = vsel %vm577, %v483, 0.0
      %v610 = vsel %vm578, %v482, 0.0
      %v611 = vsel %vm579, %v481, 0.0
      %v612 = vsel %vm580, %v480, 0.0
      %v613 = vsel %vm581, %v479, 0.0
      %v614 = vsel %vm582, %v478, 0.0
      %v615 = vsel %vm583, %v477, 0.0
      %v616 = vsel %vm584, %v476, 0.0
      %v617 = vsel %vm585, %v475, 0.0
      %v618 = vsel %vm586, %v474, 0.0
      %v619 = vsel %vm587, %v473, 0.0
      %v620 = vsel %vm588, %v472, 0.0
      %v621 = vsel %vm589, %v471, 0.0
      %v622 = vsel %vm590, %v470, 0.0
      %v623 = vsel %vm591, %v469, 0.0
      %v624 = vsel %vm592, %v468, 0.0
      %v625 = vsel %vm593, %v467, 0.0
      %v626 = vsel %vm594, %v498, 0.0
      %vm627 = vcmp.ge.s32.totalorder %v177, 16
      %vm628 = vcmp.ge.s32.totalorder %v178, 16
      %vm629 = vcmp.ge.s32.totalorder %v179, 16
      %vm630 = vcmp.ge.s32.totalorder %v180, 16
      %vm631 = vcmp.ge.s32.totalorder %v181, 16
      %vm632 = vcmp.ge.s32.totalorder %v182, 16
      %vm633 = vcmp.ge.s32.totalorder %v183, 16
      %vm634 = vcmp.ge.s32.totalorder %v184, 16
      %vm635 = vcmp.ge.s32.totalorder %v185, 16
      %vm636 = vcmp.ge.s32.totalorder %v186, 16
      %vm637 = vcmp.ge.s32.totalorder %v187, 16
      %vm638 = vcmp.ge.s32.totalorder %v188, 16
      %vm639 = vcmp.ge.s32.totalorder %v189, 16
      %vm640 = vcmp.ge.s32.totalorder %v190, 16
      %vm641 = vcmp.ge.s32.totalorder %v191, 16
      %vm642 = vcmp.ge.s32.totalorder %v192, 16
      %vm643 = vcmp.ge.s32.totalorder %v193, 16
      %vm644 = vcmp.ge.s32.totalorder %v194, 16
      %vm645 = vcmp.ge.s32.totalorder %v195, 16
      %vm646 = vcmp.ge.s32.totalorder %v196, 16
      %vm647 = vcmp.ge.s32.totalorder %v197, 16
      %vm648 = vcmp.ge.s32.totalorder %v198, 16
      %vm649 = vcmp.ge.s32.totalorder %v199, 16
      %vm650 = vcmp.ge.s32.totalorder %v200, 16
      %vm651 = vcmp.ge.s32.totalorder %v201, 16
      %vm652 = vcmp.ge.s32.totalorder %v202, 16
      %vm653 = vcmp.ge.s32.totalorder %v203, 16
      %vm654 = vcmp.ge.s32.totalorder %v204, 16
      %vm655 = vcmp.ge.s32.totalorder %v205, 16
      %vm656 = vcmp.ge.s32.totalorder %v206, 16
      %vm657 = vcmp.ge.s32.totalorder %v207, 16
      %vm658 = vcmp.ge.s32.totalorder %v208, 16
      %v659 = vsel %vm627, 1, 0
      %v660 = vsel %vm628, 1, 0
      %v661 = vsel %vm629, 1, 0
      %v662 = vsel %vm630, 1, 0
      %v663 = vsel %vm631, 1, 0
      %v664 = vsel %vm632, 1, 0
      %v665 = vsel %vm633, 1, 0
      %v666 = vsel %vm634, 1, 0
      %v667 = vsel %vm635, 1, 0
      %v668 = vsel %vm636, 1, 0
      %v669 = vsel %vm637, 1, 0
      %v670 = vsel %vm638, 1, 0
      %v671 = vsel %vm639, 1, 0
      %v672 = vsel %vm640, 1, 0
      %v673 = vsel %vm641, 1, 0
      %v674 = vsel %vm642, 1, 0
      %v675 = vsel %vm643, 1, 0
      %v676 = vsel %vm644, 1, 0
      %v677 = vsel %vm645, 1, 0
      %v678 = vsel %vm646, 1, 0
      %v679 = vsel %vm647, 1, 0
      %v680 = vsel %vm648, 1, 0
      %v681 = vsel %vm649, 1, 0
      %v682 = vsel %vm650, 1, 0
      %v683 = vsel %vm651, 1, 0
      %v684 = vsel %vm652, 1, 0
      %v685 = vsel %vm653, 1, 0
      %v686 = vsel %vm654, 1, 0
      %v687 = vsel %vm655, 1, 0
      %v688 = vsel %vm656, 1, 0
      %v689 = vsel %vm657, 1, 0
      %v690 = vsel %vm658, 1, 0
      %vm691 = vcmp.eq.s32.totalorder %v659, 1
      %vm692 = vcmp.eq.s32.totalorder %v660, 1
      %vm693 = vcmp.eq.s32.totalorder %v661, 1
      %vm694 = vcmp.eq.s32.totalorder %v662, 1
      %vm695 = vcmp.eq.s32.totalorder %v663, 1
      %vm696 = vcmp.eq.s32.totalorder %v664, 1
      %vm697 = vcmp.eq.s32.totalorder %v665, 1
      %vm698 = vcmp.eq.s32.totalorder %v666, 1
      %vm699 = vcmp.eq.s32.totalorder %v667, 1
      %vm700 = vcmp.eq.s32.totalorder %v668, 1
      %vm701 = vcmp.eq.s32.totalorder %v669, 1
      %vm702 = vcmp.eq.s32.totalorder %v670, 1
      %vm703 = vcmp.eq.s32.totalorder %v671, 1
      %vm704 = vcmp.eq.s32.totalorder %v672, 1
      %vm705 = vcmp.eq.s32.totalorder %v673, 1
      %vm706 = vcmp.eq.s32.totalorder %v674, 1
      %vm707 = vcmp.eq.s32.totalorder %v675, 1
      %vm708 = vcmp.eq.s32.totalorder %v676, 1
      %vm709 = vcmp.eq.s32.totalorder %v677, 1
      %vm710 = vcmp.eq.s32.totalorder %v678, 1
      %vm711 = vcmp.eq.s32.totalorder %v679, 1
      %vm712 = vcmp.eq.s32.totalorder %v680, 1
      %vm713 = vcmp.eq.s32.totalorder %v681, 1
      %vm714 = vcmp.eq.s32.totalorder %v682, 1
      %vm715 = vcmp.eq.s32.totalorder %v683, 1
      %vm716 = vcmp.eq.s32.totalorder %v684, 1
      %vm717 = vcmp.eq.s32.totalorder %v685, 1
      %vm718 = vcmp.eq.s32.totalorder %v686, 1
      %vm719 = vcmp.eq.s32.totalorder %v687, 1
      %vm720 = vcmp.eq.s32.totalorder %v688, 1
      %vm721 = vcmp.eq.s32.totalorder %v689, 1
      %vm722 = vcmp.eq.s32.totalorder %v690, 1
      %v723 = vsel %vm691, %v174, 0.0
      %v724 = vsel %vm692, %v175, 0.0
      %v725 = vsel %vm693, %v144, 0.0
      %v726 = vsel %vm694, %v145, 0.0
      %v727 = vsel %vm695, %v146, 0.0
      %v728 = vsel %vm696, %v147, 0.0
      %v729 = vsel %vm697, %v148, 0.0
      %v730 = vsel %vm698, %v149, 0.0
      %v731 = vsel %vm699, %v150, 0.0
      %v732 = vsel %vm700, %v151, 0.0
      %v733 = vsel %vm701, %v152, 0.0
      %v734 = vsel %vm702, %v153, 0.0
      %v735 = vsel %vm703, %v154, 0.0
      %v736 = vsel %vm704, %v155, 0.0
      %v737 = vsel %vm705, %v156, 0.0
      %v738 = vsel %vm706, %v157, 0.0
      %v739 = vsel %vm707, %v158, 0.0
      %v740 = vsel %vm708, %v159, 0.0
      %v741 = vsel %vm709, %v160, 0.0
      %v742 = vsel %vm710, %v161, 0.0
      %v743 = vsel %vm711, %v162, 0.0
      %v744 = vsel %vm712, %v163, 0.0
      %v745 = vsel %vm713, %v164, 0.0
      %v746 = vsel %vm714, %v165, 0.0
      %v747 = vsel %vm715, %v166, 0.0
      %v748 = vsel %vm716, %v167, 0.0
      %v749 = vsel %vm717, %v168, 0.0
      %v750 = vsel %vm718, %v169, 0.0
      %v751 = vsel %vm719, %v170, 0.0
      %v752 = vsel %vm720, %v171, 0.0
      %v753 = vsel %vm721, %v172, 0.0
      %v754 = vsel %vm722, %v173, 0.0
      %vm755 = vcmp.lt.s32.totalorder %v177, 240
      %vm756 = vcmp.lt.s32.totalorder %v178, 240
      %vm757 = vcmp.lt.s32.totalorder %v179, 240
      %vm758 = vcmp.lt.s32.totalorder %v180, 240
      %vm759 = vcmp.lt.s32.totalorder %v181, 240
      %vm760 = vcmp.lt.s32.totalorder %v182, 240
      %vm761 = vcmp.lt.s32.totalorder %v183, 240
      %vm762 = vcmp.lt.s32.totalorder %v184, 240
      %vm763 = vcmp.lt.s32.totalorder %v185, 240
      %vm764 = vcmp.lt.s32.totalorder %v186, 240
      %vm765 = vcmp.lt.s32.totalorder %v187, 240
      %vm766 = vcmp.lt.s32.totalorder %v188, 240
      %vm767 = vcmp.lt.s32.totalorder %v189, 240
      %vm768 = vcmp.lt.s32.totalorder %v190, 240
      %vm769 = vcmp.lt.s32.totalorder %v191, 240
      %vm770 = vcmp.lt.s32.totalorder %v192, 240
      %vm771 = vcmp.lt.s32.totalorder %v193, 240
      %vm772 = vcmp.lt.s32.totalorder %v194, 240
      %vm773 = vcmp.lt.s32.totalorder %v195, 240
      %vm774 = vcmp.lt.s32.totalorder %v196, 240
      %vm775 = vcmp.lt.s32.totalorder %v197, 240
      %vm776 = vcmp.lt.s32.totalorder %v198, 240
      %vm777 = vcmp.lt.s32.totalorder %v199, 240
      %vm778 = vcmp.lt.s32.totalorder %v200, 240
      %vm779 = vcmp.lt.s32.totalorder %v201, 240
      %vm780 = vcmp.lt.s32.totalorder %v202, 240
      %vm781 = vcmp.lt.s32.totalorder %v203, 240
      %vm782 = vcmp.lt.s32.totalorder %v204, 240
      %vm783 = vcmp.lt.s32.totalorder %v205, 240
      %vm784 = vcmp.lt.s32.totalorder %v206, 240
      %vm785 = vcmp.lt.s32.totalorder %v207, 240
      %vm786 = vcmp.lt.s32.totalorder %v208, 240
      %v787 = vsel %vm755, 1, 0
      %v788 = vsel %vm756, 1, 0
      %v789 = vsel %vm757, 1, 0
      %v790 = vsel %vm758, 1, 0
      %v791 = vsel %vm759, 1, 0
      %v792 = vsel %vm760, 1, 0
      %v793 = vsel %vm761, 1, 0
      %v794 = vsel %vm762, 1, 0
      %v795 = vsel %vm763, 1, 0
      %v796 = vsel %vm764, 1, 0
      %v797 = vsel %vm765, 1, 0
      %v798 = vsel %vm766, 1, 0
      %v799 = vsel %vm767, 1, 0
      %v800 = vsel %vm768, 1, 0
      %v801 = vsel %vm769, 1, 0
      %v802 = vsel %vm770, 1, 0
      %v803 = vsel %vm771, 1, 0
      %v804 = vsel %vm772, 1, 0
      %v805 = vsel %vm773, 1, 0
      %v806 = vsel %vm774, 1, 0
      %v807 = vsel %vm775, 1, 0
      %v808 = vsel %vm776, 1, 0
      %v809 = vsel %vm777, 1, 0
      %v810 = vsel %vm778, 1, 0
      %v811 = vsel %vm779, 1, 0
      %v812 = vsel %vm780, 1, 0
      %v813 = vsel %vm781, 1, 0
      %v814 = vsel %vm782, 1, 0
      %v815 = vsel %vm783, 1, 0
      %v816 = vsel %vm784, 1, 0
      %v817 = vsel %vm785, 1, 0
      %v818 = vsel %vm786, 1, 0
      %vm819 = vcmp.eq.s32.totalorder %v787, 1
      %vm820 = vcmp.eq.s32.totalorder %v788, 1
      %vm821 = vcmp.eq.s32.totalorder %v789, 1
      %vm822 = vcmp.eq.s32.totalorder %v790, 1
      %vm823 = vcmp.eq.s32.totalorder %v791, 1
      %vm824 = vcmp.eq.s32.totalorder %v792, 1
      %vm825 = vcmp.eq.s32.totalorder %v793, 1
      %vm826 = vcmp.eq.s32.totalorder %v794, 1
      %vm827 = vcmp.eq.s32.totalorder %v795, 1
      %vm828 = vcmp.eq.s32.totalorder %v796, 1
      %vm829 = vcmp.eq.s32.totalorder %v797, 1
      %vm830 = vcmp.eq.s32.totalorder %v798, 1
      %vm831 = vcmp.eq.s32.totalorder %v799, 1
      %vm832 = vcmp.eq.s32.totalorder %v800, 1
      %vm833 = vcmp.eq.s32.totalorder %v801, 1
      %vm834 = vcmp.eq.s32.totalorder %v802, 1
      %vm835 = vcmp.eq.s32.totalorder %v803, 1
      %vm836 = vcmp.eq.s32.totalorder %v804, 1
      %vm837 = vcmp.eq.s32.totalorder %v805, 1
      %vm838 = vcmp.eq.s32.totalorder %v806, 1
      %vm839 = vcmp.eq.s32.totalorder %v807, 1
      %vm840 = vcmp.eq.s32.totalorder %v808, 1
      %vm841 = vcmp.eq.s32.totalorder %v809, 1
      %vm842 = vcmp.eq.s32.totalorder %v810, 1
      %vm843 = vcmp.eq.s32.totalorder %v811, 1
      %vm844 = vcmp.eq.s32.totalorder %v812, 1
      %vm845 = vcmp.eq.s32.totalorder %v813, 1
      %vm846 = vcmp.eq.s32.totalorder %v814, 1
      %vm847 = vcmp.eq.s32.totalorder %v815, 1
      %vm848 = vcmp.eq.s32.totalorder %v816, 1
      %vm849 = vcmp.eq.s32.totalorder %v817, 1
      %vm850 = vcmp.eq.s32.totalorder %v818, 1
      %v851 = vsel %vm819, %v146, 0.0
      %v852 = vsel %vm820, %v147, 0.0
      %v853 = vsel %vm821, %v148, 0.0
      %v854 = vsel %vm822, %v149, 0.0
      %v855 = vsel %vm823, %v150, 0.0
      %v856 = vsel %vm824, %v151, 0.0
      %v857 = vsel %vm825, %v152, 0.0
      %v858 = vsel %vm826, %v153, 0.0
      %v859 = vsel %vm827, %v154, 0.0
      %v860 = vsel %vm828, %v155, 0.0
      %v861 = vsel %vm829, %v156, 0.0
      %v862 = vsel %vm830, %v157, 0.0
      %v863 = vsel %vm831, %v158, 0.0
      %v864 = vsel %vm832, %v159, 0.0
      %v865 = vsel %vm833, %v160, 0.0
      %v866 = vsel %vm834, %v161, 0.0
      %v867 = vsel %vm835, %v162, 0.0
      %v868 = vsel %vm836, %v163, 0.0
      %v869 = vsel %vm837, %v164, 0.0
      %v870 = vsel %vm838, %v165, 0.0
      %v871 = vsel %vm839, %v166, 0.0
      %v872 = vsel %vm840, %v167, 0.0
      %v873 = vsel %vm841, %v168, 0.0
      %v874 = vsel %vm842, %v169, 0.0
      %v875 = vsel %vm843, %v170, 0.0
      %v876 = vsel %vm844, %v171, 0.0
      %v877 = vsel %vm845, %v172, 0.0
      %v878 = vsel %vm846, %v173, 0.0
      %v879 = vsel %vm847, %v174, 0.0
      %v880 = vsel %vm848, %v175, 0.0
      %v881 = vsel %vm849, %v144, 0.0
      %v882 = vsel %vm850, %v145, 0.0
      %vm883 = vmand %vm627, %vm306
      %vm884 = vmand %vm628, %vm307
      %vm885 = vmand %vm629, %vm308
      %vm886 = vmand %vm630, %vm309
      %vm887 = vmand %vm631, %vm310
      %vm888 = vmand %vm632, %vm311
      %vm889 = vmand %vm633, %vm312
      %vm890 = vmand %vm634, %vm313
      %vm891 = vmand %vm635, %vm314
      %vm892 = vmand %vm636, %vm315
      %vm893 = vmand %vm637, %vm316
      %vm894 = vmand %vm638, %vm317
      %vm895 = vmand %vm639, %vm318
      %vm896 = vmand %vm640, %vm319
      %vm897 = vmand %vm641, %vm320
      %vm898 = vmand %vm642, %vm321
      %vm899 = vmand %vm643, %vm322
      %vm900 = vmand %vm644, %vm323
      %vm901 = vmand %vm645, %vm324
      %vm902 = vmand %vm646, %vm325
      %vm903 = vmand %vm647, %vm326
      %vm904 = vmand %vm648, %vm327
      %vm905 = vmand %vm649, %vm328
      %vm906 = vmand %vm650, %vm329
      %vm907 = vmand %vm651, %vm330
      %vm908 = vmand %vm652, %vm331
      %vm909 = vmand %vm653, %vm332
      %vm910 = vmand %vm654, %vm333
      %vm911 = vmand %vm655, %vm334
      %vm912 = vmand %vm656, %vm335
      %vm913 = vmand %vm657, %vm336
      %vm914 = vmand %vm658, %vm337
      %v915 = vsel %vm883, 1, 0
      %v916 = vsel %vm884, 1, 0
      %v917 = vsel %vm885, 1, 0
      %v918 = vsel %vm886, 1, 0
      %v919 = vsel %vm887, 1, 0
      %v920 = vsel %vm888, 1, 0
      %v921 = vsel %vm889, 1, 0
      %v922 = vsel %vm890, 1, 0
      %v923 = vsel %vm891, 1, 0
      %v924 = vsel %vm892, 1, 0
      %v925 = vsel %vm893, 1, 0
      %v926 = vsel %vm894, 1, 0
      %v927 = vsel %vm895, 1, 0
      %v928 = vsel %vm896, 1, 0
      %v929 = vsel %vm897, 1, 0
      %v930 = vsel %vm898, 1, 0
      %v931 = vsel %vm899, 1, 0
      %v932 = vsel %vm900, 1, 0
      %v933 = vsel %vm901, 1, 0
      %v934 = vsel %vm902, 1, 0
      %v935 = vsel %vm903, 1, 0
      %v936 = vsel %vm904, 1, 0
      %v937 = vsel %vm905, 1, 0
      %v938 = vsel %vm906, 1, 0
      %v939 = vsel %vm907, 1, 0
      %v940 = vsel %vm908, 1, 0
      %v941 = vsel %vm909, 1, 0
      %v942 = vsel %vm910, 1, 0
      %v943 = vsel %vm911, 1, 0
      %v944 = vsel %vm912, 1, 0
      %v945 = vsel %vm913, 1, 0
      %v946 = vsel %vm914, 1, 0
      %vm947 = vcmp.eq.s32.totalorder %v915, 1
      %vm948 = vcmp.eq.s32.totalorder %v916, 1
      %vm949 = vcmp.eq.s32.totalorder %v917, 1
      %vm950 = vcmp.eq.s32.totalorder %v918, 1
      %vm951 = vcmp.eq.s32.totalorder %v919, 1
      %vm952 = vcmp.eq.s32.totalorder %v920, 1
      %vm953 = vcmp.eq.s32.totalorder %v921, 1
      %vm954 = vcmp.eq.s32.totalorder %v922, 1
      %vm955 = vcmp.eq.s32.totalorder %v923, 1
      %vm956 = vcmp.eq.s32.totalorder %v924, 1
      %vm957 = vcmp.eq.s32.totalorder %v925, 1
      %vm958 = vcmp.eq.s32.totalorder %v926, 1
      %vm959 = vcmp.eq.s32.totalorder %v927, 1
      %vm960 = vcmp.eq.s32.totalorder %v928, 1
      %vm961 = vcmp.eq.s32.totalorder %v929, 1
      %vm962 = vcmp.eq.s32.totalorder %v930, 1
      %vm963 = vcmp.eq.s32.totalorder %v931, 1
      %vm964 = vcmp.eq.s32.totalorder %v932, 1
      %vm965 = vcmp.eq.s32.totalorder %v933, 1
      %vm966 = vcmp.eq.s32.totalorder %v934, 1
      %vm967 = vcmp.eq.s32.totalorder %v935, 1
      %vm968 = vcmp.eq.s32.totalorder %v936, 1
      %vm969 = vcmp.eq.s32.totalorder %v937, 1
      %vm970 = vcmp.eq.s32.totalorder %v938, 1
      %vm971 = vcmp.eq.s32.totalorder %v939, 1
      %vm972 = vcmp.eq.s32.totalorder %v940, 1
      %vm973 = vcmp.eq.s32.totalorder %v941, 1
      %vm974 = vcmp.eq.s32.totalorder %v942, 1
      %vm975 = vcmp.eq.s32.totalorder %v943, 1
      %vm976 = vcmp.eq.s32.totalorder %v944, 1
      %vm977 = vcmp.eq.s32.totalorder %v945, 1
      %vm978 = vcmp.eq.s32.totalorder %v946, 1
      %v979 = vsel %vm947, %v275, 0.0
      %v980 = vsel %vm948, %v274, 0.0
      %v981 = vsel %vm949, %v305, 0.0
      %v982 = vsel %vm950, %v304, 0.0
      %v983 = vsel %vm951, %v303, 0.0
      %v984 = vsel %vm952, %v302, 0.0
      %v985 = vsel %vm953, %v301, 0.0
      %v986 = vsel %vm954, %v300, 0.0
      %v987 = vsel %vm955, %v299, 0.0
      %v988 = vsel %vm956, %v298, 0.0
      %v989 = vsel %vm957, %v297, 0.0
      %v990 = vsel %vm958, %v296, 0.0
      %v991 = vsel %vm959, %v295, 0.0
      %v992 = vsel %vm960, %v294, 0.0
      %v993 = vsel %vm961, %v293, 0.0
      %v994 = vsel %vm962, %v292, 0.0
      %v995 = vsel %vm963, %v291, 0.0
      %v996 = vsel %vm964, %v290, 0.0
      %v997 = vsel %vm965, %v289, 0.0
      %v998 = vsel %vm966, %v288, 0.0
      %v999 = vsel %vm967, %v287, 0.0
      %v1000 = vsel %vm968, %v286, 0.0
      %v1001 = vsel %vm969, %v285, 0.0
      %v1002 = vsel %vm970, %v284, 0.0
      %v1003 = vsel %vm971, %v283, 0.0
      %v1004 = vsel %vm972, %v282, 0.0
      %v1005 = vsel %vm973, %v281, 0.0
      %v1006 = vsel %vm974, %v280, 0.0
      %v1007 = vsel %vm975, %v279, 0.0
      %v1008 = vsel %vm976, %v278, 0.0
      %v1009 = vsel %vm977, %v277, 0.0
      %v1010 = vsel %vm978, %v276, 0.0
      %vm1011 = vmand %vm755, %vm499
      %vm1012 = vmand %vm756, %vm500
      %vm1013 = vmand %vm757, %vm501
      %vm1014 = vmand %vm758, %vm502
      %vm1015 = vmand %vm759, %vm503
      %vm1016 = vmand %vm760, %vm504
      %vm1017 = vmand %vm761, %vm505
      %vm1018 = vmand %vm762, %vm506
      %vm1019 = vmand %vm763, %vm507
      %vm1020 = vmand %vm764, %vm508
      %vm1021 = vmand %vm765, %vm509
      %vm1022 = vmand %vm766, %vm510
      %vm1023 = vmand %vm767, %vm511
      %vm1024 = vmand %vm768, %vm512
      %vm1025 = vmand %vm769, %vm513
      %vm1026 = vmand %vm770, %vm514
      %vm1027 = vmand %vm771, %vm515
      %vm1028 = vmand %vm772, %vm516
      %vm1029 = vmand %vm773, %vm517
      %vm1030 = vmand %vm774, %vm518
      %vm1031 = vmand %vm775, %vm519
      %vm1032 = vmand %vm776, %vm520
      %vm1033 = vmand %vm777, %vm521
      %vm1034 = vmand %vm778, %vm522
      %vm1035 = vmand %vm779, %vm523
      %vm1036 = vmand %vm780, %vm524
      %vm1037 = vmand %vm781, %vm525
      %vm1038 = vmand %vm782, %vm526
      %vm1039 = vmand %vm783, %vm527
      %vm1040 = vmand %vm784, %vm528
      %vm1041 = vmand %vm785, %vm529
      %vm1042 = vmand %vm786, %vm530
      %v1043 = vsel %vm1011, 1, 0
      %v1044 = vsel %vm1012, 1, 0
      %v1045 = vsel %vm1013, 1, 0
      %v1046 = vsel %vm1014, 1, 0
      %v1047 = vsel %vm1015, 1, 0
      %v1048 = vsel %vm1016, 1, 0
      %v1049 = vsel %vm1017, 1, 0
      %v1050 = vsel %vm1018, 1, 0
      %v1051 = vsel %vm1019, 1, 0
      %v1052 = vsel %vm1020, 1, 0
      %v1053 = vsel %vm1021, 1, 0
      %v1054 = vsel %vm1022, 1, 0
      %v1055 = vsel %vm1023, 1, 0
      %v1056 = vsel %vm1024, 1, 0
      %v1057 = vsel %vm1025, 1, 0
      %v1058 = vsel %vm1026, 1, 0
      %v1059 = vsel %vm1027, 1, 0
      %v1060 = vsel %vm1028, 1, 0
      %v1061 = vsel %vm1029, 1, 0
      %v1062 = vsel %vm1030, 1, 0
      %v1063 = vsel %vm1031, 1, 0
      %v1064 = vsel %vm1032, 1, 0
      %v1065 = vsel %vm1033, 1, 0
      %v1066 = vsel %vm1034, 1, 0
      %v1067 = vsel %vm1035, 1, 0
      %v1068 = vsel %vm1036, 1, 0
      %v1069 = vsel %vm1037, 1, 0
      %v1070 = vsel %vm1038, 1, 0
      %v1071 = vsel %vm1039, 1, 0
      %v1072 = vsel %vm1040, 1, 0
      %v1073 = vsel %vm1041, 1, 0
      %v1074 = vsel %vm1042, 1, 0
      %vm1075 = vcmp.eq.s32.totalorder %v1043, 1
      %vm1076 = vcmp.eq.s32.totalorder %v1044, 1
      %vm1077 = vcmp.eq.s32.totalorder %v1045, 1
      %vm1078 = vcmp.eq.s32.totalorder %v1046, 1
      %vm1079 = vcmp.eq.s32.totalorder %v1047, 1
      %vm1080 = vcmp.eq.s32.totalorder %v1048, 1
      %vm1081 = vcmp.eq.s32.totalorder %v1049, 1
      %vm1082 = vcmp.eq.s32.totalorder %v1050, 1
      %vm1083 = vcmp.eq.s32.totalorder %v1051, 1
      %vm1084 = vcmp.eq.s32.totalorder %v1052, 1
      %vm1085 = vcmp.eq.s32.totalorder %v1053, 1
      %vm1086 = vcmp.eq.s32.totalorder %v1054, 1
      %vm1087 = vcmp.eq.s32.totalorder %v1055, 1
      %vm1088 = vcmp.eq.s32.totalorder %v1056, 1
      %vm1089 = vcmp.eq.s32.totalorder %v1057, 1
      %vm1090 = vcmp.eq.s32.totalorder %v1058, 1
      %vm1091 = vcmp.eq.s32.totalorder %v1059, 1
      %vm1092 = vcmp.eq.s32.totalorder %v1060, 1
      %vm1093 = vcmp.eq.s32.totalorder %v1061, 1
      %vm1094 = vcmp.eq.s32.totalorder %v1062, 1
      %vm1095 = vcmp.eq.s32.totalorder %v1063, 1
      %vm1096 = vcmp.eq.s32.totalorder %v1064, 1
      %vm1097 = vcmp.eq.s32.totalorder %v1065, 1
      %vm1098 = vcmp.eq.s32.totalorder %v1066, 1
      %vm1099 = vcmp.eq.s32.totalorder %v1067, 1
      %vm1100 = vcmp.eq.s32.totalorder %v1068, 1
      %vm1101 = vcmp.eq.s32.totalorder %v1069, 1
      %vm1102 = vcmp.eq.s32.totalorder %v1070, 1
      %vm1103 = vcmp.eq.s32.totalorder %v1071, 1
      %vm1104 = vcmp.eq.s32.totalorder %v1072, 1
      %vm1105 = vcmp.eq.s32.totalorder %v1073, 1
      %vm1106 = vcmp.eq.s32.totalorder %v1074, 1
      %v1107 = vsel %vm1075, %v495, 0.0
      %v1108 = vsel %vm1076, %v494, 0.0
      %v1109 = vsel %vm1077, %v493, 0.0
      %v1110 = vsel %vm1078, %v492, 0.0
      %v1111 = vsel %vm1079, %v491, 0.0
      %v1112 = vsel %vm1080, %v490, 0.0
      %v1113 = vsel %vm1081, %v489, 0.0
      %v1114 = vsel %vm1082, %v488, 0.0
      %v1115 = vsel %vm1083, %v487, 0.0
      %v1116 = vsel %vm1084, %v486, 0.0
      %v1117 = vsel %vm1085, %v485, 0.0
      %v1118 = vsel %vm1086, %v484, 0.0
      %v1119 = vsel %vm1087, %v483, 0.0
      %v1120 = vsel %vm1088, %v482, 0.0
      %v1121 = vsel %vm1089, %v481, 0.0
      %v1122 = vsel %vm1090, %v480, 0.0
      %v1123 = vsel %vm1091, %v479, 0.0
      %v1124 = vsel %vm1092, %v478, 0.0
      %v1125 = vsel %vm1093, %v477, 0.0
      %v1126 = vsel %vm1094, %v476, 0.0
      %v1127 = vsel %vm1095, %v475, 0.0
      %v1128 = vsel %vm1096, %v474, 0.0
      %v1129 = vsel %vm1097, %v473, 0.0
      %v1130 = vsel %vm1098, %v472, 0.0
      %v1131 = vsel %vm1099, %v471, 0.0
      %v1132 = vsel %vm1100, %v470, 0.0
      %v1133 = vsel %vm1101, %v469, 0.0
      %v1134 = vsel %vm1102, %v468, 0.0
      %v1135 = vsel %vm1103, %v467, 0.0
      %v1136 = vsel %vm1104, %v498, 0.0
      %v1137 = vsel %vm1105, %v497, 0.0
      %v1138 = vsel %vm1106, %v496, 0.0
      %vm1139 = vmand %vm755, %vm306
      %vm1140 = vmand %vm756, %vm307
      %vm1141 = vmand %vm757, %vm308
      %vm1142 = vmand %vm758, %vm309
      %vm1143 = vmand %vm759, %vm310
      %vm1144 = vmand %vm760, %vm311
      %vm1145 = vmand %vm761, %vm312
      %vm1146 = vmand %vm762, %vm313
      %vm1147 = vmand %vm763, %vm314
      %vm1148 = vmand %vm764, %vm315
      %vm1149 = vmand %vm765, %vm316
      %vm1150 = vmand %vm766, %vm317
      %vm1151 = vmand %vm767, %vm318
      %vm1152 = vmand %vm768, %vm319
      %vm1153 = vmand %vm769, %vm320
      %vm1154 = vmand %vm770, %vm321
      %vm1155 = vmand %vm771, %vm322
      %vm1156 = vmand %vm772, %vm323
      %vm1157 = vmand %vm773, %vm324
      %vm1158 = vmand %vm774, %vm325
      %vm1159 = vmand %vm775, %vm326
      %vm1160 = vmand %vm776, %vm327
      %vm1161 = vmand %vm777, %vm328
      %vm1162 = vmand %vm778, %vm329
      %vm1163 = vmand %vm779, %vm330
      %vm1164 = vmand %vm780, %vm331
      %vm1165 = vmand %vm781, %vm332
      %vm1166 = vmand %vm782, %vm333
      %vm1167 = vmand %vm783, %vm334
      %vm1168 = vmand %vm784, %vm335
      %vm1169 = vmand %vm785, %vm336
      %vm1170 = vmand %vm786, %vm337
      %v1171 = vsel %vm1139, 1, 0
      %v1172 = vsel %vm1140, 1, 0
      %v1173 = vsel %vm1141, 1, 0
      %v1174 = vsel %vm1142, 1, 0
      %v1175 = vsel %vm1143, 1, 0
      %v1176 = vsel %vm1144, 1, 0
      %v1177 = vsel %vm1145, 1, 0
      %v1178 = vsel %vm1146, 1, 0
      %v1179 = vsel %vm1147, 1, 0
      %v1180 = vsel %vm1148, 1, 0
      %v1181 = vsel %vm1149, 1, 0
      %v1182 = vsel %vm1150, 1, 0
      %v1183 = vsel %vm1151, 1, 0
      %v1184 = vsel %vm1152, 1, 0
      %v1185 = vsel %vm1153, 1, 0
      %v1186 = vsel %vm1154, 1, 0
      %v1187 = vsel %vm1155, 1, 0
      %v1188 = vsel %vm1156, 1, 0
      %v1189 = vsel %vm1157, 1, 0
      %v1190 = vsel %vm1158, 1, 0
      %v1191 = vsel %vm1159, 1, 0
      %v1192 = vsel %vm1160, 1, 0
      %v1193 = vsel %vm1161, 1, 0
      %v1194 = vsel %vm1162, 1, 0
      %v1195 = vsel %vm1163, 1, 0
      %v1196 = vsel %vm1164, 1, 0
      %v1197 = vsel %vm1165, 1, 0
      %v1198 = vsel %vm1166, 1, 0
      %v1199 = vsel %vm1167, 1, 0
      %v1200 = vsel %vm1168, 1, 0
      %v1201 = vsel %vm1169, 1, 0
      %v1202 = vsel %vm1170, 1, 0
      %vm1203 = vcmp.eq.s32.totalorder %v1171, 1
      %vm1204 = vcmp.eq.s32.totalorder %v1172, 1
      %vm1205 = vcmp.eq.s32.totalorder %v1173, 1
      %vm1206 = vcmp.eq.s32.totalorder %v1174, 1
      %vm1207 = vcmp.eq.s32.totalorder %v1175, 1
      %vm1208 = vcmp.eq.s32.totalorder %v1176, 1
      %vm1209 = vcmp.eq.s32.totalorder %v1177, 1
      %vm1210 = vcmp.eq.s32.totalorder %v1178, 1
      %vm1211 = vcmp.eq.s32.totalorder %v1179, 1
      %vm1212 = vcmp.eq.s32.totalorder %v1180, 1
      %vm1213 = vcmp.eq.s32.totalorder %v1181, 1
      %vm1214 = vcmp.eq.s32.totalorder %v1182, 1
      %vm1215 = vcmp.eq.s32.totalorder %v1183, 1
      %vm1216 = vcmp.eq.s32.totalorder %v1184, 1
      %vm1217 = vcmp.eq.s32.totalorder %v1185, 1
      %vm1218 = vcmp.eq.s32.totalorder %v1186, 1
      %vm1219 = vcmp.eq.s32.totalorder %v1187, 1
      %vm1220 = vcmp.eq.s32.totalorder %v1188, 1
      %vm1221 = vcmp.eq.s32.totalorder %v1189, 1
      %vm1222 = vcmp.eq.s32.totalorder %v1190, 1
      %vm1223 = vcmp.eq.s32.totalorder %v1191, 1
      %vm1224 = vcmp.eq.s32.totalorder %v1192, 1
      %vm1225 = vcmp.eq.s32.totalorder %v1193, 1
      %vm1226 = vcmp.eq.s32.totalorder %v1194, 1
      %vm1227 = vcmp.eq.s32.totalorder %v1195, 1
      %vm1228 = vcmp.eq.s32.totalorder %v1196, 1
      %vm1229 = vcmp.eq.s32.totalorder %v1197, 1
      %vm1230 = vcmp.eq.s32.totalorder %v1198, 1
      %vm1231 = vcmp.eq.s32.totalorder %v1199, 1
      %vm1232 = vcmp.eq.s32.totalorder %v1200, 1
      %vm1233 = vcmp.eq.s32.totalorder %v1201, 1
      %vm1234 = vcmp.eq.s32.totalorder %v1202, 1
      %v1235 = vsel %vm1203, %v303, 0.0
      %v1236 = vsel %vm1204, %v302, 0.0
      %v1237 = vsel %vm1205, %v301, 0.0
      %v1238 = vsel %vm1206, %v300, 0.0
      %v1239 = vsel %vm1207, %v299, 0.0
      %v1240 = vsel %vm1208, %v298, 0.0
      %v1241 = vsel %vm1209, %v297, 0.0
      %v1242 = vsel %vm1210, %v296, 0.0
      %v1243 = vsel %vm1211, %v295, 0.0
      %v1244 = vsel %vm1212, %v294, 0.0
      %v1245 = vsel %vm1213, %v293, 0.0
      %v1246 = vsel %vm1214, %v292, 0.0
      %v1247 = vsel %vm1215, %v291, 0.0
      %v1248 = vsel %vm1216, %v290, 0.0
      %v1249 = vsel %vm1217, %v289, 0.0
      %v1250 = vsel %vm1218, %v288, 0.0
      %v1251 = vsel %vm1219, %v287, 0.0
      %v1252 = vsel %vm1220, %v286, 0.0
      %v1253 = vsel %vm1221, %v285, 0.0
      %v1254 = vsel %vm1222, %v284, 0.0
      %v1255 = vsel %vm1223, %v283, 0.0
      %v1256 = vsel %vm1224, %v282, 0.0
      %v1257 = vsel %vm1225, %v281, 0.0
      %v1258 = vsel %vm1226, %v280, 0.0
      %v1259 = vsel %vm1227, %v279, 0.0
      %v1260 = vsel %vm1228, %v278, 0.0
      %v1261 = vsel %vm1229, %v277, 0.0
      %v1262 = vsel %vm1230, %v276, 0.0
      %v1263 = vsel %vm1231, %v275, 0.0
      %v1264 = vsel %vm1232, %v274, 0.0
      %v1265 = vsel %vm1233, %v305, 0.0
      %v1266 = vsel %vm1234, %v304, 0.0
      %vm1267 = vmand %vm627, %vm499
      %vm1268 = vmand %vm628, %vm500
      %vm1269 = vmand %vm629, %vm501
      %vm1270 = vmand %vm630, %vm502
      %vm1271 = vmand %vm631, %vm503
      %vm1272 = vmand %vm632, %vm504
      %vm1273 = vmand %vm633, %vm505
      %vm1274 = vmand %vm634, %vm506
      %vm1275 = vmand %vm635, %vm507
      %vm1276 = vmand %vm636, %vm508
      %vm1277 = vmand %vm637, %vm509
      %vm1278 = vmand %vm638, %vm510
      %vm1279 = vmand %vm639, %vm511
      %vm1280 = vmand %vm640, %vm512
      %vm1281 = vmand %vm641, %vm513
      %vm1282 = vmand %vm642, %vm514
      %vm1283 = vmand %vm643, %vm515
      %vm1284 = vmand %vm644, %vm516
      %vm1285 = vmand %vm645, %vm517
      %vm1286 = vmand %vm646, %vm518
      %vm1287 = vmand %vm647, %vm519
      %vm1288 = vmand %vm648, %vm520
      %vm1289 = vmand %vm649, %vm521
      %vm1290 = vmand %vm650, %vm522
      %vm1291 = vmand %vm651, %vm523
      %vm1292 = vmand %vm652, %vm524
      %vm1293 = vmand %vm653, %vm525
      %vm1294 = vmand %vm654, %vm526
      %vm1295 = vmand %vm655, %vm527
      %vm1296 = vmand %vm656, %vm528
      %vm1297 = vmand %vm657, %vm529
      %vm1298 = vmand %vm658, %vm530
      %v1299 = vsel %vm1267, 1, 0
      %v1300 = vsel %vm1268, 1, 0
      %v1301 = vsel %vm1269, 1, 0
      %v1302 = vsel %vm1270, 1, 0
      %v1303 = vsel %vm1271, 1, 0
      %v1304 = vsel %vm1272, 1, 0
      %v1305 = vsel %vm1273, 1, 0
      %v1306 = vsel %vm1274, 1, 0
      %v1307 = vsel %vm1275, 1, 0
      %v1308 = vsel %vm1276, 1, 0
      %v1309 = vsel %vm1277, 1, 0
      %v1310 = vsel %vm1278, 1, 0
      %v1311 = vsel %vm1279, 1, 0
      %v1312 = vsel %vm1280, 1, 0
      %v1313 = vsel %vm1281, 1, 0
      %v1314 = vsel %vm1282, 1, 0
      %v1315 = vsel %vm1283, 1, 0
      %v1316 = vsel %vm1284, 1, 0
      %v1317 = vsel %vm1285, 1, 0
      %v1318 = vsel %vm1286, 1, 0
      %v1319 = vsel %vm1287, 1, 0
      %v1320 = vsel %vm1288, 1, 0
      %v1321 = vsel %vm1289, 1, 0
      %v1322 = vsel %vm1290, 1, 0
      %v1323 = vsel %vm1291, 1, 0
      %v1324 = vsel %vm1292, 1, 0
      %v1325 = vsel %vm1293, 1, 0
      %v1326 = vsel %vm1294, 1, 0
      %v1327 = vsel %vm1295, 1, 0
      %v1328 = vsel %vm1296, 1, 0
      %v1329 = vsel %vm1297, 1, 0
      %v1330 = vsel %vm1298, 1, 0
      %vm1331 = vcmp.eq.s32.totalorder %v1299, 1
      %vm1332 = vcmp.eq.s32.totalorder %v1300, 1
      %vm1333 = vcmp.eq.s32.totalorder %v1301, 1
      %vm1334 = vcmp.eq.s32.totalorder %v1302, 1
      %vm1335 = vcmp.eq.s32.totalorder %v1303, 1
      %vm1336 = vcmp.eq.s32.totalorder %v1304, 1
      %vm1337 = vcmp.eq.s32.totalorder %v1305, 1
      %vm1338 = vcmp.eq.s32.totalorder %v1306, 1
      %vm1339 = vcmp.eq.s32.totalorder %v1307, 1
      %vm1340 = vcmp.eq.s32.totalorder %v1308, 1
      %vm1341 = vcmp.eq.s32.totalorder %v1309, 1
      %vm1342 = vcmp.eq.s32.totalorder %v1310, 1
      %vm1343 = vcmp.eq.s32.totalorder %v1311, 1
      %vm1344 = vcmp.eq.s32.totalorder %v1312, 1
      %vm1345 = vcmp.eq.s32.totalorder %v1313, 1
      %vm1346 = vcmp.eq.s32.totalorder %v1314, 1
      %vm1347 = vcmp.eq.s32.totalorder %v1315, 1
      %vm1348 = vcmp.eq.s32.totalorder %v1316, 1
      %vm1349 = vcmp.eq.s32.totalorder %v1317, 1
      %vm1350 = vcmp.eq.s32.totalorder %v1318, 1
      %vm1351 = vcmp.eq.s32.totalorder %v1319, 1
      %vm1352 = vcmp.eq.s32.totalorder %v1320, 1
      %vm1353 = vcmp.eq.s32.totalorder %v1321, 1
      %vm1354 = vcmp.eq.s32.totalorder %v1322, 1
      %vm1355 = vcmp.eq.s32.totalorder %v1323, 1
      %vm1356 = vcmp.eq.s32.totalorder %v1324, 1
      %vm1357 = vcmp.eq.s32.totalorder %v1325, 1
      %vm1358 = vcmp.eq.s32.totalorder %v1326, 1
      %vm1359 = vcmp.eq.s32.totalorder %v1327, 1
      %vm1360 = vcmp.eq.s32.totalorder %v1328, 1
      %vm1361 = vcmp.eq.s32.totalorder %v1329, 1
      %vm1362 = vcmp.eq.s32.totalorder %v1330, 1
      %v1363 = vsel %vm1331, %v467, 0.0
      %v1364 = vsel %vm1332, %v498, 0.0
      %v1365 = vsel %vm1333, %v497, 0.0
      %v1366 = vsel %vm1334, %v496, 0.0
      %v1367 = vsel %vm1335, %v495, 0.0
      %v1368 = vsel %vm1336, %v494, 0.0
      %v1369 = vsel %vm1337, %v493, 0.0
      %v1370 = vsel %vm1338, %v492, 0.0
      %v1371 = vsel %vm1339, %v491, 0.0
      %v1372 = vsel %vm1340, %v490, 0.0
      %v1373 = vsel %vm1341, %v489, 0.0
      %v1374 = vsel %vm1342, %v488, 0.0
      %v1375 = vsel %vm1343, %v487, 0.0
      %v1376 = vsel %vm1344, %v486, 0.0
      %v1377 = vsel %vm1345, %v485, 0.0
      %v1378 = vsel %vm1346, %v484, 0.0
      %v1379 = vsel %vm1347, %v483, 0.0
      %v1380 = vsel %vm1348, %v482, 0.0
      %v1381 = vsel %vm1349, %v481, 0.0
      %v1382 = vsel %vm1350, %v480, 0.0
      %v1383 = vsel %vm1351, %v479, 0.0
      %v1384 = vsel %vm1352, %v478, 0.0
      %v1385 = vsel %vm1353, %v477, 0.0
      %v1386 = vsel %vm1354, %v476, 0.0
      %v1387 = vsel %vm1355, %v475, 0.0
      %v1388 = vsel %vm1356, %v474, 0.0
      %v1389 = vsel %vm1357, %v473, 0.0
      %v1390 = vsel %vm1358, %v472, 0.0
      %v1391 = vsel %vm1359, %v471, 0.0
      %v1392 = vsel %vm1360, %v470, 0.0
      %v1393 = vsel %vm1361, %v469, 0.0
      %v1394 = vsel %vm1362, %v468, 0.0
      %v1395 = vld [vmem:[%s1] sm:$0xff]
      %v1396 = vld [vmem:[%s1 + $0x8] sm:$0xff]
      %v1397 = vld [vmem:[%s1 + $0x10] sm:$0xff]
      %v1398 = vld [vmem:[%s1 + $0x18] sm:$0xff]
      %v1399 = vld [vmem:[%s1 + $0x20] sm:$0xff]
      %v1400 = vld [vmem:[%s1 + $0x28] sm:$0xff]
      %v1401 = vld [vmem:[%s1 + $0x30] sm:$0xff]
      %v1402 = vld [vmem:[%s1 + $0x38] sm:$0xff]
      %v1403 = vld [vmem:[%s1 + $0x40] sm:$0xff]
      %v1404 = vld [vmem:[%s1 + $0x48] sm:$0xff]
      %v1405 = vld [vmem:[%s1 + $0x50] sm:$0xff]
      %v1406 = vld [vmem:[%s1 + $0x58] sm:$0xff]
      %v1407 = vld [vmem:[%s1 + $0x60] sm:$0xff]
      %v1408 = vld [vmem:[%s1 + $0x68] sm:$0xff]
      %v1409 = vld [vmem:[%s1 + $0x70] sm:$0xff]
      %v1410 = vld [vmem:[%s1 + $0x78] sm:$0xff]
      %v1411 = vld [vmem:[%s1 + $0x80] sm:$0xff]
      %v1412 = vld [vmem:[%s1 + $0x88] sm:$0xff]
      %v1413 = vld [vmem:[%s1 + $0x90] sm:$0xff]
      %v1414 = vld [vmem:[%s1 + $0x98] sm:$0xff]
      %v1415 = vld [vmem:[%s1 + $0xa0] sm:$0xff]
      %v1416 = vld [vmem:[%s1 + $0xa8] sm:$0xff]
      %v1417 = vld [vmem:[%s1 + $0xb0] sm:$0xff]
      %v1418 = vld [vmem:[%s1 + $0xb8] sm:$0xff]
      %v1419 = vld [vmem:[%s1 + $0xc0] sm:$0xff]
      %v1420 = vld [vmem:[%s1 + $0xc8] sm:$0xff]
      %v1421 = vld [vmem:[%s1 + $0xd0] sm:$0xff]
      %v1422 = vld [vmem:[%s1 + $0xd8] sm:$0xff]
      %v1423 = vld [vmem:[%s1 + $0xe0] sm:$0xff]
      %v1424 = vld [vmem:[%s1 + $0xe8] sm:$0xff]
      %v1425 = vld [vmem:[%s1 + $0xf0] sm:$0xff]
      %v1426 = vld [vmem:[%s1 + $0xf8] sm:$0xff]
      %v1427 = vld [vmem:[%s1 + $0x100] sm:$0xff]
      %v1428 = vld [vmem:[%s1 + $0x108] sm:$0xff]
      %v1429 = vld [vmem:[%s1 + $0x110] sm:$0xff]
      %v1430 = vld [vmem:[%s1 + $0x118] sm:$0xff]
      %v1431 = vld [vmem:[%s1 + $0x120] sm:$0xff]
      %v1432 = vld [vmem:[%s1 + $0x128] sm:$0xff]
      %v1433 = vld [vmem:[%s1 + $0x130] sm:$0xff]
      %v1434 = vld [vmem:[%s1 + $0x138] sm:$0xff]
      %v1435 = vld [vmem:[%s1 + $0x140] sm:$0xff]
      %v1436 = vld [vmem:[%s1 + $0x148] sm:$0xff]
      %v1437 = vld [vmem:[%s1 + $0x150] sm:$0xff]
      %v1438 = vld [vmem:[%s1 + $0x158] sm:$0xff]
      %v1439 = vld [vmem:[%s1 + $0x160] sm:$0xff]
      %v1440 = vld [vmem:[%s1 + $0x168] sm:$0xff]
      %v1441 = vld [vmem:[%s1 + $0x170] sm:$0xff]
      %v1442 = vld [vmem:[%s1 + $0x178] sm:$0xff]
      %v1443 = vld [vmem:[%s1 + $0x180] sm:$0xff]
      %v1444 = vld [vmem:[%s1 + $0x188] sm:$0xff]
      %v1445 = vld [vmem:[%s1 + $0x190] sm:$0xff]
      %v1446 = vld [vmem:[%s1 + $0x198] sm:$0xff]
      %v1447 = vld [vmem:[%s1 + $0x1a0] sm:$0xff]
      %v1448 = vld [vmem:[%s1 + $0x1a8] sm:$0xff]
      %v1449 = vld [vmem:[%s1 + $0x1b0] sm:$0xff]
      %v1450 = vld [vmem:[%s1 + $0x1b8] sm:$0xff]
      %v1451 = vld [vmem:[%s1 + $0x1c0] sm:$0xff]
      %v1452 = vld [vmem:[%s1 + $0x1c8] sm:$0xff]
      %v1453 = vld [vmem:[%s1 + $0x1d0] sm:$0xff]
      %v1454 = vld [vmem:[%s1 + $0x1d8] sm:$0xff]
      %v1455 = vld [vmem:[%s1 + $0x1e0] sm:$0xff]
      %v1456 = vld [vmem:[%s1 + $0x1e8] sm:$0xff]
      %v1457 = vld [vmem:[%s1 + $0x1f0] sm:$0xff]
      %v1458 = vld [vmem:[%s1 + $0x1f8] sm:$0xff]
      %v1459 = vld [vmem:[%s1 + $0x200] sm:$0xff]
      %v1460 = vld [vmem:[%s1 + $0x208] sm:$0xff]
      %v1461 = vld [vmem:[%s1 + $0x210] sm:$0xff]
      %v1462 = vld [vmem:[%s1 + $0x218] sm:$0xff]
      %v1463 = vld [vmem:[%s1 + $0x220] sm:$0xff]
      %v1464 = vld [vmem:[%s1 + $0x228] sm:$0xff]
      %v1465 = vld [vmem:[%s1 + $0x230] sm:$0xff]
      %v1466 = vld [vmem:[%s1 + $0x238] sm:$0xff]
      %v1467 = vld [vmem:[%s1 + $0x240] sm:$0xff]
      %v1468 = vld [vmem:[%s1 + $0x248] sm:$0xff]
      %v1469 = vld [vmem:[%s1 + $0x250] sm:$0xff]
      %v1470 = vld [vmem:[%s1 + $0x258] sm:$0xff]
      %v1471 = vld [vmem:[%s1 + $0x260] sm:$0xff]
      %v1472 = vld [vmem:[%s1 + $0x268] sm:$0xff]
      %v1473 = vld [vmem:[%s1 + $0x270] sm:$0xff]
      %v1474 = vld [vmem:[%s1 + $0x278] sm:$0xff]
      %v1475 = vld [vmem:[%s1 + $0x280] sm:$0xff]
      %v1476 = vld [vmem:[%s1 + $0x288] sm:$0xff]
      %v1477 = vld [vmem:[%s1 + $0x290] sm:$0xff]
      %v1478 = vld [vmem:[%s1 + $0x298] sm:$0xff]
      %v1479 = vld [vmem:[%s1 + $0x2a0] sm:$0xff]
      %v1480 = vld [vmem:[%s1 + $0x2a8] sm:$0xff]
      %v1481 = vld [vmem:[%s1 + $0x2b0] sm:$0xff]
      %v1482 = vld [vmem:[%s1 + $0x2b8] sm:$0xff]
      %v1483 = vld [vmem:[%s1 + $0x2c0] sm:$0xff]
      %v1484 = vld [vmem:[%s1 + $0x2c8] sm:$0xff]
      %v1485 = vld [vmem:[%s1 + $0x2d0] sm:$0xff]
      %v1486 = vld [vmem:[%s1 + $0x2d8] sm:$0xff]
      %v1487 = vld [vmem:[%s1 + $0x2e0] sm:$0xff]
      %v1488 = vld [vmem:[%s1 + $0x2e8] sm:$0xff]
      %v1489 = vld [vmem:[%s1 + $0x2f0] sm:$0xff]
      %v1490 = vld [vmem:[%s1 + $0x2f8] sm:$0xff]
      %v1491 = vld [vmem:[%s1 + $0x300] sm:$0xff]
      %v1492 = vld [vmem:[%s1 + $0x308] sm:$0xff]
      %v1493 = vld [vmem:[%s1 + $0x310] sm:$0xff]
      %v1494 = vld [vmem:[%s1 + $0x318] sm:$0xff]
      %v1495 = vld [vmem:[%s1 + $0x320] sm:$0xff]
      %v1496 = vld [vmem:[%s1 + $0x328] sm:$0xff]
      %v1497 = vld [vmem:[%s1 + $0x330] sm:$0xff]
      %v1498 = vld [vmem:[%s1 + $0x338] sm:$0xff]
      %v1499 = vld [vmem:[%s1 + $0x340] sm:$0xff]
      %v1500 = vld [vmem:[%s1 + $0x348] sm:$0xff]
      %v1501 = vld [vmem:[%s1 + $0x350] sm:$0xff]
      %v1502 = vld [vmem:[%s1 + $0x358] sm:$0xff]
      %v1503 = vld [vmem:[%s1 + $0x360] sm:$0xff]
      %v1504 = vld [vmem:[%s1 + $0x368] sm:$0xff]
      %v1505 = vld [vmem:[%s1 + $0x370] sm:$0xff]
      %v1506 = vld [vmem:[%s1 + $0x378] sm:$0xff]
      %v1507 = vld [vmem:[%s1 + $0x380] sm:$0xff]
      %v1508 = vld [vmem:[%s1 + $0x388] sm:$0xff]
      %v1509 = vld [vmem:[%s1 + $0x390] sm:$0xff]
      %v1510 = vld [vmem:[%s1 + $0x398] sm:$0xff]
      %v1511 = vld [vmem:[%s1 + $0x3a0] sm:$0xff]
      %v1512 = vld [vmem:[%s1 + $0x3a8] sm:$0xff]
      %v1513 = vld [vmem:[%s1 + $0x3b0] sm:$0xff]
      %v1514 = vld [vmem:[%s1 + $0x3b8] sm:$0xff]
      %v1515 = vld [vmem:[%s1 + $0x3c0] sm:$0xff]
      %v1516 = vld [vmem:[%s1 + $0x3c8] sm:$0xff]
      %v1517 = vld [vmem:[%s1 + $0x3d0] sm:$0xff]
      %v1518 = vld [vmem:[%s1 + $0x3d8] sm:$0xff]
      %v1519 = vld [vmem:[%s1 + $0x3e0] sm:$0xff]
      %v1520 = vld [vmem:[%s1 + $0x3e8] sm:$0xff]
      %v1521 = vld [vmem:[%s1 + $0x3f0] sm:$0xff]
      %v1522 = vld [vmem:[%s1 + $0x3f8] sm:$0xff]
      %v1523 = vld [vmem:[%s1 + $0x400] sm:$0xff]
      %v1524 = vld [vmem:[%s1 + $0x408] sm:$0xff]
      %v1525 = vld [vmem:[%s1 + $0x410] sm:$0xff]
      %v1526 = vld [vmem:[%s1 + $0x418] sm:$0xff]
      %v1527 = vld [vmem:[%s1 + $0x420] sm:$0xff]
      %v1528 = vld [vmem:[%s1 + $0x428] sm:$0xff]
      %v1529 = vld [vmem:[%s1 + $0x430] sm:$0xff]
      %v1530 = vld [vmem:[%s1 + $0x438] sm:$0xff]
      %v1531 = vld [vmem:[%s1 + $0x440] sm:$0xff]
      %v1532 = vld [vmem:[%s1 + $0x448] sm:$0xff]
      %v1533 = vld [vmem:[%s1 + $0x450] sm:$0xff]
      %v1534 = vld [vmem:[%s1 + $0x458] sm:$0xff]
      %v1535 = vld [vmem:[%s1 + $0x460] sm:$0xff]
      %v1536 = vld [vmem:[%s1 + $0x468] sm:$0xff]
      %v1537 = vld [vmem:[%s1 + $0x470] sm:$0xff]
      %v1538 = vld [vmem:[%s1 + $0x478] sm:$0xff]
      %v1539 = vld [vmem:[%s1 + $0x480] sm:$0xff]
      %v1540 = vld [vmem:[%s1 + $0x488] sm:$0xff]
      %v1541 = vld [vmem:[%s1 + $0x490] sm:$0xff]
      %v1542 = vld [vmem:[%s1 + $0x498] sm:$0xff]
      %v1543 = vld [vmem:[%s1 + $0x4a0] sm:$0xff]
      %v1544 = vld [vmem:[%s1 + $0x4a8] sm:$0xff]
      %v1545 = vld [vmem:[%s1 + $0x4b0] sm:$0xff]
      %v1546 = vld [vmem:[%s1 + $0x4b8] sm:$0xff]
      %v1547 = vld [vmem:[%s1 + $0x4c0] sm:$0xff]
      %v1548 = vld [vmem:[%s1 + $0x4c8] sm:$0xff]
      %v1549 = vld [vmem:[%s1 + $0x4d0] sm:$0xff]
      %v1550 = vld [vmem:[%s1 + $0x4d8] sm:$0xff]
      %v1551 = vld [vmem:[%s1 + $0x4e0] sm:$0xff]
      %v1552 = vld [vmem:[%s1 + $0x4e8] sm:$0xff]
      %v1553 = vld [vmem:[%s1 + $0x4f0] sm:$0xff]
      %v1554 = vld [vmem:[%s1 + $0x4f8] sm:$0xff]
      %v1555 = vld [vmem:[%s1 + $0x500] sm:$0x1]
      %v1556 = vld [vmem:[%s1 + $0x508] sm:$0x1]
      %v1557 = vlaneseq
      %v1558 = vshrl.u32 %v1557, 7
      %v1559 = vsub.s32 0, %v1558
      %v1560 = vrot.slane %v1555, %v1559
      %1561 = vmatprep.subr.mxu0 0.0
      %1562 = vmatpush1.msra.mxu0 %v1395
      %1563 = vmatprep.subr.mxu0 0.0
      %1564 = vmatpush1.msra.mxu0 %v1396
      %1565 = vmatprep.subr.mxu0 0.0
      %1566 = vmatpush1.msra.mxu0 %v1397
      %1567 = vmatprep.subr.mxu0 0.0
      %1568 = vmatpush1.msra.mxu0 %v1398
      %1569 = vmatprep.subr.mxu0 0.0
      %1570 = vmatpush1.msra.mxu0 %v1399
      %1571 = vmatprep.subr.mxu0 0.0
      %1572 = vmatpush1.msra.mxu0 %v1400
      %1573 = vmatprep.subr.mxu0 0.0
      %1574 = vmatpush1.msra.mxu0 %v1401
      %1575 = vmatprep.subr.mxu0 0.0
      %1576 = vmatpush1.msra.mxu0 %v1402
      %1577 = vmatprep.subr.mxu0 0.0
      %1578 = vmatpush1.msra.mxu0 %v1403
      %1579 = vmatprep.subr.mxu0 0.0
      %1580 = vmatpush1.msra.mxu0 %v1404
      %1581 = vmatprep.subr.mxu0 0.0
      %1582 = vmatpush1.msra.mxu0 %v1405
      %1583 = vmatprep.subr.mxu0 0.0
      %1584 = vmatpush1.msra.mxu0 %v1406
      %1585 = vmatprep.subr.mxu0 0.0
      %1586 = vmatpush1.msra.mxu0 %v1407
      %1587 = vmatprep.subr.mxu0 0.0
      %1588 = vmatpush1.msra.mxu0 %v1408
      %1589 = vmatprep.subr.mxu0 0.0
      %1590 = vmatpush1.msra.mxu0 %v1409
      %1591 = vmatprep.subr.mxu0 0.0
      %1592 = vmatpush1.msra.mxu0 %v1410
      %1593 = vmatprep.subr.mxu0 0.0
      %1594 = vmatpush1.msra.mxu0 %v1411
      %1595 = vmatprep.subr.mxu0 0.0
      %1596 = vmatpush1.msra.mxu0 %v1412
      %1597 = vmatprep.subr.mxu0 0.0
      %1598 = vmatpush1.msra.mxu0 %v1413
      %1599 = vmatprep.subr.mxu0 0.0
      %1600 = vmatpush1.msra.mxu0 %v1414
      %1601 = vmatprep.subr.mxu0 0.0
      %1602 = vmatpush1.msra.mxu0 %v1415
      %1603 = vmatprep.subr.mxu0 0.0
      %1604 = vmatpush1.msra.mxu0 %v1416
      %1605 = vmatprep.subr.mxu0 0.0
      %1606 = vmatpush1.msra.mxu0 %v1417
      %1607 = vmatprep.subr.mxu0 0.0
      %1608 = vmatpush1.msra.mxu0 %v1418
      %1609 = vmatprep.subr.mxu0 0.0
      %1610 = vmatpush1.msra.mxu0 %v1419
      %1611 = vmatprep.subr.mxu0 0.0
      %1612 = vmatpush1.msra.mxu0 %v1420
      %1613 = vmatprep.subr.mxu0 0.0
      %1614 = vmatpush1.msra.mxu0 %v1421
      %1615 = vmatprep.subr.mxu0 0.0
      %1616 = vmatpush1.msra.mxu0 %v1422
      %1617 = vmatprep.subr.mxu0 0.0
      %1618 = vmatpush1.msra.mxu0 %v1423
      %1619 = vmatprep.subr.mxu0 0.0
      %1620 = vmatpush1.msra.mxu0 %v1424
      %1621 = vmatprep.subr.mxu0 0.0
      %1622 = vmatpush1.msra.mxu0 %v1425
      %1623 = vmatprep.subr.mxu0 0.0
      %1624 = vmatpush1.msra.mxu0 %v1426
      %1625 = vmatprep.mubr.f32.mxu0 %v402
      %1626 = vmatmul.mubr.f32.gmra.mrb[0].mxu0 %v144
      %v1627 = vpop.f32.mrb[0].mxu0
      %v1628 = vadd.f32 %v1560, %v1627
      %v1629 = vpop.f32.mrb[0].mxu0
      %1630 = vmatprep.mubr.f32.mxu0 %v403
      %1631 = vmatmul.mubr.f32.gmra.mrb[0].mxu0 %v145
      %v1632 = vpop.f32.mrb[0].mxu0
      %v1633 = vadd.f32 %v1560, %v1632
      %v1634 = vpop.f32.mrb[0].mxu0
      %1635 = vmatprep.mubr.f32.mxu0 %v404
      %1636 = vmatmul.mubr.f32.gmra.mrb[0].mxu0 %v146
      %v1637 = vpop.f32.mrb[0].mxu0
      %v1638 = vadd.f32 %v1560, %v1637
      %v1639 = vpop.f32.mrb[0].mxu0
      %1640 = vmatprep.mubr.f32.mxu0 %v405
      %1641 = vmatmul.mubr.f32.gmra.mrb[0].mxu0 %v147
      %v1642 = vpop.f32.mrb[0].mxu0
      %v1643 = vadd.f32 %v1560, %v1642
      %v1644 = vpop.f32.mrb[0].mxu0
      %1645 = vmatprep.mubr.f32.mxu0 %v406
      %1646 = vmatmul.mubr.f32.gmra.mrb[0].mxu0 %v148
      %v1647 = vpop.f32.mrb[0].mxu0
      %v1648 = vadd.f32 %v1560, %v1647
      %v1649 = vpop.f32.mrb[0].mxu0
      %1650 = vmatprep.mubr.f32.mxu0 %v407
      %1651 = vmatmul.mubr.f32.gmra.mrb[0].mxu0 %v149
      %v1652 = vpop.f32.mrb[0].mxu0
      %v1653 = vadd.f32 %v1560, %v1652
      %v1654 = vpop.f32.mrb[0].mxu0
      %1655 = vmatprep.mubr.f32.mxu0 %v408
      %1656 = vmatmul.mubr.f32.gmra.mrb[0].mxu0 %v150
      %v1657 = vpop.f32.mrb[0].mxu0
      %v1658 = vadd.f32 %v1560, %v1657
      %v1659 = vpop.f32.mrb[0].mxu0
      %1660 = vmatprep.mubr.f32.mxu0 %v409
      %1661 = vmatmul.mubr.f32.gmra.mrb[0].mxu0 %v151
      %v1662 = vpop.f32.mrb[0].mxu0
      %v1663 = vadd.f32 %v1560, %v1662
      %v1664 = vpop.f32.mrb[0].mxu0
      %1665 = vmatprep.mubr.f32.mxu0 %v410
      %1666 = vmatmul.mubr.f32.gmra.mrb[0].mxu0 %v152
      %v1667 = vpop.f32.mrb[0].mxu0
      %v1668 = vadd.f32 %v1560, %v1667
      %v1669 = vpop.f32.mrb[0].mxu0
      %1670 = vmatprep.mubr.f32.mxu0 %v411
      %1671 = vmatmul.mubr.f32.gmra.mrb[0].mxu0 %v153
      %v1672 = vpop.f32.mrb[0].mxu0
      %v1673 = vadd.f32 %v1560, %v1672
      %v1674 = vpop.f32.mrb[0].mxu0
      %1675 = vmatprep.mubr.f32.mxu0 %v412
      %1676 = vmatmul.mubr.f32.gmra.mrb[0].mxu0 %v154
      %v1677 = vpop.f32.mrb[0].mxu0
      %v1678 = vadd.f32 %v1560, %v1677
      %v1679 = vpop.f32.mrb[0].mxu0
      %1680 = vmatprep.mubr.f32.mxu0 %v413
      %1681 = vmatmul.mubr.f32.gmra.mrb[0].mxu0 %v155
      %v1682 = vpop.f32.mrb[0].mxu0
      %v1683 = vadd.f32 %v1560, %v1682
      %v1684 = vpop.f32.mrb[0].mxu0
      %1685 = vmatprep.mubr.f32.mxu0 %v414
      %1686 = vmatmul.mubr.f32.gmra.mrb[0].mxu0 %v156
      %v1687 = vpop.f32.mrb[0].mxu0
      %v1688 = vadd.f32 %v1560, %v1687
      %v1689 = vpop.f32.mrb[0].mxu0
      %1690 = vmatprep.mubr.f32.mxu0 %v415
      %1691 = vmatmul.mubr.f32.gmra.mrb[0].mxu0 %v157
      %v1692 = vpop.f32.mrb[0].mxu0
      %v1693 = vadd.f32 %v1560, %v1692
      %v1694 = vpop.f32.mrb[0].mxu0
      %1695 = vmatprep.mubr.f32.mxu0 %v416
      %1696 = vmatmul.mubr.f32.gmra.mrb[0].mxu0 %v158
      %v1697 = vpop.f32.mrb[0].mxu0
      %v1698 = vadd.f32 %v1560, %v1697
      %v1699 = vpop.f32.mrb[0].mxu0
      %1700 = vmatprep.mubr.f32.mxu0 %v417
      %1701 = vmatmul.mubr.f32.gmra.mrb[0].mxu0 %v159
      %v1702 = vpop.f32.mrb[0].mxu0
      %v1703 = vadd.f32 %v1560, %v1702
      %v1704 = vpop.f32.mrb[0].mxu0
      %1705 = vmatprep.mubr.f32.mxu0 %v418
      %1706 = vmatmul.mubr.f32.gmra.mrb[0].mxu0 %v160
      %v1707 = vpop.f32.mrb[0].mxu0
      %v1708 = vadd.f32 %v1560, %v1707
      %v1709 = vpop.f32.mrb[0].mxu0
      %1710 = vmatprep.mubr.f32.mxu0 %v419
      %1711 = vmatmul.mubr.f32.gmra.mrb[0].mxu0 %v161
      %v1712 = vpop.f32.mrb[0].mxu0
      %v1713 = vadd.f32 %v1560, %v1712
      %v1714 = vpop.f32.mrb[0].mxu0
      %1715 = vmatprep.mubr.f32.mxu0 %v420
      %1716 = vmatmul.mubr.f32.gmra.mrb[0].mxu0 %v162
      %v1717 = vpop.f32.mrb[0].mxu0
      %v1718 = vadd.f32 %v1560, %v1717
      %v1719 = vpop.f32.mrb[0].mxu0
      %1720 = vmatprep.mubr.f32.mxu0 %v421
      %1721 = vmatmul.mubr.f32.gmra.mrb[0].mxu0 %v163
      %v1722 = vpop.f32.mrb[0].mxu0
      %v1723 = vadd.f32 %v1560, %v1722
      %v1724 = vpop.f32.mrb[0].mxu0
      %1725 = vmatprep.mubr.f32.mxu0 %v422
      %1726 = vmatmul.mubr.f32.gmra.mrb[0].mxu0 %v164
      %v1727 = vpop.f32.mrb[0].mxu0
      %v1728 = vadd.f32 %v1560, %v1727
      %v1729 = vpop.f32.mrb[0].mxu0
      %1730 = vmatprep.mubr.f32.mxu0 %v423
      %1731 = vmatmul.mubr.f32.gmra.mrb[0].mxu0 %v165
      %v1732 = vpop.f32.mrb[0].mxu0
      %v1733 = vadd.f32 %v1560, %v1732
      %v1734 = vpop.f32.mrb[0].mxu0
      %1735 = vmatprep.mubr.f32.mxu0 %v424
      %1736 = vmatmul.mubr.f32.gmra.mrb[0].mxu0 %v166
      %v1737 = vpop.f32.mrb[0].mxu0
      %v1738 = vadd.f32 %v1560, %v1737
      %v1739 = vpop.f32.mrb[0].mxu0
      %1740 = vmatprep.mubr.f32.mxu0 %v425
      %1741 = vmatmul.mubr.f32.gmra.mrb[0].mxu0 %v167
      %v1742 = vpop.f32.mrb[0].mxu0
      %v1743 = vadd.f32 %v1560, %v1742
      %v1744 = vpop.f32.mrb[0].mxu0
      %1745 = vmatprep.mubr.f32.mxu0 %v426
      %1746 = vmatmul.mubr.f32.gmra.mrb[0].mxu0 %v168
      %v1747 = vpop.f32.mrb[0].mxu0
      %v1748 = vadd.f32 %v1560, %v1747
      %v1749 = vpop.f32.mrb[0].mxu0
      %1750 = vmatprep.mubr.f32.mxu0 %v427
      %1751 = vmatmul.mubr.f32.gmra.mrb[0].mxu0 %v169
      %v1752 = vpop.f32.mrb[0].mxu0
      %v1753 = vadd.f32 %v1560, %v1752
      %v1754 = vpop.f32.mrb[0].mxu0
      %1755 = vmatprep.mubr.f32.mxu0 %v428
      %1756 = vmatmul.mubr.f32.gmra.mrb[0].mxu0 %v170
      %v1757 = vpop.f32.mrb[0].mxu0
      %v1758 = vadd.f32 %v1560, %v1757
      %v1759 = vpop.f32.mrb[0].mxu0
      %1760 = vmatprep.mubr.f32.mxu0 %v429
      %1761 = vmatmul.mubr.f32.gmra.mrb[0].mxu0 %v171
      %v1762 = vpop.f32.mrb[0].mxu0
      %v1763 = vadd.f32 %v1560, %v1762
      %v1764 = vpop.f32.mrb[0].mxu0
      %1765 = vmatprep.mubr.f32.mxu0 %v430
      %1766 = vmatmul.mubr.f32.gmra.mrb[0].mxu0 %v172
      %v1767 = vpop.f32.mrb[0].mxu0
      %v1768 = vadd.f32 %v1560, %v1767
      %v1769 = vpop.f32.mrb[0].mxu0
      %1770 = vmatprep.mubr.f32.mxu0 %v431
      %1771 = vmatmul.mubr.f32.gmra.mrb[0].mxu0 %v173
      %v1772 = vpop.f32.mrb[0].mxu0
      %v1773 = vadd.f32 %v1560, %v1772
      %v1774 = vpop.f32.mrb[0].mxu0
      %1775 = vmatprep.mubr.f32.mxu0 %v432
      %1776 = vmatmul.mubr.f32.gmra.mrb[0].mxu0 %v174
      %v1777 = vpop.f32.mrb[0].mxu0
      %v1778 = vadd.f32 %v1560, %v1777
      %v1779 = vpop.f32.mrb[0].mxu0
      %1780 = vmatprep.mubr.f32.mxu0 %v433
      %1781 = vmatmul.mubr.f32.gmra.mrb[0].mxu0 %v175
      %v1782 = vpop.f32.mrb[0].mxu0
      %v1783 = vadd.f32 %v1560, %v1782
      %v1784 = vpop.f32.mrb[0].mxu0
      %1785 = vdwg.mxu0
      %1786 = vmatprep.subr.mxu0 0.0
      %1787 = vmatpush1.msra.mxu0 %v1427
      %1788 = vmatprep.subr.mxu0 0.0
      %1789 = vmatpush1.msra.mxu0 %v1428
      %1790 = vmatprep.subr.mxu0 0.0
      %1791 = vmatpush1.msra.mxu0 %v1429
      %1792 = vmatprep.subr.mxu0 0.0
      %1793 = vmatpush1.msra.mxu0 %v1430
      %1794 = vmatprep.subr.mxu0 0.0
      %1795 = vmatpush1.msra.mxu0 %v1431
      %1796 = vmatprep.subr.mxu0 0.0
      %1797 = vmatpush1.msra.mxu0 %v1432
      %1798 = vmatprep.subr.mxu0 0.0
      %1799 = vmatpush1.msra.mxu0 %v1433
      %1800 = vmatprep.subr.mxu0 0.0
      %1801 = vmatpush1.msra.mxu0 %v1434
      %1802 = vmatprep.subr.mxu0 0.0
      %1803 = vmatpush1.msra.mxu0 %v1435
      %1804 = vmatprep.subr.mxu0 0.0
      %1805 = vmatpush1.msra.mxu0 %v1436
      %1806 = vmatprep.subr.mxu0 0.0
      %1807 = vmatpush1.msra.mxu0 %v1437
      %1808 = vmatprep.subr.mxu0 0.0
      %1809 = vmatpush1.msra.mxu0 %v1438
      %1810 = vmatprep.subr.mxu0 0.0
      %1811 = vmatpush1.msra.mxu0 %v1439
      %1812 = vmatprep.subr.mxu0 0.0
      %1813 = vmatpush1.msra.mxu0 %v1440
      %1814 = vmatprep.subr.mxu0 0.0
      %1815 = vmatpush1.msra.mxu0 %v1441
      %1816 = vmatprep.subr.mxu0 0.0
      %1817 = vmatpush1.msra.mxu0 %v1442
      %1818 = vmatprep.subr.mxu0 0.0
      %1819 = vmatpush1.msra.mxu0 %v1443
      %1820 = vmatprep.subr.mxu0 0.0
      %1821 = vmatpush1.msra.mxu0 %v1444
      %1822 = vmatprep.subr.mxu0 0.0
      %1823 = vmatpush1.msra.mxu0 %v1445
      %1824 = vmatprep.subr.mxu0 0.0
      %1825 = vmatpush1.msra.mxu0 %v1446
      %1826 = vmatprep.subr.mxu0 0.0
      %1827 = vmatpush1.msra.mxu0 %v1447
      %1828 = vmatprep.subr.mxu0 0.0
      %1829 = vmatpush1.msra.mxu0 %v1448
      %1830 = vmatprep.subr.mxu0 0.0
      %1831 = vmatpush1.msra.mxu0 %v1449
      %1832 = vmatprep.subr.mxu0 0.0
      %1833 = vmatpush1.msra.mxu0 %v1450
      %1834 = vmatprep.subr.mxu0 0.0
      %1835 = vmatpush1.msra.mxu0 %v1451
      %1836 = vmatprep.subr.mxu0 0.0
      %1837 = vmatpush1.msra.mxu0 %v1452
      %1838 = vmatprep.subr.mxu0 0.0
      %1839 = vmatpush1.msra.mxu0 %v1453
      %1840 = vmatprep.subr.mxu0 0.0
      %1841 = vmatpush1.msra.mxu0 %v1454
      %1842 = vmatprep.subr.mxu0 0.0
      %1843 = vmatpush1.msra.mxu0 %v1455
      %1844 = vmatprep.subr.mxu0 0.0
      %1845 = vmatpush1.msra.mxu0 %v1456
      %1846 = vmatprep.subr.mxu0 0.0
      %1847 = vmatpush1.msra.mxu0 %v1457
      %1848 = vmatprep.subr.mxu0 0.0
      %1849 = vmatpush1.msra.mxu0 %v1458
      %1850 = vmatprep.mubr.f32.mxu0 %v723
      %1851 = vmatmul.mubr.f32.gmra.mrb[0].mxu0 %v595
      %v1852 = vpop.f32.mrb[0].mxu0
      %v1853 = vadd.f32 %v1628, %v1852
      %v1854 = vpop.f32.mrb[0].mxu0
      %1855 = vmatprep.mubr.f32.mxu0 %v724
      %1856 = vmatmul.mubr.f32.gmra.mrb[0].mxu0 %v596
      %v1857 = vpop.f32.mrb[0].mxu0
      %v1858 = vadd.f32 %v1633, %v1857
      %v1859 = vpop.f32.mrb[0].mxu0
      %1860 = vmatprep.mubr.f32.mxu0 %v725
      %1861 = vmatmul.mubr.f32.gmra.mrb[0].mxu0 %v597
      %v1862 = vpop.f32.mrb[0].mxu0
      %v1863 = vadd.f32 %v1638, %v1862
      %v1864 = vpop.f32.mrb[0].mxu0
      %1865 = vmatprep.mubr.f32.mxu0 %v726
      %1866 = vmatmul.mubr.f32.gmra.mrb[0].mxu0 %v598
      %v1867 = vpop.f32.mrb[0].mxu0
      %v1868 = vadd.f32 %v1643, %v1867
      %v1869 = vpop.f32.mrb[0].mxu0
      %1870 = vmatprep.mubr.f32.mxu0 %v727
      %1871 = vmatmul.mubr.f32.gmra.mrb[0].mxu0 %v599
      %v1872 = vpop.f32.mrb[0].mxu0
      %v1873 = vadd.f32 %v1648, %v1872
      %v1874 = vpop.f32.mrb[0].mxu0
      %1875 = vmatprep.mubr.f32.mxu0 %v728
      %1876 = vmatmul.mubr.f32.gmra.mrb[0].mxu0 %v600
      %v1877 = vpop.f32.mrb[0].mxu0
      %v1878 = vadd.f32 %v1653, %v1877
      %v1879 = vpop.f32.mrb[0].mxu0
      %1880 = vmatprep.mubr.f32.mxu0 %v729
      %1881 = vmatmul.mubr.f32.gmra.mrb[0].mxu0 %v601
      %v1882 = vpop.f32.mrb[0].mxu0
      %v1883 = vadd.f32 %v1658, %v1882
      %v1884 = vpop.f32.mrb[0].mxu0
      %1885 = vmatprep.mubr.f32.mxu0 %v730
      %1886 = vmatmul.mubr.f32.gmra.mrb[0].mxu0 %v602
      %v1887 = vpop.f32.mrb[0].mxu0
      %v1888 = vadd.f32 %v1663, %v1887
      %v1889 = vpop.f32.mrb[0].mxu0
      %1890 = vmatprep.mubr.f32.mxu0 %v731
      %1891 = vmatmul.mubr.f32.gmra.mrb[0].mxu0 %v603
      %v1892 = vpop.f32.mrb[0].mxu0
      %v1893 = vadd.f32 %v1668, %v1892
      %v1894 = vpop.f32.mrb[0].mxu0
      %1895 = vmatprep.mubr.f32.mxu0 %v732
      %1896 = vmatmul.mubr.f32.gmra.mrb[0].mxu0 %v604
      %v1897 = vpop.f32.mrb[0].mxu0
      %v1898 = vadd.f32 %v1673, %v1897
      %v1899 = vpop.f32.mrb[0].mxu0
      %1900 = vmatprep.mubr.f32.mxu0 %v733
      %1901 = vmatmul.mubr.f32.gmra.mrb[0].mxu0 %v605
      %v1902 = vpop.f32.mrb[0].mxu0
      %v1903 = vadd.f32 %v1678, %v1902
      %v1904 = vpop.f32.mrb[0].mxu0
      %1905 = vmatprep.mubr.f32.mxu0 %v734
      %1906 = vmatmul.mubr.f32.gmra.mrb[0].mxu0 %v606
      %v1907 = vpop.f32.mrb[0].mxu0
      %v1908 = vadd.f32 %v1683, %v1907
      %v1909 = vpop.f32.mrb[0].mxu0
      %1910 = vmatprep.mubr.f32.mxu0 %v735
      %1911 = vmatmul.mubr.f32.gmra.mrb[0].mxu0 %v607
      %v1912 = vpop.f32.mrb[0].mxu0
      %v1913 = vadd.f32 %v1688, %v1912
      %v1914 = vpop.f32.mrb[0].mxu0
      %1915 = vmatprep.mubr.f32.mxu0 %v736
      %1916 = vmatmul.mubr.f32.gmra.mrb[0].mxu0 %v608
      %v1917 = vpop.f32.mrb[0].mxu0
      %v1918 = vadd.f32 %v1693, %v1917
      %v1919 = vpop.f32.mrb[0].mxu0
      %1920 = vmatprep.mubr.f32.mxu0 %v737
      %1921 = vmatmul.mubr.f32.gmra.mrb[0].mxu0 %v609
      %v1922 = vpop.f32.mrb[0].mxu0
      %v1923 = vadd.f32 %v1698, %v1922
      %v1924 = vpop.f32.mrb[0].mxu0
      %1925 = vmatprep.mubr.f32.mxu0 %v738
      %1926 = vmatmul.mubr.f32.gmra.mrb[0].mxu0 %v610
      %v1927 = vpop.f32.mrb[0].mxu0
      %v1928 = vadd.f32 %v1703, %v1927
      %v1929 = vpop.f32.mrb[0].mxu0
      %1930 = vmatprep.mubr.f32.mxu0 %v739
      %1931 = vmatmul.mubr.f32.gmra.mrb[0].mxu0 %v611
      %v1932 = vpop.f32.mrb[0].mxu0
      %v1933 = vadd.f32 %v1708, %v1932
      %v1934 = vpop.f32.mrb[0].mxu0
      %1935 = vmatprep.mubr.f32.mxu0 %v740
      %1936 = vmatmul.mubr.f32.gmra.mrb[0].mxu0 %v612
      %v1937 = vpop.f32.mrb[0].mxu0
      %v1938 = vadd.f32 %v1713, %v1937
      %v1939 = vpop.f32.mrb[0].mxu0
      %1940 = vmatprep.mubr.f32.mxu0 %v741
      %1941 = vmatmul.mubr.f32.gmra.mrb[0].mxu0 %v613
      %v1942 = vpop.f32.mrb[0].mxu0
      %v1943 = vadd.f32 %v1718, %v1942
      %v1944 = vpop.f32.mrb[0].mxu0
      %1945 = vmatprep.mubr.f32.mxu0 %v742
      %1946 = vmatmul.mubr.f32.gmra.mrb[0].mxu0 %v614
      %v1947 = vpop.f32.mrb[0].mxu0
      %v1948 = vadd.f32 %v1723, %v1947
      %v1949 = vpop.f32.mrb[0].mxu0
      %1950 = vmatprep.mubr.f32.mxu0 %v743
      %1951 = vmatmul.mubr.f32.gmra.mrb[0].mxu0 %v615
      %v1952 = vpop.f32.mrb[0].mxu0
      %v1953 = vadd.f32 %v1728, %v1952
      %v1954 = vpop.f32.mrb[0].mxu0
      %1955 = vmatprep.mubr.f32.mxu0 %v744
      %1956 = vmatmul.mubr.f32.gmra.mrb[0].mxu0 %v616
      %v1957 = vpop.f32.mrb[0].mxu0
      %v1958 = vadd.f32 %v1733, %v1957
      %v1959 = vpop.f32.mrb[0].mxu0
      %1960 = vmatprep.mubr.f32.mxu0 %v745
      %1961 = vmatmul.mubr.f32.gmra.mrb[0].mxu0 %v617
      %v1962 = vpop.f32.mrb[0].mxu0
      %v1963 = vadd.f32 %v1738, %v1962
      %v1964 = vpop.f32.mrb[0].mxu0
      %1965 = vmatprep.mubr.f32.mxu0 %v746
      %1966 = vmatmul.mubr.f32.gmra.mrb[0].mxu0 %v618
      %v1967 = vpop.f32.mrb[0].mxu0
      %v1968 = vadd.f32 %v1743, %v1967
      %v1969 = vpop.f32.mrb[0].mxu0
      %1970 = vmatprep.mubr.f32.mxu0 %v747
      %1971 = vmatmul.mubr.f32.gmra.mrb[0].mxu0 %v619
      %v1972 = vpop.f32.mrb[0].mxu0
      %v1973 = vadd.f32 %v1748, %v1972
      %v1974 = vpop.f32.mrb[0].mxu0
      %1975 = vmatprep.mubr.f32.mxu0 %v748
      %1976 = vmatmul.mubr.f32.gmra.mrb[0].mxu0 %v620
      %v1977 = vpop.f32.mrb[0].mxu0
      %v1978 = vadd.f32 %v1753, %v1977
      %v1979 = vpop.f32.mrb[0].mxu0
      %1980 = vmatprep.mubr.f32.mxu0 %v749
      %1981 = vmatmul.mubr.f32.gmra.mrb[0].mxu0 %v621
      %v1982 = vpop.f32.mrb[0].mxu0
      %v1983 = vadd.f32 %v1758, %v1982
      %v1984 = vpop.f32.mrb[0].mxu0
      %1985 = vmatprep.mubr.f32.mxu0 %v750
      %1986 = vmatmul.mubr.f32.gmra.mrb[0].mxu0 %v622
      %v1987 = vpop.f32.mrb[0].mxu0
      %v1988 = vadd.f32 %v1763, %v1987
      %v1989 = vpop.f32.mrb[0].mxu0
      %1990 = vmatprep.mubr.f32.mxu0 %v751
      %1991 = vmatmul.mubr.f32.gmra.mrb[0].mxu0 %v623
      %v1992 = vpop.f32.mrb[0].mxu0
      %v1993 = vadd.f32 %v1768, %v1992
      %v1994 = vpop.f32.mrb[0].mxu0
      %1995 = vmatprep.mubr.f32.mxu0 %v752
      %1996 = vmatmul.mubr.f32.gmra.mrb[0].mxu0 %v624
      %v1997 = vpop.f32.mrb[0].mxu0
      %v1998 = vadd.f32 %v1773, %v1997
      %v1999 = vpop.f32.mrb[0].mxu0
      %2000 = vmatprep.mubr.f32.mxu0 %v753
      %2001 = vmatmul.mubr.f32.gmra.mrb[0].mxu0 %v625
      %v2002 = vpop.f32.mrb[0].mxu0
      %v2003 = vadd.f32 %v1778, %v2002
      %v2004 = vpop.f32.mrb[0].mxu0
      %2005 = vmatprep.mubr.f32.mxu0 %v754
      %2006 = vmatmul.mubr.f32.gmra.mrb[0].mxu0 %v626
      %v2007 = vpop.f32.mrb[0].mxu0
      %v2008 = vadd.f32 %v1783, %v2007
      %v2009 = vpop.f32.mrb[0].mxu0
      %2010 = vdwg.mxu0
      %2011 = vmatprep.subr.mxu0 0.0
      %2012 = vmatpush1.msra.mxu0 %v1459
      %2013 = vmatprep.subr.mxu0 0.0
      %2014 = vmatpush1.msra.mxu0 %v1460
      %2015 = vmatprep.subr.mxu0 0.0
      %2016 = vmatpush1.msra.mxu0 %v1461
      %2017 = vmatprep.subr.mxu0 0.0
      %2018 = vmatpush1.msra.mxu0 %v1462
      %2019 = vmatprep.subr.mxu0 0.0
      %2020 = vmatpush1.msra.mxu0 %v1463
      %2021 = vmatprep.subr.mxu0 0.0
      %2022 = vmatpush1.msra.mxu0 %v1464
      %2023 = vmatprep.subr.mxu0 0.0
      %2024 = vmatpush1.msra.mxu0 %v1465
      %2025 = vmatprep.subr.mxu0 0.0
      %2026 = vmatpush1.msra.mxu0 %v1466
      %2027 = vmatprep.subr.mxu0 0.0
      %2028 = vmatpush1.msra.mxu0 %v1467
      %2029 = vmatprep.subr.mxu0 0.0
      %2030 = vmatpush1.msra.mxu0 %v1468
      %2031 = vmatprep.subr.mxu0 0.0
      %2032 = vmatpush1.msra.mxu0 %v1469
      %2033 = vmatprep.subr.mxu0 0.0
      %2034 = vmatpush1.msra.mxu0 %v1470
      %2035 = vmatprep.subr.mxu0 0.0
      %2036 = vmatpush1.msra.mxu0 %v1471
      %2037 = vmatprep.subr.mxu0 0.0
      %2038 = vmatpush1.msra.mxu0 %v1472
      %2039 = vmatprep.subr.mxu0 0.0
      %2040 = vmatpush1.msra.mxu0 %v1473
      %2041 = vmatprep.subr.mxu0 0.0
      %2042 = vmatpush1.msra.mxu0 %v1474
      %2043 = vmatprep.subr.mxu0 0.0
      %2044 = vmatpush1.msra.mxu0 %v1475
      %2045 = vmatprep.subr.mxu0 0.0
      %2046 = vmatpush1.msra.mxu0 %v1476
      %2047 = vmatprep.subr.mxu0 0.0
      %2048 = vmatpush1.msra.mxu0 %v1477
      %2049 = vmatprep.subr.mxu0 0.0
      %2050 = vmatpush1.msra.mxu0 %v1478
      %2051 = vmatprep.subr.mxu0 0.0
      %2052 = vmatpush1.msra.mxu0 %v1479
      %2053 = vmatprep.subr.mxu0 0.0
      %2054 = vmatpush1.msra.mxu0 %v1480
      %2055 = vmatprep.subr.mxu0 0.0
      %2056 = vmatpush1.msra.mxu0 %v1481
      %2057 = vmatprep.subr.mxu0 0.0
      %2058 = vmatpush1.msra.mxu0 %v1482
      %2059 = vmatprep.subr.mxu0 0.0
      %2060 = vmatpush1.msra.mxu0 %v1483
      %2061 = vmatprep.subr.mxu0 0.0
      %2062 = vmatpush1.msra.mxu0 %v1484
      %2063 = vmatprep.subr.mxu0 0.0
      %2064 = vmatpush1.msra.mxu0 %v1485
      %2065 = vmatprep.subr.mxu0 0.0
      %2066 = vmatpush1.msra.mxu0 %v1486
      %2067 = vmatprep.subr.mxu0 0.0
      %2068 = vmatpush1.msra.mxu0 %v1487
      %2069 = vmatprep.subr.mxu0 0.0
      %2070 = vmatpush1.msra.mxu0 %v1488
      %2071 = vmatprep.subr.mxu0 0.0
      %2072 = vmatpush1.msra.mxu0 %v1489
      %2073 = vmatprep.subr.mxu0 0.0
      %2074 = vmatpush1.msra.mxu0 %v1490
      %2075 = vmatprep.mubr.f32.mxu0 %v979
      %2076 = vmatmul.mubr.f32.gmra.mrb[0].mxu0 %v851
      %v2077 = vpop.f32.mrb[0].mxu0
      %v2078 = vadd.f32 %v1853, %v2077
      %v2079 = vpop.f32.mrb[0].mxu0
      %2080 = vmatprep.mubr.f32.mxu0 %v980
      %2081 = vmatmul.mubr.f32.gmra.mrb[0].mxu0 %v852
      %v2082 = vpop.f32.mrb[0].mxu0
      %v2083 = vadd.f32 %v1858, %v2082
      %v2084 = vpop.f32.mrb[0].mxu0
      %2085 = vmatprep.mubr.f32.mxu0 %v981
      %2086 = vmatmul.mubr.f32.gmra.mrb[0].mxu0 %v853
      %v2087 = vpop.f32.mrb[0].mxu0
      %v2088 = vadd.f32 %v1863, %v2087
      %v2089 = vpop.f32.mrb[0].mxu0
      %2090 = vmatprep.mubr.f32.mxu0 %v982
      %2091 = vmatmul.mubr.f32.gmra.mrb[0].mxu0 %v854
      %v2092 = vpop.f32.mrb[0].mxu0
      %v2093 = vadd.f32 %v1868, %v2092
      %v2094 = vpop.f32.mrb[0].mxu0
      %2095 = vmatprep.mubr.f32.mxu0 %v983
      %2096 = vmatmul.mubr.f32.gmra.mrb[0].mxu0 %v855
      %v2097 = vpop.f32.mrb[0].mxu0
      %v2098 = vadd.f32 %v1873, %v2097
      %v2099 = vpop.f32.mrb[0].mxu0
      %2100 = vmatprep.mubr.f32.mxu0 %v984
      %2101 = vmatmul.mubr.f32.gmra.mrb[0].mxu0 %v856
      %v2102 = vpop.f32.mrb[0].mxu0
      %v2103 = vadd.f32 %v1878, %v2102
      %v2104 = vpop.f32.mrb[0].mxu0
      %2105 = vmatprep.mubr.f32.mxu0 %v985
      %2106 = vmatmul.mubr.f32.gmra.mrb[0].mxu0 %v857
      %v2107 = vpop.f32.mrb[0].mxu0
      %v2108 = vadd.f32 %v1883, %v2107
      %v2109 = vpop.f32.mrb[0].mxu0
      %2110 = vmatprep.mubr.f32.mxu0 %v986
      %2111 = vmatmul.mubr.f32.gmra.mrb[0].mxu0 %v858
      %v2112 = vpop.f32.mrb[0].mxu0
      %v2113 = vadd.f32 %v1888, %v2112
      %v2114 = vpop.f32.mrb[0].mxu0
      %2115 = vmatprep.mubr.f32.mxu0 %v987
      %2116 = vmatmul.mubr.f32.gmra.mrb[0].mxu0 %v859
      %v2117 = vpop.f32.mrb[0].mxu0
      %v2118 = vadd.f32 %v1893, %v2117
      %v2119 = vpop.f32.mrb[0].mxu0
      %2120 = vmatprep.mubr.f32.mxu0 %v988
      %2121 = vmatmul.mubr.f32.gmra.mrb[0].mxu0 %v860
      %v2122 = vpop.f32.mrb[0].mxu0
      %v2123 = vadd.f32 %v1898, %v2122
      %v2124 = vpop.f32.mrb[0].mxu0
      %2125 = vmatprep.mubr.f32.mxu0 %v989
      %2126 = vmatmul.mubr.f32.gmra.mrb[0].mxu0 %v861
      %v2127 = vpop.f32.mrb[0].mxu0
      %v2128 = vadd.f32 %v1903, %v2127
      %v2129 = vpop.f32.mrb[0].mxu0
      %2130 = vmatprep.mubr.f32.mxu0 %v990
      %2131 = vmatmul.mubr.f32.gmra.mrb[0].mxu0 %v862
      %v2132 = vpop.f32.mrb[0].mxu0
      %v2133 = vadd.f32 %v1908, %v2132
      %v2134 = vpop.f32.mrb[0].mxu0
      %2135 = vmatprep.mubr.f32.mxu0 %v991
      %2136 = vmatmul.mubr.f32.gmra.mrb[0].mxu0 %v863
      %v2137 = vpop.f32.mrb[0].mxu0
      %v2138 = vadd.f32 %v1913, %v2137
      %v2139 = vpop.f32.mrb[0].mxu0
      %2140 = vmatprep.mubr.f32.mxu0 %v992
      %2141 = vmatmul.mubr.f32.gmra.mrb[0].mxu0 %v864
      %v2142 = vpop.f32.mrb[0].mxu0
      %v2143 = vadd.f32 %v1918, %v2142
      %v2144 = vpop.f32.mrb[0].mxu0
      %2145 = vmatprep.mubr.f32.mxu0 %v993
      %2146 = vmatmul.mubr.f32.gmra.mrb[0].mxu0 %v865
      %v2147 = vpop.f32.mrb[0].mxu0
      %v2148 = vadd.f32 %v1923, %v2147
      %v2149 = vpop.f32.mrb[0].mxu0
      %2150 = vmatprep.mubr.f32.mxu0 %v994
      %2151 = vmatmul.mubr.f32.gmra.mrb[0].mxu0 %v866
      %v2152 = vpop.f32.mrb[0].mxu0
      %v2153 = vadd.f32 %v1928, %v2152
      %v2154 = vpop.f32.mrb[0].mxu0
      %2155 = vmatprep.mubr.f32.mxu0 %v995
      %2156 = vmatmul.mubr.f32.gmra.mrb[0].mxu0 %v867
      %v2157 = vpop.f32.mrb[0].mxu0
      %v2158 = vadd.f32 %v1933, %v2157
      %v2159 = vpop.f32.mrb[0].mxu0
      %2160 = vmatprep.mubr.f32.mxu0 %v996
      %2161 = vmatmul.mubr.f32.gmra.mrb[0].mxu0 %v868
      %v2162 = vpop.f32.mrb[0].mxu0
      %v2163 = vadd.f32 %v1938, %v2162
      %v2164 = vpop.f32.mrb[0].mxu0
      %2165 = vmatprep.mubr.f32.mxu0 %v997
      %2166 = vmatmul.mubr.f32.gmra.mrb[0].mxu0 %v869
      %v2167 = vpop.f32.mrb[0].mxu0
      %v2168 = vadd.f32 %v1943, %v2167
      %v2169 = vpop.f32.mrb[0].mxu0
      %2170 = vmatprep.mubr.f32.mxu0 %v998
      %2171 = vmatmul.mubr.f32.gmra.mrb[0].mxu0 %v870
      %v2172 = vpop.f32.mrb[0].mxu0
      %v2173 = vadd.f32 %v1948, %v2172
      %v2174 = vpop.f32.mrb[0].mxu0
      %2175 = vmatprep.mubr.f32.mxu0 %v999
      %2176 = vmatmul.mubr.f32.gmra.mrb[0].mxu0 %v871
      %v2177 = vpop.f32.mrb[0].mxu0
      %v2178 = vadd.f32 %v1953, %v2177
      %v2179 = vpop.f32.mrb[0].mxu0
      %2180 = vmatprep.mubr.f32.mxu0 %v1000
      %2181 = vmatmul.mubr.f32.gmra.mrb[0].mxu0 %v872
      %v2182 = vpop.f32.mrb[0].mxu0
      %v2183 = vadd.f32 %v1958, %v2182
      %v2184 = vpop.f32.mrb[0].mxu0
      %2185 = vmatprep.mubr.f32.mxu0 %v1001
      %2186 = vmatmul.mubr.f32.gmra.mrb[0].mxu0 %v873
      %v2187 = vpop.f32.mrb[0].mxu0
      %v2188 = vadd.f32 %v1963, %v2187
      %v2189 = vpop.f32.mrb[0].mxu0
      %2190 = vmatprep.mubr.f32.mxu0 %v1002
      %2191 = vmatmul.mubr.f32.gmra.mrb[0].mxu0 %v874
      %v2192 = vpop.f32.mrb[0].mxu0
      %v2193 = vadd.f32 %v1968, %v2192
      %v2194 = vpop.f32.mrb[0].mxu0
      %2195 = vmatprep.mubr.f32.mxu0 %v1003
      %2196 = vmatmul.mubr.f32.gmra.mrb[0].mxu0 %v875
      %v2197 = vpop.f32.mrb[0].mxu0
      %v2198 = vadd.f32 %v1973, %v2197
      %v2199 = vpop.f32.mrb[0].mxu0
      %2200 = vmatprep.mubr.f32.mxu0 %v1004
      %2201 = vmatmul.mubr.f32.gmra.mrb[0].mxu0 %v876
      %v2202 = vpop.f32.mrb[0].mxu0
      %v2203 = vadd.f32 %v1978, %v2202
      %v2204 = vpop.f32.mrb[0].mxu0
      %2205 = vmatprep.mubr.f32.mxu0 %v1005
      %2206 = vmatmul.mubr.f32.gmra.mrb[0].mxu0 %v877
      %v2207 = vpop.f32.mrb[0].mxu0
      %v2208 = vadd.f32 %v1983, %v2207
      %v2209 = vpop.f32.mrb[0].mxu0
      %2210 = vmatprep.mubr.f32.mxu0 %v1006
      %2211 = vmatmul.mubr.f32.gmra.mrb[0].mxu0 %v878
      %v2212 = vpop.f32.mrb[0].mxu0
      %v2213 = vadd.f32 %v1988, %v2212
      %v2214 = vpop.f32.mrb[0].mxu0
      %2215 = vmatprep.mubr.f32.mxu0 %v1007
      %2216 = vmatmul.mubr.f32.gmra.mrb[0].mxu0 %v879
      %v2217 = vpop.f32.mrb[0].mxu0
      %v2218 = vadd.f32 %v1993, %v2217
      %v2219 = vpop.f32.mrb[0].mxu0
      %2220 = vmatprep.mubr.f32.mxu0 %v1008
      %2221 = vmatmul.mubr.f32.gmra.mrb[0].mxu0 %v880
      %v2222 = vpop.f32.mrb[0].mxu0
      %v2223 = vadd.f32 %v1998, %v2222
      %v2224 = vpop.f32.mrb[0].mxu0
      %2225 = vmatprep.mubr.f32.mxu0 %v1009
      %2226 = vmatmul.mubr.f32.gmra.mrb[0].mxu0 %v881
      %v2227 = vpop.f32.mrb[0].mxu0
      %v2228 = vadd.f32 %v2003, %v2227
      %v2229 = vpop.f32.mrb[0].mxu0
      %2230 = vmatprep.mubr.f32.mxu0 %v1010
      %2231 = vmatmul.mubr.f32.gmra.mrb[0].mxu0 %v882
      %v2232 = vpop.f32.mrb[0].mxu0
      %v2233 = vadd.f32 %v2008, %v2232
      %v2234 = vpop.f32.mrb[0].mxu0
      %2235 = vdwg.mxu0
      %2236 = vmatprep.subr.mxu0 0.0
      %2237 = vmatpush1.msra.mxu0 %v1491
      %2238 = vmatprep.subr.mxu0 0.0
      %2239 = vmatpush1.msra.mxu0 %v1492
      %2240 = vmatprep.subr.mxu0 0.0
      %2241 = vmatpush1.msra.mxu0 %v1493
      %2242 = vmatprep.subr.mxu0 0.0
      %2243 = vmatpush1.msra.mxu0 %v1494
      %2244 = vmatprep.subr.mxu0 0.0
      %2245 = vmatpush1.msra.mxu0 %v1495
      %2246 = vmatprep.subr.mxu0 0.0
      %2247 = vmatpush1.msra.mxu0 %v1496
      %2248 = vmatprep.subr.mxu0 0.0
      %2249 = vmatpush1.msra.mxu0 %v1497
      %2250 = vmatprep.subr.mxu0 0.0
      %2251 = vmatpush1.msra.mxu0 %v1498
      %2252 = vmatprep.subr.mxu0 0.0
      %2253 = vmatpush1.msra.mxu0 %v1499
      %2254 = vmatprep.subr.mxu0 0.0
      %2255 = vmatpush1.msra.mxu0 %v1500
      %2256 = vmatprep.subr.mxu0 0.0
      %2257 = vmatpush1.msra.mxu0 %v1501
      %2258 = vmatprep.subr.mxu0 0.0
      %2259 = vmatpush1.msra.mxu0 %v1502
      %2260 = vmatprep.subr.mxu0 0.0
      %2261 = vmatpush1.msra.mxu0 %v1503
      %2262 = vmatprep.subr.mxu0 0.0
      %2263 = vmatpush1.msra.mxu0 %v1504
      %2264 = vmatprep.subr.mxu0 0.0
      %2265 = vmatpush1.msra.mxu0 %v1505
      %2266 = vmatprep.subr.mxu0 0.0
      %2267 = vmatpush1.msra.mxu0 %v1506
      %2268 = vmatprep.subr.mxu0 0.0
      %2269 = vmatpush1.msra.mxu0 %v1507
      %2270 = vmatprep.subr.mxu0 0.0
      %2271 = vmatpush1.msra.mxu0 %v1508
      %2272 = vmatprep.subr.mxu0 0.0
      %2273 = vmatpush1.msra.mxu0 %v1509
      %2274 = vmatprep.subr.mxu0 0.0
      %2275 = vmatpush1.msra.mxu0 %v1510
      %2276 = vmatprep.subr.mxu0 0.0
      %2277 = vmatpush1.msra.mxu0 %v1511
      %2278 = vmatprep.subr.mxu0 0.0
      %2279 = vmatpush1.msra.mxu0 %v1512
      %2280 = vmatprep.subr.mxu0 0.0
      %2281 = vmatpush1.msra.mxu0 %v1513
      %2282 = vmatprep.subr.mxu0 0.0
      %2283 = vmatpush1.msra.mxu0 %v1514
      %2284 = vmatprep.subr.mxu0 0.0
      %2285 = vmatpush1.msra.mxu0 %v1515
      %2286 = vmatprep.subr.mxu0 0.0
      %2287 = vmatpush1.msra.mxu0 %v1516
      %2288 = vmatprep.subr.mxu0 0.0
      %2289 = vmatpush1.msra.mxu0 %v1517
      %2290 = vmatprep.subr.mxu0 0.0
      %2291 = vmatpush1.msra.mxu0 %v1518
      %2292 = vmatprep.subr.mxu0 0.0
      %2293 = vmatpush1.msra.mxu0 %v1519
      %2294 = vmatprep.subr.mxu0 0.0
      %2295 = vmatpush1.msra.mxu0 %v1520
      %2296 = vmatprep.subr.mxu0 0.0
      %2297 = vmatpush1.msra.mxu0 %v1521
      %2298 = vmatprep.subr.mxu0 0.0
      %2299 = vmatpush1.msra.mxu0 %v1522
      %2300 = vmatprep.mubr.f32.mxu0 %v1235
      %2301 = vmatmul.mubr.f32.gmra.mrb[0].mxu0 %v1107
      %v2302 = vpop.f32.mrb[0].mxu0
      %v2303 = vadd.f32 %v2078, %v2302
      %v2304 = vpop.f32.mrb[0].mxu0
      %2305 = vmatprep.mubr.f32.mxu0 %v1236
      %2306 = vmatmul.mubr.f32.gmra.mrb[0].mxu0 %v1108
      %v2307 = vpop.f32.mrb[0].mxu0
      %v2308 = vadd.f32 %v2083, %v2307
      %v2309 = vpop.f32.mrb[0].mxu0
      %2310 = vmatprep.mubr.f32.mxu0 %v1237
      %2311 = vmatmul.mubr.f32.gmra.mrb[0].mxu0 %v1109
      %v2312 = vpop.f32.mrb[0].mxu0
      %v2313 = vadd.f32 %v2088, %v2312
      %v2314 = vpop.f32.mrb[0].mxu0
      %2315 = vmatprep.mubr.f32.mxu0 %v1238
      %2316 = vmatmul.mubr.f32.gmra.mrb[0].mxu0 %v1110
      %v2317 = vpop.f32.mrb[0].mxu0
      %v2318 = vadd.f32 %v2093, %v2317
      %v2319 = vpop.f32.mrb[0].mxu0
      %2320 = vmatprep.mubr.f32.mxu0 %v1239
      %2321 = vmatmul.mubr.f32.gmra.mrb[0].mxu0 %v1111
      %v2322 = vpop.f32.mrb[0].mxu0
      %v2323 = vadd.f32 %v2098, %v2322
      %v2324 = vpop.f32.mrb[0].mxu0
      %2325 = vmatprep.mubr.f32.mxu0 %v1240
      %2326 = vmatmul.mubr.f32.gmra.mrb[0].mxu0 %v1112
      %v2327 = vpop.f32.mrb[0].mxu0
      %v2328 = vadd.f32 %v2103, %v2327
      %v2329 = vpop.f32.mrb[0].mxu0
      %2330 = vmatprep.mubr.f32.mxu0 %v1241
      %2331 = vmatmul.mubr.f32.gmra.mrb[0].mxu0 %v1113
      %v2332 = vpop.f32.mrb[0].mxu0
      %v2333 = vadd.f32 %v2108, %v2332
      %v2334 = vpop.f32.mrb[0].mxu0
      %2335 = vmatprep.mubr.f32.mxu0 %v1242
      %2336 = vmatmul.mubr.f32.gmra.mrb[0].mxu0 %v1114
      %v2337 = vpop.f32.mrb[0].mxu0
      %v2338 = vadd.f32 %v2113, %v2337
      %v2339 = vpop.f32.mrb[0].mxu0
      %2340 = vmatprep.mubr.f32.mxu0 %v1243
      %2341 = vmatmul.mubr.f32.gmra.mrb[0].mxu0 %v1115
      %v2342 = vpop.f32.mrb[0].mxu0
      %v2343 = vadd.f32 %v2118, %v2342
      %v2344 = vpop.f32.mrb[0].mxu0
      %2345 = vmatprep.mubr.f32.mxu0 %v1244
      %2346 = vmatmul.mubr.f32.gmra.mrb[0].mxu0 %v1116
      %v2347 = vpop.f32.mrb[0].mxu0
      %v2348 = vadd.f32 %v2123, %v2347
      %v2349 = vpop.f32.mrb[0].mxu0
      %2350 = vmatprep.mubr.f32.mxu0 %v1245
      %2351 = vmatmul.mubr.f32.gmra.mrb[0].mxu0 %v1117
      %v2352 = vpop.f32.mrb[0].mxu0
      %v2353 = vadd.f32 %v2128, %v2352
      %v2354 = vpop.f32.mrb[0].mxu0
      %2355 = vmatprep.mubr.f32.mxu0 %v1246
      %2356 = vmatmul.mubr.f32.gmra.mrb[0].mxu0 %v1118
      %v2357 = vpop.f32.mrb[0].mxu0
      %v2358 = vadd.f32 %v2133, %v2357
      %v2359 = vpop.f32.mrb[0].mxu0
      %2360 = vmatprep.mubr.f32.mxu0 %v1247
      %2361 = vmatmul.mubr.f32.gmra.mrb[0].mxu0 %v1119
      %v2362 = vpop.f32.mrb[0].mxu0
      %v2363 = vadd.f32 %v2138, %v2362
      %v2364 = vpop.f32.mrb[0].mxu0
      %2365 = vmatprep.mubr.f32.mxu0 %v1248
      %2366 = vmatmul.mubr.f32.gmra.mrb[0].mxu0 %v1120
      %v2367 = vpop.f32.mrb[0].mxu0
      %v2368 = vadd.f32 %v2143, %v2367
      %v2369 = vpop.f32.mrb[0].mxu0
      %2370 = vmatprep.mubr.f32.mxu0 %v1249
      %2371 = vmatmul.mubr.f32.gmra.mrb[0].mxu0 %v1121
      %v2372 = vpop.f32.mrb[0].mxu0
      %v2373 = vadd.f32 %v2148, %v2372
      %v2374 = vpop.f32.mrb[0].mxu0
      %2375 = vmatprep.mubr.f32.mxu0 %v1250
      %2376 = vmatmul.mubr.f32.gmra.mrb[0].mxu0 %v1122
      %v2377 = vpop.f32.mrb[0].mxu0
      %v2378 = vadd.f32 %v2153, %v2377
      %v2379 = vpop.f32.mrb[0].mxu0
      %2380 = vmatprep.mubr.f32.mxu0 %v1251
      %2381 = vmatmul.mubr.f32.gmra.mrb[0].mxu0 %v1123
      %v2382 = vpop.f32.mrb[0].mxu0
      %v2383 = vadd.f32 %v2158, %v2382
      %v2384 = vpop.f32.mrb[0].mxu0
      %2385 = vmatprep.mubr.f32.mxu0 %v1252
      %2386 = vmatmul.mubr.f32.gmra.mrb[0].mxu0 %v1124
      %v2387 = vpop.f32.mrb[0].mxu0
      %v2388 = vadd.f32 %v2163, %v2387
      %v2389 = vpop.f32.mrb[0].mxu0
      %2390 = vmatprep.mubr.f32.mxu0 %v1253
      %2391 = vmatmul.mubr.f32.gmra.mrb[0].mxu0 %v1125
      %v2392 = vpop.f32.mrb[0].mxu0
      %v2393 = vadd.f32 %v2168, %v2392
      %v2394 = vpop.f32.mrb[0].mxu0
      %2395 = vmatprep.mubr.f32.mxu0 %v1254
      %2396 = vmatmul.mubr.f32.gmra.mrb[0].mxu0 %v1126
      %v2397 = vpop.f32.mrb[0].mxu0
      %v2398 = vadd.f32 %v2173, %v2397
      %v2399 = vpop.f32.mrb[0].mxu0
      %2400 = vmatprep.mubr.f32.mxu0 %v1255
      %2401 = vmatmul.mubr.f32.gmra.mrb[0].mxu0 %v1127
      %v2402 = vpop.f32.mrb[0].mxu0
      %v2403 = vadd.f32 %v2178, %v2402
      %v2404 = vpop.f32.mrb[0].mxu0
      %2405 = vmatprep.mubr.f32.mxu0 %v1256
      %2406 = vmatmul.mubr.f32.gmra.mrb[0].mxu0 %v1128
      %v2407 = vpop.f32.mrb[0].mxu0
      %v2408 = vadd.f32 %v2183, %v2407
      %v2409 = vpop.f32.mrb[0].mxu0
      %2410 = vmatprep.mubr.f32.mxu0 %v1257
      %2411 = vmatmul.mubr.f32.gmra.mrb[0].mxu0 %v1129
      %v2412 = vpop.f32.mrb[0].mxu0
      %v2413 = vadd.f32 %v2188, %v2412
      %v2414 = vpop.f32.mrb[0].mxu0
      %2415 = vmatprep.mubr.f32.mxu0 %v1258
      %2416 = vmatmul.mubr.f32.gmra.mrb[0].mxu0 %v1130
      %v2417 = vpop.f32.mrb[0].mxu0
      %v2418 = vadd.f32 %v2193, %v2417
      %v2419 = vpop.f32.mrb[0].mxu0
      %2420 = vmatprep.mubr.f32.mxu0 %v1259
      %2421 = vmatmul.mubr.f32.gmra.mrb[0].mxu0 %v1131
      %v2422 = vpop.f32.mrb[0].mxu0
      %v2423 = vadd.f32 %v2198, %v2422
      %v2424 = vpop.f32.mrb[0].mxu0
      %2425 = vmatprep.mubr.f32.mxu0 %v1260
      %2426 = vmatmul.mubr.f32.gmra.mrb[0].mxu0 %v1132
      %v2427 = vpop.f32.mrb[0].mxu0
      %v2428 = vadd.f32 %v2203, %v2427
      %v2429 = vpop.f32.mrb[0].mxu0
      %2430 = vmatprep.mubr.f32.mxu0 %v1261
      %2431 = vmatmul.mubr.f32.gmra.mrb[0].mxu0 %v1133
      %v2432 = vpop.f32.mrb[0].mxu0
      %v2433 = vadd.f32 %v2208, %v2432
      %v2434 = vpop.f32.mrb[0].mxu0
      %2435 = vmatprep.mubr.f32.mxu0 %v1262
      %2436 = vmatmul.mubr.f32.gmra.mrb[0].mxu0 %v1134
      %v2437 = vpop.f32.mrb[0].mxu0
      %v2438 = vadd.f32 %v2213, %v2437
      %v2439 = vpop.f32.mrb[0].mxu0
      %2440 = vmatprep.mubr.f32.mxu0 %v1263
      %2441 = vmatmul.mubr.f32.gmra.mrb[0].mxu0 %v1135
      %v2442 = vpop.f32.mrb[0].mxu0
      %v2443 = vadd.f32 %v2218, %v2442
      %v2444 = vpop.f32.mrb[0].mxu0
      %2445 = vmatprep.mubr.f32.mxu0 %v1264
      %2446 = vmatmul.mubr.f32.gmra.mrb[0].mxu0 %v1136
      %v2447 = vpop.f32.mrb[0].mxu0
      %v2448 = vadd.f32 %v2223, %v2447
      %v2449 = vpop.f32.mrb[0].mxu0
      %2450 = vmatprep.mubr.f32.mxu0 %v1265
      %2451 = vmatmul.mubr.f32.gmra.mrb[0].mxu0 %v1137
      %v2452 = vpop.f32.mrb[0].mxu0
      %v2453 = vadd.f32 %v2228, %v2452
      %v2454 = vpop.f32.mrb[0].mxu0
      %2455 = vmatprep.mubr.f32.mxu0 %v1266
      %2456 = vmatmul.mubr.f32.gmra.mrb[0].mxu0 %v1138
      %v2457 = vpop.f32.mrb[0].mxu0
      %v2458 = vadd.f32 %v2233, %v2457
      %v2459 = vpop.f32.mrb[0].mxu0
      %2460 = vdwg.mxu0
      %2461 = vmatprep.subr.mxu0 0.0
      %2462 = vmatpush1.msra.mxu0 %v1523
      %2463 = vmatprep.subr.mxu0 0.0
      %2464 = vmatpush1.msra.mxu0 %v1524
      %2465 = vmatprep.subr.mxu0 0.0
      %2466 = vmatpush1.msra.mxu0 %v1525
      %2467 = vmatprep.subr.mxu0 0.0
      %2468 = vmatpush1.msra.mxu0 %v1526
      %2469 = vmatprep.subr.mxu0 0.0
      %2470 = vmatpush1.msra.mxu0 %v1527
      %2471 = vmatprep.subr.mxu0 0.0
      %2472 = vmatpush1.msra.mxu0 %v1528
      %2473 = vmatprep.subr.mxu0 0.0
      %2474 = vmatpush1.msra.mxu0 %v1529
      %2475 = vmatprep.subr.mxu0 0.0
      %2476 = vmatpush1.msra.mxu0 %v1530
      %2477 = vmatprep.subr.mxu0 0.0
      %2478 = vmatpush1.msra.mxu0 %v1531
      %2479 = vmatprep.subr.mxu0 0.0
      %2480 = vmatpush1.msra.mxu0 %v1532
      %2481 = vmatprep.subr.mxu0 0.0
      %2482 = vmatpush1.msra.mxu0 %v1533
      %2483 = vmatprep.subr.mxu0 0.0
      %2484 = vmatpush1.msra.mxu0 %v1534
      %2485 = vmatprep.subr.mxu0 0.0
      %2486 = vmatpush1.msra.mxu0 %v1535
      %2487 = vmatprep.subr.mxu0 0.0
      %2488 = vmatpush1.msra.mxu0 %v1536
      %2489 = vmatprep.subr.mxu0 0.0
      %2490 = vmatpush1.msra.mxu0 %v1537
      %2491 = vmatprep.subr.mxu0 0.0
      %2492 = vmatpush1.msra.mxu0 %v1538
      %2493 = vmatprep.subr.mxu0 0.0
      %2494 = vmatpush1.msra.mxu0 0.0
      %2495 = vmatprep.subr.mxu0 0.0
      %2496 = vmatpush1.msra.mxu0 0.0
      %2497 = vmatprep.subr.mxu0 0.0
      %2498 = vmatpush1.msra.mxu0 0.0
      %2499 = vmatprep.subr.mxu0 0.0
      %2500 = vmatpush1.msra.mxu0 0.0
      %2501 = vmatprep.subr.mxu0 0.0
      %2502 = vmatpush1.msra.mxu0 0.0
      %2503 = vmatprep.subr.mxu0 0.0
      %2504 = vmatpush1.msra.mxu0 0.0
      %2505 = vmatprep.subr.mxu0 0.0
      %2506 = vmatpush1.msra.mxu0 0.0
      %2507 = vmatprep.subr.mxu0 0.0
      %2508 = vmatpush1.msra.mxu0 0.0
      %2509 = vmatprep.subr.mxu0 0.0
      %2510 = vmatpush1.msra.mxu0 0.0
      %2511 = vmatprep.subr.mxu0 0.0
      %2512 = vmatpush1.msra.mxu0 0.0
      %2513 = vmatprep.subr.mxu0 0.0
      %2514 = vmatpush1.msra.mxu0 0.0
      %2515 = vmatprep.subr.mxu0 0.0
      %2516 = vmatpush1.msra.mxu0 0.0
      %2517 = vmatprep.subr.mxu0 0.0
      %2518 = vmatpush1.msra.mxu0 0.0
      %2519 = vmatprep.subr.mxu0 0.0
      %2520 = vmatpush1.msra.mxu0 0.0
      %2521 = vmatprep.subr.mxu0 0.0
      %2522 = vmatpush1.msra.mxu0 0.0
      %2523 = vmatprep.subr.mxu0 0.0
      %2524 = vmatpush1.msra.mxu0 0.0
      %2525 = vmatprep.mubr.f32.mxu0 0.0
      %2526 = vmatmul.mubr.f32.gmra.mrb[0].mxu0 %v1363
      %v2527 = vpop.f32.mrb[0].mxu0
      %v2528 = vadd.f32 %v2303, %v2527
      %v2529 = vpop.f32.mrb[0].mxu0
      %2530 = vmatprep.mubr.f32.mxu0 0.0
      %2531 = vmatmul.mubr.f32.gmra.mrb[0].mxu0 %v1364
      %v2532 = vpop.f32.mrb[0].mxu0
      %v2533 = vadd.f32 %v2308, %v2532
      %v2534 = vpop.f32.mrb[0].mxu0
      %2535 = vmatprep.mubr.f32.mxu0 0.0
      %2536 = vmatmul.mubr.f32.gmra.mrb[0].mxu0 %v1365
      %v2537 = vpop.f32.mrb[0].mxu0
      %v2538 = vadd.f32 %v2313, %v2537
      %v2539 = vpop.f32.mrb[0].mxu0
      %2540 = vmatprep.mubr.f32.mxu0 0.0
      %2541 = vmatmul.mubr.f32.gmra.mrb[0].mxu0 %v1366
      %v2542 = vpop.f32.mrb[0].mxu0
      %v2543 = vadd.f32 %v2318, %v2542
      %v2544 = vpop.f32.mrb[0].mxu0
      %2545 = vmatprep.mubr.f32.mxu0 0.0
      %2546 = vmatmul.mubr.f32.gmra.mrb[0].mxu0 %v1367
      %v2547 = vpop.f32.mrb[0].mxu0
      %v2548 = vadd.f32 %v2323, %v2547
      %v2549 = vpop.f32.mrb[0].mxu0
      %2550 = vmatprep.mubr.f32.mxu0 0.0
      %2551 = vmatmul.mubr.f32.gmra.mrb[0].mxu0 %v1368
      %v2552 = vpop.f32.mrb[0].mxu0
      %v2553 = vadd.f32 %v2328, %v2552
      %v2554 = vpop.f32.mrb[0].mxu0
      %2555 = vmatprep.mubr.f32.mxu0 0.0
      %2556 = vmatmul.mubr.f32.gmra.mrb[0].mxu0 %v1369
      %v2557 = vpop.f32.mrb[0].mxu0
      %v2558 = vadd.f32 %v2333, %v2557
      %v2559 = vpop.f32.mrb[0].mxu0
      %2560 = vmatprep.mubr.f32.mxu0 0.0
      %2561 = vmatmul.mubr.f32.gmra.mrb[0].mxu0 %v1370
      %v2562 = vpop.f32.mrb[0].mxu0
      %v2563 = vadd.f32 %v2338, %v2562
      %v2564 = vpop.f32.mrb[0].mxu0
      %2565 = vmatprep.mubr.f32.mxu0 0.0
      %2566 = vmatmul.mubr.f32.gmra.mrb[0].mxu0 %v1371
      %v2567 = vpop.f32.mrb[0].mxu0
      %v2568 = vadd.f32 %v2343, %v2567
      %v2569 = vpop.f32.mrb[0].mxu0
      %2570 = vmatprep.mubr.f32.mxu0 0.0
      %2571 = vmatmul.mubr.f32.gmra.mrb[0].mxu0 %v1372
      %v2572 = vpop.f32.mrb[0].mxu0
      %v2573 = vadd.f32 %v2348, %v2572
      %v2574 = vpop.f32.mrb[0].mxu0
      %2575 = vmatprep.mubr.f32.mxu0 0.0
      %2576 = vmatmul.mubr.f32.gmra.mrb[0].mxu0 %v1373
      %v2577 = vpop.f32.mrb[0].mxu0
      %v2578 = vadd.f32 %v2353, %v2577
      %v2579 = vpop.f32.mrb[0].mxu0
      %2580 = vmatprep.mubr.f32.mxu0 0.0
      %2581 = vmatmul.mubr.f32.gmra.mrb[0].mxu0 %v1374
      %v2582 = vpop.f32.mrb[0].mxu0
      %v2583 = vadd.f32 %v2358, %v2582
      %v2584 = vpop.f32.mrb[0].mxu0
      %2585 = vmatprep.mubr.f32.mxu0 0.0
      %2586 = vmatmul.mubr.f32.gmra.mrb[0].mxu0 %v1375
      %v2587 = vpop.f32.mrb[0].mxu0
      %v2588 = vadd.f32 %v2363, %v2587
      %v2589 = vpop.f32.mrb[0].mxu0
      %2590 = vmatprep.mubr.f32.mxu0 0.0
      %2591 = vmatmul.mubr.f32.gmra.mrb[0].mxu0 %v1376
      %v2592 = vpop.f32.mrb[0].mxu0
      %v2593 = vadd.f32 %v2368, %v2592
      %v2594 = vpop.f32.mrb[0].mxu0
      %2595 = vmatprep.mubr.f32.mxu0 0.0
      %2596 = vmatmul.mubr.f32.gmra.mrb[0].mxu0 %v1377
      %v2597 = vpop.f32.mrb[0].mxu0
      %v2598 = vadd.f32 %v2373, %v2597
      %v2599 = vpop.f32.mrb[0].mxu0
      %2600 = vmatprep.mubr.f32.mxu0 0.0
      %2601 = vmatmul.mubr.f32.gmra.mrb[0].mxu0 %v1378
      %v2602 = vpop.f32.mrb[0].mxu0
      %v2603 = vadd.f32 %v2378, %v2602
      %v2604 = vpop.f32.mrb[0].mxu0
      %2605 = vmatprep.mubr.f32.mxu0 0.0
      %2606 = vmatmul.mubr.f32.gmra.mrb[0].mxu0 %v1379
      %v2607 = vpop.f32.mrb[0].mxu0
      %v2608 = vadd.f32 %v2383, %v2607
      %v2609 = vpop.f32.mrb[0].mxu0
      %2610 = vmatprep.mubr.f32.mxu0 0.0
      %2611 = vmatmul.mubr.f32.gmra.mrb[0].mxu0 %v1380
      %v2612 = vpop.f32.mrb[0].mxu0
      %v2613 = vadd.f32 %v2388, %v2612
      %v2614 = vpop.f32.mrb[0].mxu0
      %2615 = vmatprep.mubr.f32.mxu0 0.0
      %2616 = vmatmul.mubr.f32.gmra.mrb[0].mxu0 %v1381
      %v2617 = vpop.f32.mrb[0].mxu0
      %v2618 = vadd.f32 %v2393, %v2617
      %v2619 = vpop.f32.mrb[0].mxu0
      %2620 = vmatprep.mubr.f32.mxu0 0.0
      %2621 = vmatmul.mubr.f32.gmra.mrb[0].mxu0 %v1382
      %v2622 = vpop.f32.mrb[0].mxu0
      %v2623 = vadd.f32 %v2398, %v2622
      %v2624 = vpop.f32.mrb[0].mxu0
      %2625 = vmatprep.mubr.f32.mxu0 0.0
      %2626 = vmatmul.mubr.f32.gmra.mrb[0].mxu0 %v1383
      %v2627 = vpop.f32.mrb[0].mxu0
      %v2628 = vadd.f32 %v2403, %v2627
      %v2629 = vpop.f32.mrb[0].mxu0
      %2630 = vmatprep.mubr.f32.mxu0 0.0
      %2631 = vmatmul.mubr.f32.gmra.mrb[0].mxu0 %v1384
      %v2632 = vpop.f32.mrb[0].mxu0
      %v2633 = vadd.f32 %v2408, %v2632
      %v2634 = vpop.f32.mrb[0].mxu0
      %2635 = vmatprep.mubr.f32.mxu0 0.0
      %2636 = vmatmul.mubr.f32.gmra.mrb[0].mxu0 %v1385
      %v2637 = vpop.f32.mrb[0].mxu0
      %v2638 = vadd.f32 %v2413, %v2637
      %v2639 = vpop.f32.mrb[0].mxu0
      %2640 = vmatprep.mubr.f32.mxu0 0.0
      %2641 = vmatmul.mubr.f32.gmra.mrb[0].mxu0 %v1386
      %v2642 = vpop.f32.mrb[0].mxu0
      %v2643 = vadd.f32 %v2418, %v2642
      %v2644 = vpop.f32.mrb[0].mxu0
      %2645 = vmatprep.mubr.f32.mxu0 0.0
      %2646 = vmatmul.mubr.f32.gmra.mrb[0].mxu0 %v1387
      %v2647 = vpop.f32.mrb[0].mxu0
      %v2648 = vadd.f32 %v2423, %v2647
      %v2649 = vpop.f32.mrb[0].mxu0
      %2650 = vmatprep.mubr.f32.mxu0 0.0
      %2651 = vmatmul.mubr.f32.gmra.mrb[0].mxu0 %v1388
      %v2652 = vpop.f32.mrb[0].mxu0
      %v2653 = vadd.f32 %v2428, %v2652
      %v2654 = vpop.f32.mrb[0].mxu0
      %2655 = vmatprep.mubr.f32.mxu0 0.0
      %2656 = vmatmul.mubr.f32.gmra.mrb[0].mxu0 %v1389
      %v2657 = vpop.f32.mrb[0].mxu0
      %v2658 = vadd.f32 %v2433, %v2657
      %v2659 = vpop.f32.mrb[0].mxu0
      %2660 = vmatprep.mubr.f32.mxu0 0.0
      %2661 = vmatmul.mubr.f32.gmra.mrb[0].mxu0 %v1390
      %v2662 = vpop.f32.mrb[0].mxu0
      %v2663 = vadd.f32 %v2438, %v2662
      %v2664 = vpop.f32.mrb[0].mxu0
      %2665 = vmatprep.mubr.f32.mxu0 0.0
      %2666 = vmatmul.mubr.f32.gmra.mrb[0].mxu0 %v1391
      %v2667 = vpop.f32.mrb[0].mxu0
      %v2668 = vadd.f32 %v2443, %v2667
      %v2669 = vpop.f32.mrb[0].mxu0
      %2670 = vmatprep.mubr.f32.mxu0 0.0
      %2671 = vmatmul.mubr.f32.gmra.mrb[0].mxu0 %v1392
      %v2672 = vpop.f32.mrb[0].mxu0
      %v2673 = vadd.f32 %v2448, %v2672
      %v2674 = vpop.f32.mrb[0].mxu0
      %2675 = vmatprep.mubr.f32.mxu0 0.0
      %2676 = vmatmul.mubr.f32.gmra.mrb[0].mxu0 %v1393
      %v2677 = vpop.f32.mrb[0].mxu0
      %v2678 = vadd.f32 %v2453, %v2677
      %v2679 = vpop.f32.mrb[0].mxu0
      %2680 = vmatprep.mubr.f32.mxu0 0.0
      %2681 = vmatmul.mubr.f32.gmra.mrb[0].mxu0 %v1394
      %v2682 = vpop.f32.mrb[0].mxu0
      %v2683 = vadd.f32 %v2458, %v2682
      %v2684 = vpop.f32.mrb[0].mxu0
      %2685 = vdwg.mxu0
      %v2686 = vxor.u32 %v2528, 2147483648
      %v2687 = vxor.u32 %v2533, 2147483648
      %v2688 = vxor.u32 %v2538, 2147483648
      %v2689 = vxor.u32 %v2543, 2147483648
      %v2690 = vxor.u32 %v2548, 2147483648
      %v2691 = vxor.u32 %v2553, 2147483648
      %v2692 = vxor.u32 %v2558, 2147483648
      %v2693 = vxor.u32 %v2563, 2147483648
      %v2694 = vxor.u32 %v2568, 2147483648
      %v2695 = vxor.u32 %v2573, 2147483648
      %v2696 = vxor.u32 %v2578, 2147483648
      %v2697 = vxor.u32 %v2583, 2147483648
      %v2698 = vxor.u32 %v2588, 2147483648
      %v2699 = vxor.u32 %v2593, 2147483648
      %v2700 = vxor.u32 %v2598, 2147483648
      %v2701 = vxor.u32 %v2603, 2147483648
      %v2702 = vxor.u32 %v2608, 2147483648
      %v2703 = vxor.u32 %v2613, 2147483648
      %v2704 = vxor.u32 %v2618, 2147483648
      %v2705 = vxor.u32 %v2623, 2147483648
      %v2706 = vxor.u32 %v2628, 2147483648
      %v2707 = vxor.u32 %v2633, 2147483648
      %v2708 = vxor.u32 %v2638, 2147483648
      %v2709 = vxor.u32 %v2643, 2147483648
      %v2710 = vxor.u32 %v2648, 2147483648
      %v2711 = vxor.u32 %v2653, 2147483648
      %v2712 = vxor.u32 %v2658, 2147483648
      %v2713 = vxor.u32 %v2663, 2147483648
      %v2714 = vxor.u32 %v2668, 2147483648
      %v2715 = vxor.u32 %v2673, 2147483648
      %v2716 = vxor.u32 %v2678, 2147483648
      %v2717 = vxor.u32 %v2683, 2147483648
      %v2718 = vmul.f32 %v2686, 1.442695
      %v2719 = vpow.pop %v2718
      %v2720 = vmul.f32 %v2687, 1.442695
      %v2721 = vpow.pop %v2720
      %v2722 = vmul.f32 %v2688, 1.442695
      %v2723 = vpow.pop %v2722
      %v2724 = vmul.f32 %v2689, 1.442695
      %v2725 = vpow.pop %v2724
      %v2726 = vmul.f32 %v2690, 1.442695
      %v2727 = vpow.pop %v2726
      %v2728 = vmul.f32 %v2691, 1.442695
      %v2729 = vpow.pop %v2728
      %v2730 = vmul.f32 %v2692, 1.442695
      %v2731 = vpow.pop %v2730
      %v2732 = vmul.f32 %v2693, 1.442695
      %v2733 = vpow.pop %v2732
      %v2734 = vmul.f32 %v2694, 1.442695
      %v2735 = vpow.pop %v2734
      %v2736 = vmul.f32 %v2695, 1.442695
      %v2737 = vpow.pop %v2736
      %v2738 = vmul.f32 %v2696, 1.442695
      %v2739 = vpow.pop %v2738
      %v2740 = vmul.f32 %v2697, 1.442695
      %v2741 = vpow.pop %v2740
      %v2742 = vmul.f32 %v2698, 1.442695
      %v2743 = vpow.pop %v2742
      %v2744 = vmul.f32 %v2699, 1.442695
      %v2745 = vpow.pop %v2744
      %v2746 = vmul.f32 %v2700, 1.442695
      %v2747 = vpow.pop %v2746
      %v2748 = vmul.f32 %v2701, 1.442695
      %v2749 = vpow.pop %v2748
      %v2750 = vmul.f32 %v2702, 1.442695
      %v2751 = vpow.pop %v2750
      %v2752 = vmul.f32 %v2703, 1.442695
      %v2753 = vpow.pop %v2752
      %v2754 = vmul.f32 %v2704, 1.442695
      %v2755 = vpow.pop %v2754
      %v2756 = vmul.f32 %v2705, 1.442695
      %v2757 = vpow.pop %v2756
      %v2758 = vmul.f32 %v2706, 1.442695
      %v2759 = vpow.pop %v2758
      %v2760 = vmul.f32 %v2707, 1.442695
      %v2761 = vpow.pop %v2760
      %v2762 = vmul.f32 %v2708, 1.442695
      %v2763 = vpow.pop %v2762
      %v2764 = vmul.f32 %v2709, 1.442695
      %v2765 = vpow.pop %v2764
      %v2766 = vmul.f32 %v2710, 1.442695
      %v2767 = vpow.pop %v2766
      %v2768 = vmul.f32 %v2711, 1.442695
      %v2769 = vpow.pop %v2768
      %v2770 = vmul.f32 %v2712, 1.442695
      %v2771 = vpow.pop %v2770
      %v2772 = vmul.f32 %v2713, 1.442695
      %v2773 = vpow.pop %v2772
      %v2774 = vmul.f32 %v2714, 1.442695
      %v2775 = vpow.pop %v2774
      %v2776 = vmul.f32 %v2715, 1.442695
      %v2777 = vpow.pop %v2776
      %v2778 = vmul.f32 %v2716, 1.442695
      %v2779 = vpow.pop %v2778
      %v2780 = vmul.f32 %v2717, 1.442695
      %v2781 = vpow.pop %v2780
      %v2782 = vadd.f32 %v2719, 1.0
      %v2783 = vadd.f32 %v2721, 1.0
      %v2784 = vadd.f32 %v2723, 1.0
      %v2785 = vadd.f32 %v2725, 1.0
      %v2786 = vadd.f32 %v2727, 1.0
      %v2787 = vadd.f32 %v2729, 1.0
      %v2788 = vadd.f32 %v2731, 1.0
      %v2789 = vadd.f32 %v2733, 1.0
      %v2790 = vadd.f32 %v2735, 1.0
      %v2791 = vadd.f32 %v2737, 1.0
      %v2792 = vadd.f32 %v2739, 1.0
      %v2793 = vadd.f32 %v2741, 1.0
      %v2794 = vadd.f32 %v2743, 1.0
      %v2795 = vadd.f32 %v2745, 1.0
      %v2796 = vadd.f32 %v2747, 1.0
      %v2797 = vadd.f32 %v2749, 1.0
      %v2798 = vadd.f32 %v2751, 1.0
      %v2799 = vadd.f32 %v2753, 1.0
      %v2800 = vadd.f32 %v2755, 1.0
      %v2801 = vadd.f32 %v2757, 1.0
      %v2802 = vadd.f32 %v2759, 1.0
      %v2803 = vadd.f32 %v2761, 1.0
      %v2804 = vadd.f32 %v2763, 1.0
      %v2805 = vadd.f32 %v2765, 1.0
      %v2806 = vadd.f32 %v2767, 1.0
      %v2807 = vadd.f32 %v2769, 1.0
      %v2808 = vadd.f32 %v2771, 1.0
      %v2809 = vadd.f32 %v2773, 1.0
      %v2810 = vadd.f32 %v2775, 1.0
      %v2811 = vadd.f32 %v2777, 1.0
      %v2812 = vadd.f32 %v2779, 1.0
      %v2813 = vadd.f32 %v2781, 1.0
      %v2814 = vrcp.pop %v2782
      %v2815 = vmul.f32 1.0, %v2814
      %v2816 = vrcp.pop %v2783
      %v2817 = vmul.f32 1.0, %v2816
      %v2818 = vrcp.pop %v2784
      %v2819 = vmul.f32 1.0, %v2818
      %v2820 = vrcp.pop %v2785
      %v2821 = vmul.f32 1.0, %v2820
      %v2822 = vrcp.pop %v2786
      %v2823 = vmul.f32 1.0, %v2822
      %v2824 = vrcp.pop %v2787
      %v2825 = vmul.f32 1.0, %v2824
      %v2826 = vrcp.pop %v2788
      %v2827 = vmul.f32 1.0, %v2826
      %v2828 = vrcp.pop %v2789
      %v2829 = vmul.f32 1.0, %v2828
      %v2830 = vrcp.pop %v2790
      %v2831 = vmul.f32 1.0, %v2830
      %v2832 = vrcp.pop %v2791
      %v2833 = vmul.f32 1.0, %v2832
      %v2834 = vrcp.pop %v2792
      %v2835 = vmul.f32 1.0, %v2834
      %v2836 = vrcp.pop %v2793
      %v2837 = vmul.f32 1.0, %v2836
      %v2838 = vrcp.pop %v2794
      %v2839 = vmul.f32 1.0, %v2838
      %v2840 = vrcp.pop %v2795
      %v2841 = vmul.f32 1.0, %v2840
      %v2842 = vrcp.pop %v2796
      %v2843 = vmul.f32 1.0, %v2842
      %v2844 = vrcp.pop %v2797
      %v2845 = vmul.f32 1.0, %v2844
      %v2846 = vrcp.pop %v2798
      %v2847 = vmul.f32 1.0, %v2846
      %v2848 = vrcp.pop %v2799
      %v2849 = vmul.f32 1.0, %v2848
      %v2850 = vrcp.pop %v2800
      %v2851 = vmul.f32 1.0, %v2850
      %v2852 = vrcp.pop %v2801
      %v2853 = vmul.f32 1.0, %v2852
      %v2854 = vrcp.pop %v2802
      %v2855 = vmul.f32 1.0, %v2854
      %v2856 = vrcp.pop %v2803
      %v2857 = vmul.f32 1.0, %v2856
      %v2858 = vrcp.pop %v2804
      %v2859 = vmul.f32 1.0, %v2858
      %v2860 = vrcp.pop %v2805
      %v2861 = vmul.f32 1.0, %v2860
      %v2862 = vrcp.pop %v2806
      %v2863 = vmul.f32 1.0, %v2862
      %v2864 = vrcp.pop %v2807
      %v2865 = vmul.f32 1.0, %v2864
      %v2866 = vrcp.pop %v2808
      %v2867 = vmul.f32 1.0, %v2866
      %v2868 = vrcp.pop %v2809
      %v2869 = vmul.f32 1.0, %v2868
      %v2870 = vrcp.pop %v2810
      %v2871 = vmul.f32 1.0, %v2870
      %v2872 = vrcp.pop %v2811
      %v2873 = vmul.f32 1.0, %v2872
      %v2874 = vrcp.pop %v2812
      %v2875 = vmul.f32 1.0, %v2874
      %v2876 = vrcp.pop %v2813
      %v2877 = vmul.f32 1.0, %v2876
      %v2878 = vmul.f32 %v2528, %v2815
      %v2879 = vmul.f32 %v2533, %v2817
      %v2880 = vmul.f32 %v2538, %v2819
      %v2881 = vmul.f32 %v2543, %v2821
      %v2882 = vmul.f32 %v2548, %v2823
      %v2883 = vmul.f32 %v2553, %v2825
      %v2884 = vmul.f32 %v2558, %v2827
      %v2885 = vmul.f32 %v2563, %v2829
      %v2886 = vmul.f32 %v2568, %v2831
      %v2887 = vmul.f32 %v2573, %v2833
      %v2888 = vmul.f32 %v2578, %v2835
      %v2889 = vmul.f32 %v2583, %v2837
      %v2890 = vmul.f32 %v2588, %v2839
      %v2891 = vmul.f32 %v2593, %v2841
      %v2892 = vmul.f32 %v2598, %v2843
      %v2893 = vmul.f32 %v2603, %v2845
      %v2894 = vmul.f32 %v2608, %v2847
      %v2895 = vmul.f32 %v2613, %v2849
      %v2896 = vmul.f32 %v2618, %v2851
      %v2897 = vmul.f32 %v2623, %v2853
      %v2898 = vmul.f32 %v2628, %v2855
      %v2899 = vmul.f32 %v2633, %v2857
      %v2900 = vmul.f32 %v2638, %v2859
      %v2901 = vmul.f32 %v2643, %v2861
      %v2902 = vmul.f32 %v2648, %v2863
      %v2903 = vmul.f32 %v2653, %v2865
      %v2904 = vmul.f32 %v2658, %v2867
      %v2905 = vmul.f32 %v2663, %v2869
      %v2906 = vmul.f32 %v2668, %v2871
      %v2907 = vmul.f32 %v2673, %v2873
      %v2908 = vmul.f32 %v2678, %v2875
      %v2909 = vmul.f32 %v2683, %v2877
      %v2910 = vlaneseq
      %v2911 = vshrl.u32 %v2910, 7
      %v2912 = vsub.s32 0, %v2911
      %v2913 = vrot.slane %v1556, %v2912
      %2914 = vmatprep.subr.mxu0 0.0
      %2915 = vmatpush1.msra.mxu0 %v1539
      %2916 = vmatprep.subr.mxu0 0.0
      %2917 = vmatpush1.msra.mxu0 %v1540
      %2918 = vmatprep.subr.mxu0 0.0
      %2919 = vmatpush1.msra.mxu0 %v1541
      %2920 = vmatprep.subr.mxu0 0.0
      %2921 = vmatpush1.msra.mxu0 %v1542
      %2922 = vmatprep.subr.mxu0 0.0
      %2923 = vmatpush1.msra.mxu0 %v1543
      %2924 = vmatprep.subr.mxu0 0.0
      %2925 = vmatpush1.msra.mxu0 %v1544
      %2926 = vmatprep.subr.mxu0 0.0
      %2927 = vmatpush1.msra.mxu0 %v1545
      %2928 = vmatprep.subr.mxu0 0.0
      %2929 = vmatpush1.msra.mxu0 %v1546
      %2930 = vmatprep.subr.mxu0 0.0
      %2931 = vmatpush1.msra.mxu0 %v1547
      %2932 = vmatprep.subr.mxu0 0.0
      %2933 = vmatpush1.msra.mxu0 %v1548
      %2934 = vmatprep.subr.mxu0 0.0
      %2935 = vmatpush1.msra.mxu0 %v1549
      %2936 = vmatprep.subr.mxu0 0.0
      %2937 = vmatpush1.msra.mxu0 %v1550
      %2938 = vmatprep.subr.mxu0 0.0
      %2939 = vmatpush1.msra.mxu0 %v1551
      %2940 = vmatprep.subr.mxu0 0.0
      %2941 = vmatpush1.msra.mxu0 %v1552
      %2942 = vmatprep.subr.mxu0 0.0
      %2943 = vmatpush1.msra.mxu0 %v1553
      %2944 = vmatprep.subr.mxu0 0.0
      %2945 = vmatpush1.msra.mxu0 %v1554
      %2946 = vmatprep.subr.mxu0 0.0
      %2947 = vmatpush1.msra.mxu0 0.0
      %2948 = vmatprep.subr.mxu0 0.0
      %2949 = vmatpush1.msra.mxu0 0.0
      %2950 = vmatprep.subr.mxu0 0.0
      %2951 = vmatpush1.msra.mxu0 0.0
      %2952 = vmatprep.subr.mxu0 0.0
      %2953 = vmatpush1.msra.mxu0 0.0
      %2954 = vmatprep.subr.mxu0 0.0
      %2955 = vmatpush1.msra.mxu0 0.0
      %2956 = vmatprep.subr.mxu0 0.0
      %2957 = vmatpush1.msra.mxu0 0.0
      %2958 = vmatprep.subr.mxu0 0.0
      %2959 = vmatpush1.msra.mxu0 0.0
      %2960 = vmatprep.subr.mxu0 0.0
      %2961 = vmatpush1.msra.mxu0 0.0
      %2962 = vmatprep.subr.mxu0 0.0
      %2963 = vmatpush1.msra.mxu0 0.0
      %2964 = vmatprep.subr.mxu0 0.0
      %2965 = vmatpush1.msra.mxu0 0.0
      %2966 = vmatprep.subr.mxu0 0.0
      %2967 = vmatpush1.msra.mxu0 0.0
      %2968 = vmatprep.subr.mxu0 0.0
      %2969 = vmatpush1.msra.mxu0 0.0
      %2970 = vmatprep.subr.mxu0 0.0
      %2971 = vmatpush1.msra.mxu0 0.0
      %2972 = vmatprep.subr.mxu0 0.0
      %2973 = vmatpush1.msra.mxu0 0.0
      %2974 = vmatprep.subr.mxu0 0.0
      %2975 = vmatpush1.msra.mxu0 0.0
      %2976 = vmatprep.subr.mxu0 0.0
      %2977 = vmatpush1.msra.mxu0 0.0
      %2978 = vmatprep.mubr.f32.mxu0 0.0
      %2979 = vmatmul.mubr.f32.gmra.mrb[0].mxu0 %v2878
      %v2980 = vpop.f32.mrb[0].mxu0
      %v2981 = vadd.f32 %v2913, %v2980
      %v2982 = vpop.f32.mrb[0].mxu0
      %2983 = vmatprep.mubr.f32.mxu0 0.0
      %2984 = vmatmul.mubr.f32.gmra.mrb[0].mxu0 %v2879
      %v2985 = vpop.f32.mrb[0].mxu0
      %v2986 = vadd.f32 %v2913, %v2985
      %v2987 = vpop.f32.mrb[0].mxu0
      %2988 = vmatprep.mubr.f32.mxu0 0.0
      %2989 = vmatmul.mubr.f32.gmra.mrb[0].mxu0 %v2880
      %v2990 = vpop.f32.mrb[0].mxu0
      %v2991 = vadd.f32 %v2913, %v2990
      %v2992 = vpop.f32.mrb[0].mxu0
      %2993 = vmatprep.mubr.f32.mxu0 0.0
      %2994 = vmatmul.mubr.f32.gmra.mrb[0].mxu0 %v2881
      %v2995 = vpop.f32.mrb[0].mxu0
      %v2996 = vadd.f32 %v2913, %v2995
      %v2997 = vpop.f32.mrb[0].mxu0
      %2998 = vmatprep.mubr.f32.mxu0 0.0
      %2999 = vmatmul.mubr.f32.gmra.mrb[0].mxu0 %v2882
      %v3000 = vpop.f32.mrb[0].mxu0
      %v3001 = vadd.f32 %v2913, %v3000
      %v3002 = vpop.f32.mrb[0].mxu0
      %3003 = vmatprep.mubr.f32.mxu0 0.0
      %3004 = vmatmul.mubr.f32.gmra.mrb[0].mxu0 %v2883
      %v3005 = vpop.f32.mrb[0].mxu0
      %v3006 = vadd.f32 %v2913, %v3005
      %v3007 = vpop.f32.mrb[0].mxu0
      %3008 = vmatprep.mubr.f32.mxu0 0.0
      %3009 = vmatmul.mubr.f32.gmra.mrb[0].mxu0 %v2884
      %v3010 = vpop.f32.mrb[0].mxu0
      %v3011 = vadd.f32 %v2913, %v3010
      %v3012 = vpop.f32.mrb[0].mxu0
      %3013 = vmatprep.mubr.f32.mxu0 0.0
      %3014 = vmatmul.mubr.f32.gmra.mrb[0].mxu0 %v2885
      %v3015 = vpop.f32.mrb[0].mxu0
      %v3016 = vadd.f32 %v2913, %v3015
      %v3017 = vpop.f32.mrb[0].mxu0
      %3018 = vmatprep.mubr.f32.mxu0 0.0
      %3019 = vmatmul.mubr.f32.gmra.mrb[0].mxu0 %v2886
      %v3020 = vpop.f32.mrb[0].mxu0
      %v3021 = vadd.f32 %v2913, %v3020
      %v3022 = vpop.f32.mrb[0].mxu0
      %3023 = vmatprep.mubr.f32.mxu0 0.0
      %3024 = vmatmul.mubr.f32.gmra.mrb[0].mxu0 %v2887
      %v3025 = vpop.f32.mrb[0].mxu0
      %v3026 = vadd.f32 %v2913, %v3025
      %v3027 = vpop.f32.mrb[0].mxu0
      %3028 = vmatprep.mubr.f32.mxu0 0.0
      %3029 = vmatmul.mubr.f32.gmra.mrb[0].mxu0 %v2888
      %v3030 = vpop.f32.mrb[0].mxu0
      %v3031 = vadd.f32 %v2913, %v3030
      %v3032 = vpop.f32.mrb[0].mxu0
      %3033 = vmatprep.mubr.f32.mxu0 0.0
      %3034 = vmatmul.mubr.f32.gmra.mrb[0].mxu0 %v2889
      %v3035 = vpop.f32.mrb[0].mxu0
      %v3036 = vadd.f32 %v2913, %v3035
      %v3037 = vpop.f32.mrb[0].mxu0
      %3038 = vmatprep.mubr.f32.mxu0 0.0
      %3039 = vmatmul.mubr.f32.gmra.mrb[0].mxu0 %v2890
      %v3040 = vpop.f32.mrb[0].mxu0
      %v3041 = vadd.f32 %v2913, %v3040
      %v3042 = vpop.f32.mrb[0].mxu0
      %3043 = vmatprep.mubr.f32.mxu0 0.0
      %3044 = vmatmul.mubr.f32.gmra.mrb[0].mxu0 %v2891
      %v3045 = vpop.f32.mrb[0].mxu0
      %v3046 = vadd.f32 %v2913, %v3045
      %v3047 = vpop.f32.mrb[0].mxu0
      %3048 = vmatprep.mubr.f32.mxu0 0.0
      %3049 = vmatmul.mubr.f32.gmra.mrb[0].mxu0 %v2892
      %v3050 = vpop.f32.mrb[0].mxu0
      %v3051 = vadd.f32 %v2913, %v3050
      %v3052 = vpop.f32.mrb[0].mxu0
      %3053 = vmatprep.mubr.f32.mxu0 0.0
      %3054 = vmatmul.mubr.f32.gmra.mrb[0].mxu0 %v2893
      %v3055 = vpop.f32.mrb[0].mxu0
      %v3056 = vadd.f32 %v2913, %v3055
      %v3057 = vpop.f32.mrb[0].mxu0
      %3058 = vmatprep.mubr.f32.mxu0 0.0
      %3059 = vmatmul.mubr.f32.gmra.mrb[0].mxu0 %v2894
      %v3060 = vpop.f32.mrb[0].mxu0
      %v3061 = vadd.f32 %v2913, %v3060
      %v3062 = vpop.f32.mrb[0].mxu0
      %3063 = vmatprep.mubr.f32.mxu0 0.0
      %3064 = vmatmul.mubr.f32.gmra.mrb[0].mxu0 %v2895
      %v3065 = vpop.f32.mrb[0].mxu0
      %v3066 = vadd.f32 %v2913, %v3065
      %v3067 = vpop.f32.mrb[0].mxu0
      %3068 = vmatprep.mubr.f32.mxu0 0.0
      %3069 = vmatmul.mubr.f32.gmra.mrb[0].mxu0 %v2896
      %v3070 = vpop.f32.mrb[0].mxu0
      %v3071 = vadd.f32 %v2913, %v3070
      %v3072 = vpop.f32.mrb[0].mxu0
      %3073 = vmatprep.mubr.f32.mxu0 0.0
      %3074 = vmatmul.mubr.f32.gmra.mrb[0].mxu0 %v2897
      %v3075 = vpop.f32.mrb[0].mxu0
      %v3076 = vadd.f32 %v2913, %v3075
      %v3077 = vpop.f32.mrb[0].mxu0
      %3078 = vmatprep.mubr.f32.mxu0 0.0
      %3079 = vmatmul.mubr.f32.gmra.mrb[0].mxu0 %v2898
      %v3080 = vpop.f32.mrb[0].mxu0
      %v3081 = vadd.f32 %v2913, %v3080
      %v3082 = vpop.f32.mrb[0].mxu0
      %3083 = vmatprep.mubr.f32.mxu0 0.0
      %3084 = vmatmul.mubr.f32.gmra.mrb[0].mxu0 %v2899
      %v3085 = vpop.f32.mrb[0].mxu0
      %v3086 = vadd.f32 %v2913, %v3085
      %v3087 = vpop.f32.mrb[0].mxu0
      %3088 = vmatprep.mubr.f32.mxu0 0.0
      %3089 = vmatmul.mubr.f32.gmra.mrb[0].mxu0 %v2900
      %v3090 = vpop.f32.mrb[0].mxu0
      %v3091 = vadd.f32 %v2913, %v3090
      %v3092 = vpop.f32.mrb[0].mxu0
      %3093 = vmatprep.mubr.f32.mxu0 0.0
      %3094 = vmatmul.mubr.f32.gmra.mrb[0].mxu0 %v2901
      %v3095 = vpop.f32.mrb[0].mxu0
      %v3096 = vadd.f32 %v2913, %v3095
      %v3097 = vpop.f32.mrb[0].mxu0
      %3098 = vmatprep.mubr.f32.mxu0 0.0
      %3099 = vmatmul.mubr.f32.gmra.mrb[0].mxu0 %v2902
      %v3100 = vpop.f32.mrb[0].mxu0
      %v3101 = vadd.f32 %v2913, %v3100
      %v3102 = vpop.f32.mrb[0].mxu0
      %3103 = vmatprep.mubr.f32.mxu0 0.0
      %3104 = vmatmul.mubr.f32.gmra.mrb[0].mxu0 %v2903
      %v3105 = vpop.f32.mrb[0].mxu0
      %v3106 = vadd.f32 %v2913, %v3105
      %v3107 = vpop.f32.mrb[0].mxu0
      %3108 = vmatprep.mubr.f32.mxu0 0.0
      %3109 = vmatmul.mubr.f32.gmra.mrb[0].mxu0 %v2904
      %v3110 = vpop.f32.mrb[0].mxu0
      %v3111 = vadd.f32 %v2913, %v3110
      %v3112 = vpop.f32.mrb[0].mxu0
      %3113 = vmatprep.mubr.f32.mxu0 0.0
      %3114 = vmatmul.mubr.f32.gmra.mrb[0].mxu0 %v2905
      %v3115 = vpop.f32.mrb[0].mxu0
      %v3116 = vadd.f32 %v2913, %v3115
      %v3117 = vpop.f32.mrb[0].mxu0
      %3118 = vmatprep.mubr.f32.mxu0 0.0
      %3119 = vmatmul.mubr.f32.gmra.mrb[0].mxu0 %v2906
      %v3120 = vpop.f32.mrb[0].mxu0
      %v3121 = vadd.f32 %v2913, %v3120
      %v3122 = vpop.f32.mrb[0].mxu0
      %3123 = vmatprep.mubr.f32.mxu0 0.0
      %3124 = vmatmul.mubr.f32.gmra.mrb[0].mxu0 %v2907
      %v3125 = vpop.f32.mrb[0].mxu0
      %v3126 = vadd.f32 %v2913, %v3125
      %v3127 = vpop.f32.mrb[0].mxu0
      %3128 = vmatprep.mubr.f32.mxu0 0.0
      %3129 = vmatmul.mubr.f32.gmra.mrb[0].mxu0 %v2908
      %v3130 = vpop.f32.mrb[0].mxu0
      %v3131 = vadd.f32 %v2913, %v3130
      %v3132 = vpop.f32.mrb[0].mxu0
      %3133 = vmatprep.mubr.f32.mxu0 0.0
      %3134 = vmatmul.mubr.f32.gmra.mrb[0].mxu0 %v2909
      %v3135 = vpop.f32.mrb[0].mxu0
      %v3136 = vadd.f32 %v2913, %v3135
      %v3137 = vpop.f32.mrb[0].mxu0
      %3138 = vdwg.mxu0
      %v3139 = vxor.u32 %v2981, 2147483648
      %v3140 = vxor.u32 %v2986, 2147483648
      %v3141 = vxor.u32 %v2991, 2147483648
      %v3142 = vxor.u32 %v2996, 2147483648
      %v3143 = vxor.u32 %v3001, 2147483648
      %v3144 = vxor.u32 %v3006, 2147483648
      %v3145 = vxor.u32 %v3011, 2147483648
      %v3146 = vxor.u32 %v3016, 2147483648
      %v3147 = vxor.u32 %v3021, 2147483648
      %v3148 = vxor.u32 %v3026, 2147483648
      %v3149 = vxor.u32 %v3031, 2147483648
      %v3150 = vxor.u32 %v3036, 2147483648
      %v3151 = vxor.u32 %v3041, 2147483648
      %v3152 = vxor.u32 %v3046, 2147483648
      %v3153 = vxor.u32 %v3051, 2147483648
      %v3154 = vxor.u32 %v3056, 2147483648
      %v3155 = vxor.u32 %v3061, 2147483648
      %v3156 = vxor.u32 %v3066, 2147483648
      %v3157 = vxor.u32 %v3071, 2147483648
      %v3158 = vxor.u32 %v3076, 2147483648
      %v3159 = vxor.u32 %v3081, 2147483648
      %v3160 = vxor.u32 %v3086, 2147483648
      %v3161 = vxor.u32 %v3091, 2147483648
      %v3162 = vxor.u32 %v3096, 2147483648
      %v3163 = vxor.u32 %v3101, 2147483648
      %v3164 = vxor.u32 %v3106, 2147483648
      %v3165 = vxor.u32 %v3111, 2147483648
      %v3166 = vxor.u32 %v3116, 2147483648
      %v3167 = vxor.u32 %v3121, 2147483648
      %v3168 = vxor.u32 %v3126, 2147483648
      %v3169 = vxor.u32 %v3131, 2147483648
      %v3170 = vxor.u32 %v3136, 2147483648
      %v3171 = vmul.f32 %v3139, 1.442695
      %v3172 = vpow.pop %v3171
      %v3173 = vmul.f32 %v3140, 1.442695
      %v3174 = vpow.pop %v3173
      %v3175 = vmul.f32 %v3141, 1.442695
      %v3176 = vpow.pop %v3175
      %v3177 = vmul.f32 %v3142, 1.442695
      %v3178 = vpow.pop %v3177
      %v3179 = vmul.f32 %v3143, 1.442695
      %v3180 = vpow.pop %v3179
      %v3181 = vmul.f32 %v3144, 1.442695
      %v3182 = vpow.pop %v3181
      %v3183 = vmul.f32 %v3145, 1.442695
      %v3184 = vpow.pop %v3183
      %v3185 = vmul.f32 %v3146, 1.442695
      %v3186 = vpow.pop %v3185
      %v3187 = vmul.f32 %v3147, 1.442695
      %v3188 = vpow.pop %v3187
      %v3189 = vmul.f32 %v3148, 1.442695
      %v3190 = vpow.pop %v3189
      %v3191 = vmul.f32 %v3149, 1.442695
      %v3192 = vpow.pop %v3191
      %v3193 = vmul.f32 %v3150, 1.442695
      %v3194 = vpow.pop %v3193
      %v3195 = vmul.f32 %v3151, 1.442695
      %v3196 = vpow.pop %v3195
      %v3197 = vmul.f32 %v3152, 1.442695
      %v3198 = vpow.pop %v3197
      %v3199 = vmul.f32 %v3153, 1.442695
      %v3200 = vpow.pop %v3199
      %v3201 = vmul.f32 %v3154, 1.442695
      %v3202 = vpow.pop %v3201
      %v3203 = vmul.f32 %v3155, 1.442695
      %v3204 = vpow.pop %v3203
      %v3205 = vmul.f32 %v3156, 1.442695
      %v3206 = vpow.pop %v3205
      %v3207 = vmul.f32 %v3157, 1.442695
      %v3208 = vpow.pop %v3207
      %v3209 = vmul.f32 %v3158, 1.442695
      %v3210 = vpow.pop %v3209
      %v3211 = vmul.f32 %v3159, 1.442695
      %v3212 = vpow.pop %v3211
      %v3213 = vmul.f32 %v3160, 1.442695
      %v3214 = vpow.pop %v3213
      %v3215 = vmul.f32 %v3161, 1.442695
      %v3216 = vpow.pop %v3215
      %v3217 = vmul.f32 %v3162, 1.442695
      %v3218 = vpow.pop %v3217
      %v3219 = vmul.f32 %v3163, 1.442695
      %v3220 = vpow.pop %v3219
      %v3221 = vmul.f32 %v3164, 1.442695
      %v3222 = vpow.pop %v3221
      %v3223 = vmul.f32 %v3165, 1.442695
      %v3224 = vpow.pop %v3223
      %v3225 = vmul.f32 %v3166, 1.442695
      %v3226 = vpow.pop %v3225
      %v3227 = vmul.f32 %v3167, 1.442695
      %v3228 = vpow.pop %v3227
      %v3229 = vmul.f32 %v3168, 1.442695
      %v3230 = vpow.pop %v3229
      %v3231 = vmul.f32 %v3169, 1.442695
      %v3232 = vpow.pop %v3231
      %v3233 = vmul.f32 %v3170, 1.442695
      %v3234 = vpow.pop %v3233
      %v3235 = vadd.f32 %v3172, 1.0
      %v3236 = vadd.f32 %v3174, 1.0
      %v3237 = vadd.f32 %v3176, 1.0
      %v3238 = vadd.f32 %v3178, 1.0
      %v3239 = vadd.f32 %v3180, 1.0
      %v3240 = vadd.f32 %v3182, 1.0
      %v3241 = vadd.f32 %v3184, 1.0
      %v3242 = vadd.f32 %v3186, 1.0
      %v3243 = vadd.f32 %v3188, 1.0
      %v3244 = vadd.f32 %v3190, 1.0
      %v3245 = vadd.f32 %v3192, 1.0
      %v3246 = vadd.f32 %v3194, 1.0
      %v3247 = vadd.f32 %v3196, 1.0
      %v3248 = vadd.f32 %v3198, 1.0
      %v3249 = vadd.f32 %v3200, 1.0
      %v3250 = vadd.f32 %v3202, 1.0
      %v3251 = vadd.f32 %v3204, 1.0
      %v3252 = vadd.f32 %v3206, 1.0
      %v3253 = vadd.f32 %v3208, 1.0
      %v3254 = vadd.f32 %v3210, 1.0
      %v3255 = vadd.f32 %v3212, 1.0
      %v3256 = vadd.f32 %v3214, 1.0
      %v3257 = vadd.f32 %v3216, 1.0
      %v3258 = vadd.f32 %v3218, 1.0
      %v3259 = vadd.f32 %v3220, 1.0
      %v3260 = vadd.f32 %v3222, 1.0
      %v3261 = vadd.f32 %v3224, 1.0
      %v3262 = vadd.f32 %v3226, 1.0
      %v3263 = vadd.f32 %v3228, 1.0
      %v3264 = vadd.f32 %v3230, 1.0
      %v3265 = vadd.f32 %v3232, 1.0
      %v3266 = vadd.f32 %v3234, 1.0
      %v3267 = vrcp.pop %v3235
      %v3268 = vmul.f32 1.0, %v3267
      %v3269 = vrcp.pop %v3236
      %v3270 = vmul.f32 1.0, %v3269
      %v3271 = vrcp.pop %v3237
      %v3272 = vmul.f32 1.0, %v3271
      %v3273 = vrcp.pop %v3238
      %v3274 = vmul.f32 1.0, %v3273
      %v3275 = vrcp.pop %v3239
      %v3276 = vmul.f32 1.0, %v3275
      %v3277 = vrcp.pop %v3240
      %v3278 = vmul.f32 1.0, %v3277
      %v3279 = vrcp.pop %v3241
      %v3280 = vmul.f32 1.0, %v3279
      %v3281 = vrcp.pop %v3242
      %v3282 = vmul.f32 1.0, %v3281
      %v3283 = vrcp.pop %v3243
      %v3284 = vmul.f32 1.0, %v3283
      %v3285 = vrcp.pop %v3244
      %v3286 = vmul.f32 1.0, %v3285
      %v3287 = vrcp.pop %v3245
      %v3288 = vmul.f32 1.0, %v3287
      %v3289 = vrcp.pop %v3246
      %v3290 = vmul.f32 1.0, %v3289
      %v3291 = vrcp.pop %v3247
      %v3292 = vmul.f32 1.0, %v3291
      %v3293 = vrcp.pop %v3248
      %v3294 = vmul.f32 1.0, %v3293
      %v3295 = vrcp.pop %v3249
      %v3296 = vmul.f32 1.0, %v3295
      %v3297 = vrcp.pop %v3250
      %v3298 = vmul.f32 1.0, %v3297
      %v3299 = vrcp.pop %v3251
      %v3300 = vmul.f32 1.0, %v3299
      %v3301 = vrcp.pop %v3252
      %v3302 = vmul.f32 1.0, %v3301
      %v3303 = vrcp.pop %v3253
      %v3304 = vmul.f32 1.0, %v3303
      %v3305 = vrcp.pop %v3254
      %v3306 = vmul.f32 1.0, %v3305
      %v3307 = vrcp.pop %v3255
      %v3308 = vmul.f32 1.0, %v3307
      %v3309 = vrcp.pop %v3256
      %v3310 = vmul.f32 1.0, %v3309
      %v3311 = vrcp.pop %v3257
      %v3312 = vmul.f32 1.0, %v3311
      %v3313 = vrcp.pop %v3258
      %v3314 = vmul.f32 1.0, %v3313
      %v3315 = vrcp.pop %v3259
      %v3316 = vmul.f32 1.0, %v3315
      %v3317 = vrcp.pop %v3260
      %v3318 = vmul.f32 1.0, %v3317
      %v3319 = vrcp.pop %v3261
      %v3320 = vmul.f32 1.0, %v3319
      %v3321 = vrcp.pop %v3262
      %v3322 = vmul.f32 1.0, %v3321
      %v3323 = vrcp.pop %v3263
      %v3324 = vmul.f32 1.0, %v3323
      %v3325 = vrcp.pop %v3264
      %v3326 = vmul.f32 1.0, %v3325
      %v3327 = vrcp.pop %v3265
      %v3328 = vmul.f32 1.0, %v3327
      %v3329 = vrcp.pop %v3266
      %v3330 = vmul.f32 1.0, %v3329
      %v3331 = vmul.f32 %v2981, %v3268
      %v3332 = vmul.f32 %v2986, %v3270
      %v3333 = vmul.f32 %v2991, %v3272
      %v3334 = vmul.f32 %v2996, %v3274
      %v3335 = vmul.f32 %v3001, %v3276
      %v3336 = vmul.f32 %v3006, %v3278
      %v3337 = vmul.f32 %v3011, %v3280
      %v3338 = vmul.f32 %v3016, %v3282
      %v3339 = vmul.f32 %v3021, %v3284
      %v3340 = vmul.f32 %v3026, %v3286
      %v3341 = vmul.f32 %v3031, %v3288
      %v3342 = vmul.f32 %v3036, %v3290
      %v3343 = vmul.f32 %v3041, %v3292
      %v3344 = vmul.f32 %v3046, %v3294
      %v3345 = vmul.f32 %v3051, %v3296
      %v3346 = vmul.f32 %v3056, %v3298
      %v3347 = vmul.f32 %v3061, %v3300
      %v3348 = vmul.f32 %v3066, %v3302
      %v3349 = vmul.f32 %v3071, %v3304
      %v3350 = vmul.f32 %v3076, %v3306
      %v3351 = vmul.f32 %v3081, %v3308
      %v3352 = vmul.f32 %v3086, %v3310
      %v3353 = vmul.f32 %v3091, %v3312
      %v3354 = vmul.f32 %v3096, %v3314
      %v3355 = vmul.f32 %v3101, %v3316
      %v3356 = vmul.f32 %v3106, %v3318
      %v3357 = vmul.f32 %v3111, %v3320
      %v3358 = vmul.f32 %v3116, %v3322
      %v3359 = vmul.f32 %v3121, %v3324
      %v3360 = vmul.f32 %v3126, %v3326
      %v3361 = vmul.f32 %v3131, %v3328
      %v3362 = vmul.f32 %v3136, %v3330
      %v3363 = vadd.f32 %v3331, %v144
      %v3364 = vadd.f32 %v3332, %v145
      %v3365 = vadd.f32 %v3333, %v146
      %v3366 = vadd.f32 %v3334, %v147
      %v3367 = vadd.f32 %v3335, %v148
      %v3368 = vadd.f32 %v3336, %v149
      %v3369 = vadd.f32 %v3337, %v150
      %v3370 = vadd.f32 %v3338, %v151
      %v3371 = vadd.f32 %v3339, %v152
      %v3372 = vadd.f32 %v3340, %v153
      %v3373 = vadd.f32 %v3341, %v154
      %v3374 = vadd.f32 %v3342, %v155
      %v3375 = vadd.f32 %v3343, %v156
      %v3376 = vadd.f32 %v3344, %v157
      %v3377 = vadd.f32 %v3345, %v158
      %v3378 = vadd.f32 %v3346, %v159
      %v3379 = vadd.f32 %v3347, %v160
      %v3380 = vadd.f32 %v3348, %v161
      %v3381 = vadd.f32 %v3349, %v162
      %v3382 = vadd.f32 %v3350, %v163
      %v3383 = vadd.f32 %v3351, %v164
      %v3384 = vadd.f32 %v3352, %v165
      %v3385 = vadd.f32 %v3353, %v166
      %v3386 = vadd.f32 %v3354, %v167
      %v3387 = vadd.f32 %v3355, %v168
      %v3388 = vadd.f32 %v3356, %v169
      %v3389 = vadd.f32 %v3357, %v170
      %v3390 = vadd.f32 %v3358, %v171
      %v3391 = vadd.f32 %v3359, %v172
      %v3392 = vadd.f32 %v3360, %v173
      %v3393 = vadd.f32 %v3361, %v174
      %v3394 = vadd.f32 %v3362, %v175
      %3395 = vst [vmem:[%s143] sm:$0xff] %v3363
      %3396 = vst [vmem:[%s143 + $0x8] sm:$0xff] %v3364
      %3397 = vst [vmem:[%s143 + $0x10] sm:$0xff] %v3365
      %3398 = vst [vmem:[%s143 + $0x18] sm:$0xff] %v3366
      %3399 = vst [vmem:[%s143 + $0x20] sm:$0xff] %v3367
      %3400 = vst [vmem:[%s143 + $0x28] sm:$0xff] %v3368
      %3401 = vst [vmem:[%s143 + $0x30] sm:$0xff] %v3369
      %3402 = vst [vmem:[%s143 + $0x38] sm:$0xff] %v3370
      %3403 = vst [vmem:[%s143 + $0x40] sm:$0xff] %v3371
      %3404 = vst [vmem:[%s143 + $0x48] sm:$0xff] %v3372
      %3405 = vst [vmem:[%s143 + $0x50] sm:$0xff] %v3373
      %3406 = vst [vmem:[%s143 + $0x58] sm:$0xff] %v3374
      %3407 = vst [vmem:[%s143 + $0x60] sm:$0xff] %v3375
      %3408 = vst [vmem:[%s143 + $0x68] sm:$0xff] %v3376
      %3409 = vst [vmem:[%s143 + $0x70] sm:$0xff] %v3377
      %3410 = vst [vmem:[%s143 + $0x78] sm:$0xff] %v3378
      %3411 = vst [vmem:[%s143 + $0x80] sm:$0xff] %v3379
      %3412 = vst [vmem:[%s143 + $0x88] sm:$0xff] %v3380
      %3413 = vst [vmem:[%s143 + $0x90] sm:$0xff] %v3381
      %3414 = vst [vmem:[%s143 + $0x98] sm:$0xff] %v3382
      %3415 = vst [vmem:[%s143 + $0xa0] sm:$0xff] %v3383
      %3416 = vst [vmem:[%s143 + $0xa8] sm:$0xff] %v3384
      %3417 = vst [vmem:[%s143 + $0xb0] sm:$0xff] %v3385
      %3418 = vst [vmem:[%s143 + $0xb8] sm:$0xff] %v3386
      %3419 = vst [vmem:[%s143 + $0xc0] sm:$0xff] %v3387
      %3420 = vst [vmem:[%s143 + $0xc8] sm:$0xff] %v3388
      %3421 = vst [vmem:[%s143 + $0xd0] sm:$0xff] %v3389
      %3422 = vst [vmem:[%s143 + $0xd8] sm:$0xff] %v3390
      %3423 = vst [vmem:[%s143 + $0xe0] sm:$0xff] %v3391
      %3424 = vst [vmem:[%s143 + $0xe8] sm:$0xff] %v3392
      %3425 = vst [vmem:[%s143 + $0xf0] sm:$0xff] %v3393
      %3426 = vst [vmem:[%s143 + $0xf8] sm:$0xff] %v3394
      %p3427 = scmp.lt.s32.totalorder %s13, 1
      %s3428 = scalar_select %p3427, %s13, 1
      %s3429 = smul.addr %s3428, 32
      %s3430 = smul.addr %s3429, 8
      %s3431 = scalar_lea.vmem %s2, %s3430
      // Predicated region
      $region29: #{directional_conv_res_block.1} parent=27 // pred_check
        %p3432 = pneg %p78
      $region30: #{directional_conv_res_block.1} parent=27 // pred_check_branch
        %3434 = sbr.rel (%p3432) target = $region32
      $region31: #{directional_conv_res_block.1} parent=27 // pred_region
        _
      $region32: #{directional_conv_res_block.1} parent=27 // pred_fallthru
        _
    $region28: #{directional_conv_res_block.1} parent=5 // pred_fallthru
      _
    %p3435 = scmp.le.s32.totalorder 2, %s8
    // Predicated region
    $region33: #{directional_conv_res_block.1} parent=5 // pred_check
      %p3436 = pneg %p3435
    $region34: #{directional_conv_res_block.1} parent=5 // pred_check_branch
      %3438 = sbr.rel (%p3436) target = $region36
    $region35: #{directional_conv_res_block.1} parent=5 // pred_region
      %s3439 = ssub.s32 %s8, 2
      // Predicated region
      $region37: #{directional_conv_res_block.1} parent=35 // pred_check
        %p3440 = pneg %p84
      $region38: #{directional_conv_res_block.1} parent=35 // pred_check_branch
        %3442 = sbr.rel (%p3440) target = $region40
      $region39: #{directional_conv_res_block.1} parent=35 // pred_region
        %p3443 = scmp.lt.s32.totalorder %s14, 1
        %s3444 = scalar_select %p3443, %s14, 1
        %s3445 = smul.addr %s3444, 32
        %s3446 = smul.addr %s3445, 8
        %s3447 = scalar_lea.vmem %s2, %s3446
      $region40: #{directional_conv_res_block.1} parent=35 // pred_fallthru
        _
    $region36: #{directional_conv_res_block.1} parent=5 // pred_fallthru
      _
  $region6: #{directional_conv_res_block.1} parent=0 // loop_footer
    %s12 = sadd.s32 1, %s8
  $region7: #{directional_conv_res_block.1} parent=0 // loop_footer_branch
    %7 = sbr.rel target = $region3
  $region8: #{directional_conv_res_block.1} parent=0 // loop_exit
    _

</llo_original>
